<compile_context>
chip_gen: v5e
topology: v5e:2x2
jax: 0.10.0
libtpu: 0.0.40
codegen_flags: <defaults>
</compile_context>

<pallas_src>
import functools

import jax
import jax.numpy as jnp
from jax import lax
from jax.experimental import pallas as pl
from jax.experimental.pallas import tpu as pltpu


def _round_up(x, m):
    return (x + m - 1) // m * m


def _m_tiling(M):
    """Pick (Mp, tm): >= 2 grid steps on the 'parallel' M axis when M allows it
    (keeps both v7x TensorCores busy) and tm a multiple of 16 (bf16-friendly)."""
    if M <= 16:
        tm = _round_up(max(M, 8), 8)
    else:
        tm = min(256, _round_up(M, 32) // 2)
    Mp = _round_up(M, tm)
    return Mp, tm


# ---------------------------------------------------------------------------
# Pallas kernels
# ---------------------------------------------------------------------------

def _matmul_bias_kernel(x_ref, w_ref, b_ref, o_ref, *, relu: bool):
    """o = x @ w + b (optional ReLU); single K/N block, bf16 inputs, f32 MXU acc."""
    out = jnp.dot(x_ref[...], w_ref[...], preferred_element_type=jnp.float32)
    out = out + b_ref[...]
    if relu:
        out = jnp.maximum(out, 0.0)
    o_ref[...] = out.astype(o_ref.dtype)


def pallas_matmul_bias(x, w, b, *, relu: bool = False, out_dtype=jnp.float32):
    """x:(M,K) @ w:(K,N) + b:(N,), optional ReLU, output dtype selectable.

    K and N are zero-padded to multiples of 128 (lane-dense MXU operands and
    unmasked stores); M is split into >= 2 'parallel' grid steps when possible.
    Every matmul in this model has K <= 512 / N <= 256, so K and N are single
    VMEM blocks (no accumulator scratch, no pl.when).
    """
    M, K = x.shape
    K2, N = w.shape
    assert K == K2

    Mp, tm = _m_tiling(M)
    Kp = _round_up(K, 128)
    Np = _round_up(N, 128)

    xp = jnp.pad(x.astype(jnp.bfloat16), ((0, Mp - M), (0, Kp - K)))
    wp = jnp.pad(w.astype(jnp.bfloat16), ((0, Kp - K), (0, Np - N)))
    bp = jnp.pad(b.astype(jnp.float32), ((0, Np - N),)).reshape(1, Np)

    out = pl.pallas_call(
        functools.partial(_matmul_bias_kernel, relu=relu),
        out_shape=jax.ShapeDtypeStruct((Mp, Np), out_dtype),
        grid_spec=pltpu.PrefetchScalarGridSpec(
            num_scalar_prefetch=0,
            grid=(Mp // tm,),
            in_specs=[
                pl.BlockSpec((tm, Kp), lambda i: (i, 0)),
                pl.BlockSpec((Kp, Np), lambda i: (0, 0)),
                pl.BlockSpec((1, Np), lambda i: (0, 0)),
            ],
            out_specs=pl.BlockSpec((tm, Np), lambda i: (i, 0)),
        ),
        compiler_params=pltpu.CompilerParams(
            dimension_semantics=("parallel",),
        ),
    )(xp, wp, bp)
    return out[:M, :N]


def _vq_kernel(z_ref, cb_ref, q_ref, idx_ref, sq_ref, hist_ref, *, K: int, M: int):
    """Nearest-codebook quantization for one M-tile + fused statistics.

    z:(tm,Dp) f32, cb:(Kp,Dp) f32 ->
      q:(tm,Dp) f32, idx:(tm,1) i32,
      sq:(1,1)  f32  accumulated sum of ||z - q||^2 over valid rows,
      hist:(1,Kp) f32 accumulated code-usage counts over valid rows.
    Distance dot runs on the MXU in bf16 with f32 accumulation; padded codebook
    columns are masked with iota < K; the one-hot gather stays f32 (exact).
    """
    i = pl.program_id(0)
    tm = z_ref.shape[0]

    z = z_ref[...]
    cb = cb_ref[...]

    z2 = jnp.sum(z * z, axis=-1, keepdims=True)                    # (tm, 1)
    e2 = jnp.sum(cb * cb, axis=-1)[None, :]                        # (1, Kp)
    dots = lax.dot_general(z.astype(jnp.bfloat16), cb.astype(jnp.bfloat16),
                           (((1,), (1,)), ((), ())),
                           preferred_element_type=jnp.float32)     # (tm, Kp)
    dist = z2 - 2.0 * dots + e2

    col = lax.broadcasted_iota(jnp.int32, dist.shape, 1)
    dist = jnp.where(col < K, dist, jnp.float32(1e30))             # mask padded codes

    idx = jnp.argmin(dist, axis=-1).astype(jnp.int32)              # (tm,)
    onehot = (idx[:, None] == col).astype(jnp.float32)             # (tm, Kp)
    q = jnp.dot(onehot, cb, preferred_element_type=jnp.float32)    # (tm, Dp)

    q_ref[...] = q
    idx_ref[...] = idx[:, None]

    # mask rows that are pure M-padding so they do not pollute the statistics
    row = i * tm + lax.broadcasted_iota(jnp.int32, (tm, 1), 0)
    validf = (row < M).astype(jnp.float32)                         # (tm, 1)

    @pl.when(i == 0)
    def _():
        sq_ref[...] = jnp.zeros_like(sq_ref)
        hist_ref[...] = jnp.zeros_like(hist_ref)

    diff = (z - q) * validf
    sq_ref[...] += jnp.sum(diff * diff, keepdims=True)             # (1, 1)
    hist_ref[...] += jnp.sum(onehot * validf, axis=0, keepdims=True)  # (1, Kp)


def pallas_vector_quantize(z_flat, codebook):
    """z_flat:(M,D), codebook:(K,D) ->
       (q:(M,D) f32, idx:(M,) i32, sq_sum: f32 scalar, counts:(K,) f32)."""
    M, D = z_flat.shape
    K, D2 = codebook.shape
    assert D == D2

    Dp = _round_up(D, 128)
    Kp = _round_up(K, 128)
    tm = min(_round_up(M, 8), 256)
    Mp = _round_up(M, tm)

    zp = jnp.pad(z_flat.astype(jnp.float32), ((0, Mp - M), (0, Dp - D)))
    cbp = jnp.pad(codebook.astype(jnp.float32), ((0, Kp - K), (0, Dp - D)))

    q, idx, sq, hist = pl.pallas_call(
        functools.partial(_vq_kernel, K=K, M=M),
        out_shape=(
            jax.ShapeDtypeStruct((Mp, Dp), jnp.float32),
            jax.ShapeDtypeStruct((Mp, 1), jnp.int32),
            jax.ShapeDtypeStruct((1, 1), jnp.float32),
            jax.ShapeDtypeStruct((1, Kp), jnp.float32),
        ),
        grid_spec=pltpu.PrefetchScalarGridSpec(
            num_scalar_prefetch=0,
            grid=(Mp // tm,),
            in_specs=[
                pl.BlockSpec((tm, Dp), lambda i: (i, 0)),
                pl.BlockSpec((Kp, Dp), lambda i: (0, 0)),
            ],
            out_specs=(
                pl.BlockSpec((tm, Dp), lambda i: (i, 0)),
                pl.BlockSpec((tm, 1), lambda i: (i, 0)),
                pl.BlockSpec((1, 1), lambda i: (0, 0)),     # resident accumulator
                pl.BlockSpec((1, Kp), lambda i: (0, 0)),    # resident accumulator
            ),
        ),
        compiler_params=pltpu.CompilerParams(
            # stats accumulate across the M grid -> the axis must stay sequential
            dimension_semantics=("arbitrary",),
        ),
    )(zp, cbp)
    return q[:M, :D], idx[:M, 0], sq[0, 0], hist[0, :K]


# ---------------------------------------------------------------------------
# Conv helpers (im2col glue in JAX, matmul+bias+ReLU in Pallas)
# ---------------------------------------------------------------------------

def _im2col(x, kh, kw, stride, pad):
    # x: (N, H, W, C) NHWC
    N, H, W, C = x.shape
    xp = jnp.pad(x, ((0, 0), (pad, pad), (pad, pad), (0, 0)))
    Ho = (H + 2 * pad - kh) // stride + 1
    Wo = (W + 2 * pad - kw) // stride + 1
    cols = []
    for ki in range(kh):
        for kj in range(kw):
            patch = xp[:, ki:ki + stride * Ho:stride, kj:kj + stride * Wo:stride, :]
            cols.append(patch)
    patches = jnp.concatenate(cols, axis=-1)             # (N, Ho, Wo, kh*kw*C)
    return patches.reshape(N * Ho * Wo, kh * kw * C), (N, Ho, Wo)


def conv2d(x, w, b, *, stride, pad, relu=False, out_dtype=jnp.float32):
    # w: (kh, kw, Cin, Cout). Patches are bf16; MXU accumulates in f32.
    kh, kw, cin, cout = w.shape
    patches, (N, Ho, Wo) = _im2col(x.astype(jnp.bfloat16), kh, kw, stride, pad)
    out = pallas_matmul_bias(patches, w.reshape(kh * kw * cin, cout), b,
                             relu=relu, out_dtype=out_dtype)
    return out.reshape(N, Ho, Wo, cout)


def conv_transpose2d_multi(x, filters, *, relu=False, out_dtype=jnp.float32):
    """Sub-pixel decomposition of one or more 4x4 / stride-2 / pad-1 transpose
    convolutions applied to the SAME input, folded into ONE im2col + ONE matmul.

    out_c[2y+py, 2x+px] = sum_{a,b in {0,1}} xpad1[y+py+a, x+px+b] . w_c[py+2a, px+2b]
    All 4*len(filters) parity sub-filters become one lane-dense matmul with
    N = len(filters)*4*Cout lanes (256 lanes for the merged dec_t/up_t pair ->
    full MXU width on v6e/v7x), results are interleaved with cheap slices.
    Self-consistent but not PyTorch ConvTranspose2d weight-compatible (no flip).
    """
    N, H, W, Cin = x.shape
    cout = filters[0][0].shape[-1]
    for (w, _) in filters:
        assert w.shape == (4, 4, Cin, cout)

    xp = jnp.pad(x.astype(jnp.bfloat16), ((0, 0), (1, 1), (1, 1), (0, 0)))
    patches, _ = _im2col(xp, 2, 2, 1, 0)                  # (N*(H+1)*(W+1), 4*Cin)

    w_blocks, b_blocks = [], []
    for (w, b) in filters:
        for py in range(2):
            for px in range(2):
                w_blocks.append(w[py::2, px::2, :, :].reshape(4 * Cin, cout))
                b_blocks.append(b)
    w_all = jnp.concatenate(w_blocks, axis=-1)            # (4*Cin, nf*4*Cout)
    b_all = jnp.concatenate(b_blocks, axis=-1)

    r = pallas_matmul_bias(patches, w_all, b_all, relu=relu, out_dtype=out_dtype)
    r = r.reshape(N, H + 1, W + 1, len(filters), 4, cout)

    outs = []
    for c in range(len(filters)):
        s00 = r[:, 0:H,     0:W,     c, 0]
        s01 = r[:, 0:H,     1:W + 1, c, 1]
        s10 = r[:, 1:H + 1, 0:W,     c, 2]
        s11 = r[:, 1:H + 1, 1:W + 1, c, 3]
        stacked = jnp.stack([s00, s01, s10, s11], axis=3).reshape(N, H, W, 2, 2, cout)
        outs.append(stacked.transpose(0, 1, 3, 2, 4, 5).reshape(N, 2 * H, 2 * W, cout))
    return outs


# ---------------------------------------------------------------------------
# VQ-VAE-2 hierarchical model + losses
# ---------------------------------------------------------------------------

def init_params(key, in_channels=4, embedding_dim=32,
                num_embeddings_bottom=64, num_embeddings_top=32):
    D = embedding_dim
    ks = jax.random.split(key, 16)

    def conv_w(k, kh, kw, cin, cout):
        return (0.05 * jax.random.normal(k, (kh, kw, cin, cout))).astype(jnp.float32)

    p = {
        "enc_b_w1": conv_w(ks[0], 4, 4, in_channels, D), "enc_b_b1": jnp.zeros((D,), jnp.float32),
        "enc_b_w2": conv_w(ks[1], 3, 3, D, D),           "enc_b_b2": jnp.zeros((D,), jnp.float32),
        "enc_t_w1": conv_w(ks[2], 4, 4, D, D),           "enc_t_b1": jnp.zeros((D,), jnp.float32),
        "enc_t_w2": conv_w(ks[3], 3, 3, D, D),           "enc_t_b2": jnp.zeros((D,), jnp.float32),
        "dec_t_w":  conv_w(ks[4], 4, 4, D, D),           "dec_t_b":  jnp.zeros((D,), jnp.float32),
        "comb_w":   conv_w(ks[5], 1, 1, 2 * D, D),       "comb_b":   jnp.zeros((D,), jnp.float32),
        "up_t_w":   conv_w(ks[6], 4, 4, D, D),           "up_t_b":   jnp.zeros((D,), jnp.float32),
        "dec_w1":   conv_w(ks[7], 4, 4, 2 * D, D),       "dec_b1":   jnp.zeros((D,), jnp.float32),
        "dec_w2":   conv_w(ks[8], 3, 3, D, in_channels), "dec_b2":   jnp.zeros((in_channels,), jnp.float32),
        "codebook_top": jax.random.uniform(
            ks[9], (num_embeddings_top, D),
            minval=-1.0 / num_embeddings_top, maxval=1.0 / num_embeddings_top).astype(jnp.float32),
        "codebook_bottom": jax.random.uniform(
            ks[10], (num_embeddings_bottom, D),
            minval=-1.0 / num_embeddings_bottom, maxval=1.0 / num_embeddings_bottom).astype(jnp.float32),
    }
    return p


def _vq_level(z_e, codebook, beta=0.25):
    N, H, W, D = z_e.shape
    M = N * H * W
    q_flat, idx_flat, sq_sum, counts = pallas_vector_quantize(z_e.reshape(M, D), codebook)
    q = q_flat.reshape(N, H, W, D)
    codes = idx_flat.reshape(N, H, W)
    # forward values: codebook loss mean((sg(z)-q)^2) == commitment mean((z-sg(q))^2)
    mse = sq_sum / (M * D)
    codebook_loss = mse
    commitment_loss = mse
    vq_loss = codebook_loss + beta * commitment_loss
    q_st = z_e + lax.stop_gradient(q - z_e)               # straight-through estimator
    probs = counts / M
    perplexity = jnp.exp(-jnp.sum(probs * jnp.log(probs + 1e-10)))
    return q_st, codes, vq_loss, perplexity


def vqvae_hierarchical_forward(params, x_nchw):
    p = params
    x = jnp.transpose(x_nchw, (0, 2, 3, 1)).astype(jnp.float32)   # NCHW -> NHWC

    # --- encoders (intermediates that only feed convs stay bf16) ---
    h = conv2d(x, p["enc_b_w1"], p["enc_b_b1"], stride=2, pad=1, relu=True,
               out_dtype=jnp.bfloat16)
    z_e_b = conv2d(h, p["enc_b_w2"], p["enc_b_b2"], stride=1, pad=1,
                   out_dtype=jnp.bfloat16)

    h = conv2d(z_e_b, p["enc_t_w1"], p["enc_t_b1"], stride=2, pad=1, relu=True,
               out_dtype=jnp.bfloat16)
    z_e_t = conv2d(h, p["enc_t_w2"], p["enc_t_b2"], stride=1, pad=1,
                   out_dtype=jnp.float32)                  # enters VQ distance math

    # --- top quantization ---
    q_t, codes_t, vq_loss_t, perp_t = _vq_level(z_e_t, p["codebook_top"])

    # --- both q_t transpose convs merged into one 256-lane matmul ---
    dec_t, up_t = conv_transpose2d_multi(
        q_t, [(p["dec_t_w"], p["dec_t_b"]), (p["up_t_w"], p["up_t_b"])],
        out_dtype=jnp.bfloat16)

    # --- condition bottom latent on decoded top, then quantize ---
    z_e_b_cond = conv2d(jnp.concatenate([dec_t, z_e_b], axis=-1),
                        p["comb_w"], p["comb_b"], stride=1, pad=0,
                        out_dtype=jnp.float32)             # enters VQ distance math
    q_b, codes_b, vq_loss_b, perp_b = _vq_level(z_e_b_cond, p["codebook_bottom"])

    # --- decoder ---
    dec_in = jnp.concatenate([q_b.astype(jnp.bfloat16), up_t], axis=-1)
    (h,) = conv_transpose2d_multi(dec_in, [(p["dec_w1"], p["dec_b1"])],
                                  relu=True, out_dtype=jnp.bfloat16)
    recon = conv2d(h, p["dec_w2"], p["dec_b2"], stride=1, pad=1,
                   out_dtype=jnp.float32)
    recon_nchw = jnp.transpose(recon, (0, 3, 1, 2))        # NHWC -> NCHW

    recon_loss = jnp.mean((recon_nchw - x_nchw) ** 2)
    vq_loss = vq_loss_t + vq_loss_b

    return {
        "reconstruction": recon_nchw,
        "codes_top": codes_t,
        "codes_bottom": codes_b,
        "vq_loss_top": vq_loss_t,
        "vq_loss_bottom": vq_loss_b,
        "vq_loss": vq_loss,
        "recon_loss": recon_loss,
        "loss": recon_loss + vq_loss,
        "perplexity_top": perp_t,
        "perplexity_bottom": perp_b,
    }


# ---------------------------------------------------------------------------

if __name__ == "__main__":
    key = jax.random.PRNGKey(0)
    k_x, k_p = jax.random.split(key)

    B, C, H, W = 2, 4, 16, 16
    x = jax.random.normal(k_x, (B, C, H, W), dtype=jnp.float32)

    params = init_params(k_p, in_channels=C, embedding_dim=32,
                         num_embeddings_bottom=64, num_embeddings_top=32)

    fwd = jax.jit(vqvae_hierarchical_forward)
    out = fwd(params, x)
    jax.block_until_ready(out["reconstruction"])
    jax.block_until_ready(out["loss"])

    assert out["reconstruction"].shape == (B, C, H, W)
    assert out["codes_top"].shape == (B, H // 4, W // 4)
    assert out["codes_bottom"].shape == (B, H // 2, W // 2)
    assert jnp.isfinite(out["loss"])
    assert jnp.isfinite(out["perplexity_top"]) and jnp.isfinite(out["perplexity_bottom"])
    print("KERNEL_OK")
</pallas_src>

<mosaic_0001>
module attributes {stable_mosaic.version = 11 : i64} {
  func.func @_matmul_bias_kernel(%arg0: i32, %arg1: memref<64x128xbf16, #tpu.memory_space<vmem>>, %arg2: memref<128x128xbf16, #tpu.memory_space<vmem>>, %arg3: memref<1x128xf32, #tpu.memory_space<vmem>>, %arg4: memref<64x128xbf16, #tpu.memory_space<vmem>>) attributes {dimension_semantics = [#tpu.dimension_semantics<parallel>], iteration_bounds = array<i64: 2>, scalar_prefetch = 0 : i64, scratch_operands = 0 : i64, tpu.core_type = #tpu.core_type<tc>, window_params = [{transform_indices = @transform_0, window_bounds = array<i64: 64, 128>}, {pipeline_mode = #tpu.pipeline_mode<synchronous>, transform_indices = @transform_1, window_bounds = array<i64: 128, 128>}, {pipeline_mode = #tpu.pipeline_mode<synchronous>, transform_indices = @transform_2, window_bounds = array<i64: 1, 128>}, {transform_indices = @transform_3, window_bounds = array<i64: 64, 128>}]} {
    %c0 = arith.constant 0 : index
    %c0_0 = arith.constant 0 : index
    %0 = vector.load %arg1[%c0, %c0_0] : memref<64x128xbf16, #tpu.memory_space<vmem>>, vector<64x128xbf16>
    %c0_1 = arith.constant 0 : index
    %c0_2 = arith.constant 0 : index
    %1 = vector.load %arg2[%c0_1, %c0_2] : memref<128x128xbf16, #tpu.memory_space<vmem>>, vector<128x128xbf16>
    %cst = arith.constant dense<0.000000e+00> : vector<64x128xf32>
    %2 = tpu.matmul %0, %1, %cst {dimension_numbers = #tpu.dot_dimension_numbers<[1], [0], [0], [1], [0, 0, 1, 1], [], []>} : vector<64x128xbf16>, vector<128x128xbf16>, vector<64x128xf32> -> vector<64x128xf32>
    %c0_3 = arith.constant 0 : index
    %c0_4 = arith.constant 0 : index
    %3 = vector.load %arg3[%c0_3, %c0_4] : memref<1x128xf32, #tpu.memory_space<vmem>>, vector<1x128xf32>
    %4 = vector.broadcast %3 : vector<1x128xf32> to vector<64x128xf32>
    %5 = arith.addf %2, %4 : vector<64x128xf32>
    %cst_5 = arith.constant 0.000000e+00 : f32
    %6 = vector.broadcast %cst_5 : f32 to vector<64x128xf32>
    %7 = arith.maximumf %5, %6 : vector<64x128xf32>
    %8 = arith.truncf %7 : vector<64x128xf32> to vector<64x128xbf16>
    %c0_6 = arith.constant 0 : index
    %c0_7 = arith.constant 0 : index
    %9 = vector.load %arg4[%c0_6, %c0_7] : memref<64x128xbf16, #tpu.memory_space<vmem>>, vector<64x128xbf16>
    tpu.vector_store %arg4[%c0_6, %c0_7], %8 {strides = array<i32>} : memref<64x128xbf16, #tpu.memory_space<vmem>>, vector<64x128xbf16>,
    return
  }
  func.func @transform_0(%arg0: i32) -> (i32, i32) {
    %c0_i32 = arith.constant 0 : i32
    %c0_i32_0 = arith.constant 0 : i32
    return %arg0, %c0_i32 : i32, i32
  }
  func.func @transform_1(%arg0: i32) -> (i32, i32) {
    %c0_i32 = arith.constant 0 : i32
    %c0_i32_0 = arith.constant 0 : i32
    %c0_i32_1 = arith.constant 0 : i32
    return %c0_i32, %c0_i32_0 : i32, i32
  }
  func.func @transform_2(%arg0: i32) -> (i32, i32) {
    %c0_i32 = arith.constant 0 : i32
    %c0_i32_0 = arith.constant 0 : i32
    %c0_i32_1 = arith.constant 0 : i32
    return %c0_i32, %c0_i32_0 : i32, i32
  }
  func.func @transform_3(%arg0: i32) -> (i32, i32) {
    %c0_i32 = arith.constant 0 : i32
    %c0_i32_0 = arith.constant 0 : i32
    return %arg0, %c0_i32 : i32, i32
  }
}

module attributes {stable_mosaic.version = 11 : i64} {
  func.func @_matmul_bias_kernel(%arg0: i32, %arg1: memref<64x384xbf16, #tpu.memory_space<vmem>>, %arg2: memref<384x128xbf16, #tpu.memory_space<vmem>>, %arg3: memref<1x128xf32, #tpu.memory_space<vmem>>, %arg4: memref<64x128xbf16, #tpu.memory_space<vmem>>) attributes {dimension_semantics = [#tpu.dimension_semantics<parallel>], iteration_bounds = array<i64: 2>, scalar_prefetch = 0 : i64, scratch_operands = 0 : i64, tpu.core_type = #tpu.core_type<tc>, window_params = [{transform_indices = @transform_0, window_bounds = array<i64: 64, 384>}, {pipeline_mode = #tpu.pipeline_mode<synchronous>, transform_indices = @transform_1, window_bounds = array<i64: 384, 128>}, {pipeline_mode = #tpu.pipeline_mode<synchronous>, transform_indices = @transform_2, window_bounds = array<i64: 1, 128>}, {transform_indices = @transform_3, window_bounds = array<i64: 64, 128>}]} {
    %c0 = arith.constant 0 : index
    %c0_0 = arith.constant 0 : index
    %0 = vector.load %arg1[%c0, %c0_0] : memref<64x384xbf16, #tpu.memory_space<vmem>>, vector<64x384xbf16>
    %c0_1 = arith.constant 0 : index
    %c0_2 = arith.constant 0 : index
    %1 = vector.load %arg2[%c0_1, %c0_2] : memref<384x128xbf16, #tpu.memory_space<vmem>>, vector<384x128xbf16>
    %cst = arith.constant dense<0.000000e+00> : vector<64x128xf32>
    %2 = tpu.matmul %0, %1, %cst {dimension_numbers = #tpu.dot_dimension_numbers<[1], [0], [0], [1], [0, 0, 1, 1], [], []>} : vector<64x384xbf16>, vector<384x128xbf16>, vector<64x128xf32> -> vector<64x128xf32>
    %c0_3 = arith.constant 0 : index
    %c0_4 = arith.constant 0 : index
    %3 = vector.load %arg3[%c0_3, %c0_4] : memref<1x128xf32, #tpu.memory_space<vmem>>, vector<1x128xf32>
    %4 = vector.broadcast %3 : vector<1x128xf32> to vector<64x128xf32>
    %5 = arith.addf %2, %4 : vector<64x128xf32>
    %6 = arith.truncf %5 : vector<64x128xf32> to vector<64x128xbf16>
    %c0_5 = arith.constant 0 : index
    %c0_6 = arith.constant 0 : index
    %7 = vector.load %arg4[%c0_5, %c0_6] : memref<64x128xbf16, #tpu.memory_space<vmem>>, vector<64x128xbf16>
    tpu.vector_store %arg4[%c0_5, %c0_6], %6 {strides = array<i32>} : memref<64x128xbf16, #tpu.memory_space<vmem>>, vector<64x128xbf16>,
    return
  }
  func.func @transform_0(%arg0: i32) -> (i32, i32) {
    %c0_i32 = arith.constant 0 : i32
    %c0_i32_0 = arith.constant 0 : i32
    return %arg0, %c0_i32 : i32, i32
  }
  func.func @transform_1(%arg0: i32) -> (i32, i32) {
    %c0_i32 = arith.constant 0 : i32
    %c0_i32_0 = arith.constant 0 : i32
    %c0_i32_1 = arith.constant 0 : i32
    return %c0_i32, %c0_i32_0 : i32, i32
  }
  func.func @transform_2(%arg0: i32) -> (i32, i32) {
    %c0_i32 = arith.constant 0 : i32
    %c0_i32_0 = arith.constant 0 : i32
    %c0_i32_1 = arith.constant 0 : i32
    return %c0_i32, %c0_i32_0 : i32, i32
  }
  func.func @transform_3(%arg0: i32) -> (i32, i32) {
    %c0_i32 = arith.constant 0 : i32
    %c0_i32_0 = arith.constant 0 : i32
    return %arg0, %c0_i32 : i32, i32
  }
}

module attributes {stable_mosaic.version = 11 : i64} {
  func.func @_matmul_bias_kernel(%arg0: i32, %arg1: memref<16x512xbf16, #tpu.memory_space<vmem>>, %arg2: memref<512x128xbf16, #tpu.memory_space<vmem>>, %arg3: memref<1x128xf32, #tpu.memory_space<vmem>>, %arg4: memref<16x128xbf16, #tpu.memory_space<vmem>>) attributes {dimension_semantics = [#tpu.dimension_semantics<parallel>], iteration_bounds = array<i64: 2>, scalar_prefetch = 0 : i64, scratch_operands = 0 : i64, tpu.core_type = #tpu.core_type<tc>, window_params = [{transform_indices = @transform_0, window_bounds = array<i64: 16, 512>}, {pipeline_mode = #tpu.pipeline_mode<synchronous>, transform_indices = @transform_1, window_bounds = array<i64: 512, 128>}, {pipeline_mode = #tpu.pipeline_mode<synchronous>, transform_indices = @transform_2, window_bounds = array<i64: 1, 128>}, {transform_indices = @transform_3, window_bounds = array<i64: 16, 128>}]} {
    %c0 = arith.constant 0 : index
    %c0_0 = arith.constant 0 : index
    %0 = vector.load %arg1[%c0, %c0_0] : memref<16x512xbf16, #tpu.memory_space<vmem>>, vector<16x512xbf16>
    %c0_1 = arith.constant 0 : index
    %c0_2 = arith.constant 0 : index
    %1 = vector.load %arg2[%c0_1, %c0_2] : memref<512x128xbf16, #tpu.memory_space<vmem>>, vector<512x128xbf16>
    %cst = arith.constant dense<0.000000e+00> : vector<16x128xf32>
    %2 = tpu.matmul %0, %1, %cst {dimension_numbers = #tpu.dot_dimension_numbers<[1], [0], [0], [1], [0, 0, 1, 1], [], []>} : vector<16x512xbf16>, vector<512x128xbf16>, vector<16x128xf32> -> vector<16x128xf32>
    %c0_3 = arith.constant 0 : index
    %c0_4 = arith.constant 0 : index
    %3 = vector.load %arg3[%c0_3, %c0_4] : memref<1x128xf32, #tpu.memory_space<vmem>>, vector<1x128xf32>
    %4 = vector.broadcast %3 : vector<1x128xf32> to vector<16x128xf32>
    %5 = arith.addf %2, %4 : vector<16x128xf32>
    %cst_5 = arith.constant 0.000000e+00 : f32
    %6 = vector.broadcast %cst_5 : f32 to vector<16x128xf32>
    %7 = arith.maximumf %5, %6 : vector<16x128xf32>
    %8 = arith.truncf %7 : vector<16x128xf32> to vector<16x128xbf16>
    %c0_6 = arith.constant 0 : index
    %c0_7 = arith.constant 0 : index
    %9 = vector.load %arg4[%c0_6, %c0_7] : memref<16x128xbf16, #tpu.memory_space<vmem>>, vector<16x128xbf16>
    tpu.vector_store %arg4[%c0_6, %c0_7], %8 {strides = array<i32>} : memref<16x128xbf16, #tpu.memory_space<vmem>>, vector<16x128xbf16>,
    return
  }
  func.func @transform_0(%arg0: i32) -> (i32, i32) {
    %c0_i32 = arith.constant 0 : i32
    %c0_i32_0 = arith.constant 0 : i32
    return %arg0, %c0_i32 : i32, i32
  }
  func.func @transform_1(%arg0: i32) -> (i32, i32) {
    %c0_i32 = arith.constant 0 : i32
    %c0_i32_0 = arith.constant 0 : i32
    %c0_i32_1 = arith.constant 0 : i32
    return %c0_i32, %c0_i32_0 : i32, i32
  }
  func.func @transform_2(%arg0: i32) -> (i32, i32) {
    %c0_i32 = arith.constant 0 : i32
    %c0_i32_0 = arith.constant 0 : i32
    %c0_i32_1 = arith.constant 0 : i32
    return %c0_i32, %c0_i32_0 : i32, i32
  }
  func.func @transform_3(%arg0: i32) -> (i32, i32) {
    %c0_i32 = arith.constant 0 : i32
    %c0_i32_0 = arith.constant 0 : i32
    return %arg0, %c0_i32 : i32, i32
  }
}

module attributes {stable_mosaic.version = 11 : i64} {
  func.func @_matmul_bias_kernel(%arg0: i32, %arg1: memref<16x384xbf16, #tpu.memory_space<vmem>>, %arg2: memref<384x128xbf16, #tpu.memory_space<vmem>>, %arg3: memref<1x128xf32, #tpu.memory_space<vmem>>, %arg4: memref<16x128xf32, #tpu.memory_space<vmem>>) attributes {dimension_semantics = [#tpu.dimension_semantics<parallel>], iteration_bounds = array<i64: 2>, scalar_prefetch = 0 : i64, scratch_operands = 0 : i64, tpu.core_type = #tpu.core_type<tc>, window_params = [{transform_indices = @transform_0, window_bounds = array<i64: 16, 384>}, {pipeline_mode = #tpu.pipeline_mode<synchronous>, transform_indices = @transform_1, window_bounds = array<i64: 384, 128>}, {pipeline_mode = #tpu.pipeline_mode<synchronous>, transform_indices = @transform_2, window_bounds = array<i64: 1, 128>}, {transform_indices = @transform_3, window_bounds = array<i64: 16, 128>}]} {
    %c0 = arith.constant 0 : index
    %c0_0 = arith.constant 0 : index
    %0 = vector.load %arg1[%c0, %c0_0] : memref<16x384xbf16, #tpu.memory_space<vmem>>, vector<16x384xbf16>
    %c0_1 = arith.constant 0 : index
    %c0_2 = arith.constant 0 : index
    %1 = vector.load %arg2[%c0_1, %c0_2] : memref<384x128xbf16, #tpu.memory_space<vmem>>, vector<384x128xbf16>
    %cst = arith.constant dense<0.000000e+00> : vector<16x128xf32>
    %2 = tpu.matmul %0, %1, %cst {dimension_numbers = #tpu.dot_dimension_numbers<[1], [0], [0], [1], [0, 0, 1, 1], [], []>} : vector<16x384xbf16>, vector<384x128xbf16>, vector<16x128xf32> -> vector<16x128xf32>
    %c0_3 = arith.constant 0 : index
    %c0_4 = arith.constant 0 : index
    %3 = vector.load %arg3[%c0_3, %c0_4] : memref<1x128xf32, #tpu.memory_space<vmem>>, vector<1x128xf32>
    %4 = vector.broadcast %3 : vector<1x128xf32> to vector<16x128xf32>
    %5 = arith.addf %2, %4 : vector<16x128xf32>
    %c0_5 = arith.constant 0 : index
    %c0_6 = arith.constant 0 : index
    %6 = vector.load %arg4[%c0_5, %c0_6] : memref<16x128xf32, #tpu.memory_space<vmem>>, vector<16x128xf32>
    tpu.vector_store %arg4[%c0_5, %c0_6], %5 {strides = array<i32>} : memref<16x128xf32, #tpu.memory_space<vmem>>, vector<16x128xf32>,
    return
  }
  func.func @transform_0(%arg0: i32) -> (i32, i32) {
    %c0_i32 = arith.constant 0 : i32
    %c0_i32_0 = arith.constant 0 : i32
    return %arg0, %c0_i32 : i32, i32
  }
  func.func @transform_1(%arg0: i32) -> (i32, i32) {
    %c0_i32 = arith.constant 0 : i32
    %c0_i32_0 = arith.constant 0 : i32
    %c0_i32_1 = arith.constant 0 : i32
    return %c0_i32, %c0_i32_0 : i32, i32
  }
  func.func @transform_2(%arg0: i32) -> (i32, i32) {
    %c0_i32 = arith.constant 0 : i32
    %c0_i32_0 = arith.constant 0 : i32
    %c0_i32_1 = arith.constant 0 : i32
    return %c0_i32, %c0_i32_0 : i32, i32
  }
  func.func @transform_3(%arg0: i32) -> (i32, i32) {
    %c0_i32 = arith.constant 0 : i32
    %c0_i32_0 = arith.constant 0 : i32
    return %arg0, %c0_i32 : i32, i32
  }
}

module attributes {stable_mosaic.version = 11 : i64} {
  func.func @_vq_kernel(%arg0: i32, %arg1: memref<32x128xf32, #tpu.memory_space<vmem>>, %arg2: memref<128x128xf32, #tpu.memory_space<vmem>>, %arg3: memref<32x128xf32, #tpu.memory_space<vmem>>, %arg4: memref<32x1xi32, #tpu.memory_space<vmem>>, %arg5: memref<1x1xf32, #tpu.memory_space<vmem>>, %arg6: memref<1x128xf32, #tpu.memory_space<vmem>>) attributes {dimension_semantics = [#tpu.dimension_semantics<arbitrary>], iteration_bounds = array<i64: 1>, scalar_prefetch = 0 : i64, scratch_operands = 0 : i64, tpu.core_type = #tpu.core_type<tc>, window_params = [{transform_indices = @transform_0, window_bounds = array<i64: 32, 128>}, {pipeline_mode = #tpu.pipeline_mode<synchronous>, transform_indices = @transform_1, window_bounds = array<i64: 128, 128>}, {transform_indices = @transform_2, window_bounds = array<i64: 32, 128>}, {transform_indices = @transform_3, window_bounds = array<i64: 32, 1>}, {pipeline_mode = #tpu.pipeline_mode<synchronous>, transform_indices = @transform_4, window_bounds = array<i64: 1, 1>}, {pipeline_mode = #tpu.pipeline_mode<synchronous>, transform_indices = @transform_5, window_bounds = array<i64: 1, 128>}]} {
    %c0 = arith.constant 0 : index
    %c0_0 = arith.constant 0 : index
    %0 = vector.load %arg1[%c0, %c0_0] : memref<32x128xf32, #tpu.memory_space<vmem>>, vector<32x128xf32>
    %c0_1 = arith.constant 0 : index
    %c0_2 = arith.constant 0 : index
    %1 = vector.load %arg2[%c0_1, %c0_2] : memref<128x128xf32, #tpu.memory_space<vmem>>, vector<128x128xf32>
    %2 = arith.mulf %0, %0 : vector<32x128xf32>
    %cst = arith.constant dense<0.000000e+00> : vector<32xf32>
    %3 = vector.multi_reduction <add>, %2, %cst [1] : vector<32x128xf32> to vector<32xf32>
    %4 = vector.shape_cast %3 : vector<32xf32> to vector<32x1xf32>
    %5 = arith.mulf %1, %1 : vector<128x128xf32>
    %cst_3 = arith.constant dense<0.000000e+00> : vector<128xf32>
    %6 = vector.multi_reduction <add>, %5, %cst_3 [1] : vector<128x128xf32> to vector<128xf32>
    %7 = vector.shape_cast %6 : vector<128xf32> to vector<1x128xf32>
    %8 = arith.truncf %0 : vector<32x128xf32> to vector<32x128xbf16>
    %9 = arith.truncf %1 : vector<128x128xf32> to vector<128x128xbf16>
    %cst_4 = arith.constant dense<0.000000e+00> : vector<32x128xf32>
    %10 = tpu.matmul %8, %9, %cst_4 {dimension_numbers = #tpu.dot_dimension_numbers<[1], [1], [0], [0], [0, 0, 1, 0], [], []>} : vector<32x128xbf16>, vector<128x128xbf16>, vector<32x128xf32> -> vector<32x128xf32>
    %cst_5 = arith.constant 2.000000e+00 : f32
    %11 = vector.broadcast %cst_5 : f32 to vector<32x128xf32>
    %12 = arith.mulf %11, %10 : vector<32x128xf32>
    %13 = vector.broadcast %4 : vector<32x1xf32> to vector<32x128xf32>
    %14 = arith.subf %13, %12 : vector<32x128xf32>
    %15 = vector.broadcast %7 : vector<1x128xf32> to vector<32x128xf32>
    %16 = arith.addf %14, %15 : vector<32x128xf32>
    %17 = tpu.iota {dimensions = array<i32: 1>} : vector<32x128xi32>
    %c32_i32 = arith.constant 32 : i32
    %18 = vector.broadcast %c32_i32 : i32 to vector<32x128xi32>
    %19 = arith.cmpi slt, %17, %18 : vector<32x128xi32>
    %cst_6 = arith.constant 1.000000e+30 : f32
    %20 = vector.broadcast %cst_6 : f32 to vector<32x128xf32>
    %21 = arith.select %19, %16, %20 : vector<32x128xi1>, vector<32x128xf32>
    %22 = tpu.reduce_index %21 {axis = 1 : i32, kind = #tpu.reduction_kind<arg_min>} : vector<32x128xf32> -> vector<32xi32>
    %23 = vector.shape_cast %22 : vector<32xi32> to vector<32x1xi32>
    %24 = vector.broadcast %23 : vector<32x1xi32> to vector<32x128xi32>
    %25 = arith.cmpi eq, %24, %17 : vector<32x128xi32>
    %26 = arith.extui %25 : vector<32x128xi1> to vector<32x128xi32>
    %27 = arith.sitofp %26 : vector<32x128xi32> to vector<32x128xf32>
    %cst_7 = arith.constant dense<0.000000e+00> : vector<32x128xf32>
    %28 = tpu.matmul %27, %1, %cst_7 {dimension_numbers = #tpu.dot_dimension_numbers<[1], [0], [0], [1], [0, 0, 1, 1], [], []>} : vector<32x128xf32>, vector<128x128xf32>, vector<32x128xf32> -> vector<32x128xf32>
    %c0_8 = arith.constant 0 : index
    %c0_9 = arith.constant 0 : index
    %29 = vector.load %arg3[%c0_8, %c0_9] : memref<32x128xf32, #tpu.memory_space<vmem>>, vector<32x128xf32>
    tpu.vector_store %arg3[%c0_8, %c0_9], %28 {strides = array<i32>} : memref<32x128xf32, #tpu.memory_space<vmem>>, vector<32x128xf32>,
    %30 = vector.shape_cast %22 : vector<32xi32> to vector<32x1xi32>
    %c0_10 = arith.constant 0 : index
    %c0_11 = arith.constant 0 : index
    %31 = vector.load %arg4[%c0_10, %c0_11] : memref<32x1xi32, #tpu.memory_space<vmem>>, vector<32x1xi32>
    tpu.vector_store %arg4[%c0_10, %c0_11], %30 {strides = array<i32>} : memref<32x1xi32, #tpu.memory_space<vmem>>, vector<32x1xi32>,
    %c32_i32_12 = arith.constant 32 : i32
    %32 = arith.muli %arg0, %c32_i32_12 : i32
    %33 = tpu.iota {dimensions = array<i32: 0>} : vector<32x1xi32>
    %34 = vector.broadcast %32 : i32 to vector<32x1xi32>
    %35 = arith.addi %34, %33 : vector<32x1xi32>
    %c32_i32_13 = arith.constant 32 : i32
    %36 = vector.broadcast %c32_i32_13 : i32 to vector<32x1xi32>
    %37 = arith.cmpi slt, %35, %36 : vector<32x1xi32>
    %38 = arith.extui %37 : vector<32x1xi1> to vector<32x1xi32>
    %39 = arith.sitofp %38 : vector<32x1xi32> to vector<32x1xf32>
    %c0_i32 = arith.constant 0 : i32
    %40 = arith.cmpi eq, %arg0, %c0_i32 : i32
    %41 = arith.extui %40 : i1 to i32
    %c0_i32_14 = arith.constant 0 : i32
    %42 = arith.cmpi ne, %41, %c0_i32_14 : i32
    scf.if %42 {
      %cst_25 = arith.constant 0.000000e+00 : f32
      %62 = vector.broadcast %cst_25 : f32 to vector<1x1xf32>
      %c0_26 = arith.constant 0 : index
      %c0_27 = arith.constant 0 : index
      %63 = vector.load %arg5[%c0_26, %c0_27] : memref<1x1xf32, #tpu.memory_space<vmem>>, vector<1x1xf32>
      tpu.vector_store %arg5[%c0_26, %c0_27], %62 {strides = array<i32>} : memref<1x1xf32, #tpu.memory_space<vmem>>, vector<1x1xf32>,
      %cst_28 = arith.constant 0.000000e+00 : f32
      %64 = vector.broadcast %cst_28 : f32 to vector<1x128xf32>
      %c0_29 = arith.constant 0 : index
      %c0_30 = arith.constant 0 : index
      %65 = vector.load %arg6[%c0_29, %c0_30] : memref<1x128xf32, #tpu.memory_space<vmem>>, vector<1x128xf32>
      tpu.vector_store %arg6[%c0_29, %c0_30], %64 {strides = array<i32>} : memref<1x128xf32, #tpu.memory_space<vmem>>, vector<1x128xf32>,
    } else {
    }
    %43 = arith.subf %0, %28 : vector<32x128xf32>
    %44 = vector.broadcast %39 : vector<32x1xf32> to vector<32x128xf32>
    %45 = arith.mulf %43, %44 : vector<32x128xf32>
    %c0_15 = arith.constant 0 : index
    %c0_16 = arith.constant 0 : index
    %46 = vector.load %arg5[%c0_15, %c0_16] : memref<1x1xf32, #tpu.memory_space<vmem>>, vector<1x1xf32>
    %47 = arith.mulf %45, %45 : vector<32x128xf32>
    %48 = vector.shape_cast %47 : vector<32x128xf32> to vector<1x32x128xf32>
    %cst_17 = arith.constant dense<0.000000e+00> : vector<1xf32>
    %49 = vector.multi_reduction <add>, %48, %cst_17 [1, 2] : vector<1x32x128xf32> to vector<1xf32>
    %50 = vector.shape_cast %49 : vector<1xf32> to vector<1x1x1xf32>
    %51 = vector.extract %50[0, 0, 0] : f32 from vector<1x1x1xf32>
    %52 = vector.broadcast %51 : f32 to vector<1x1xf32>
    %53 = arith.addf %46, %52 : vector<1x1xf32>
    %c0_18 = arith.constant 0 : index
    %c0_19 = arith.constant 0 : index
    %54 = vector.load %arg5[%c0_18, %c0_19] : memref<1x1xf32, #tpu.memory_space<vmem>>, vector<1x1xf32>
    tpu.vector_store %arg5[%c0_18, %c0_19], %53 {strides = array<i32>} : memref<1x1xf32, #tpu.memory_space<vmem>>, vector<1x1xf32>,
    %c0_20 = arith.constant 0 : index
    %c0_21 = arith.constant 0 : index
    %55 = vector.load %arg6[%c0_20, %c0_21] : memref<1x128xf32, #tpu.memory_space<vmem>>, vector<1x128xf32>
    %56 = vector.broadcast %39 : vector<32x1xf32> to vector<32x128xf32>
    %57 = arith.mulf %27, %56 : vector<32x128xf32>
    %cst_22 = arith.constant dense<0.000000e+00> : vector<128xf32>
    %58 = vector.multi_reduction <add>, %57, %cst_22 [0] : vector<32x128xf32> to vector<128xf32>
    %59 = vector.shape_cast %58 : vector<128xf32> to vector<1x128xf32>
    %60 = arith.addf %55, %59 : vector<1x128xf32>
    %c0_23 = arith.constant 0 : index
    %c0_24 = arith.constant 0 : index
    %61 = vector.load %arg6[%c0_23, %c0_24] : memref<1x128xf32, #tpu.memory_space<vmem>>, vector<1x128xf32>
    tpu.vector_store %arg6[%c0_23, %c0_24], %60 {strides = array<i32>} : memref<1x128xf32, #tpu.memory_space<vmem>>, vector<1x128xf32>,
    return
  }
  func.func @transform_0(%arg0: i32) -> (i32, i32) {
    %c0_i32 = arith.constant 0 : i32
    %c0_i32_0 = arith.constant 0 : i32
    return %arg0, %c0_i32 : i32, i32
  }
  func.func @transform_1(%arg0: i32) -> (i32, i32) {
    %c0_i32 = arith.constant 0 : i32
    %c0_i32_0 = arith.constant 0 : i32
    %c0_i32_1 = arith.constant 0 : i32
    return %c0_i32, %c0_i32_0 : i32, i32
  }
  func.func @transform_2(%arg0: i32) -> (i32, i32) {
    %c0_i32 = arith.constant 0 : i32
    %c0_i32_0 = arith.constant 0 : i32
    return %arg0, %c0_i32 : i32, i32
  }
  func.func @transform_3(%arg0: i32) -> (i32, i32) {
    %c0_i32 = arith.constant 0 : i32
    %c0_i32_0 = arith.constant 0 : i32
    return %arg0, %c0_i32 : i32, i32
  }
  func.func @transform_4(%arg0: i32) -> (i32, i32) {
    %c0_i32 = arith.constant 0 : i32
    %c0_i32_0 = arith.constant 0 : i32
    %c0_i32_1 = arith.constant 0 : i32
    return %c0_i32, %c0_i32_0 : i32, i32
  }
  func.func @transform_5(%arg0: i32) -> (i32, i32) {
    %c0_i32 = arith.constant 0 : i32
    %c0_i32_0 = arith.constant 0 : i32
    %c0_i32_1 = arith.constant 0 : i32
    return %c0_i32, %c0_i32_0 : i32, i32
  }
}

module attributes {stable_mosaic.version = 11 : i64} {
  func.func @_matmul_bias_kernel(%arg0: i32, %arg1: memref<32x128xbf16, #tpu.memory_space<vmem>>, %arg2: memref<128x256xbf16, #tpu.memory_space<vmem>>, %arg3: memref<1x256xf32, #tpu.memory_space<vmem>>, %arg4: memref<32x256xbf16, #tpu.memory_space<vmem>>) attributes {dimension_semantics = [#tpu.dimension_semantics<parallel>], iteration_bounds = array<i64: 2>, scalar_prefetch = 0 : i64, scratch_operands = 0 : i64, tpu.core_type = #tpu.core_type<tc>, window_params = [{transform_indices = @transform_0, window_bounds = array<i64: 32, 128>}, {pipeline_mode = #tpu.pipeline_mode<synchronous>, transform_indices = @transform_1, window_bounds = array<i64: 128, 256>}, {pipeline_mode = #tpu.pipeline_mode<synchronous>, transform_indices = @transform_2, window_bounds = array<i64: 1, 256>}, {transform_indices = @transform_3, window_bounds = array<i64: 32, 256>}]} {
    %c0 = arith.constant 0 : index
    %c0_0 = arith.constant 0 : index
    %0 = vector.load %arg1[%c0, %c0_0] : memref<32x128xbf16, #tpu.memory_space<vmem>>, vector<32x128xbf16>
    %c0_1 = arith.constant 0 : index
    %c0_2 = arith.constant 0 : index
    %1 = vector.load %arg2[%c0_1, %c0_2] : memref<128x256xbf16, #tpu.memory_space<vmem>>, vector<128x256xbf16>
    %cst = arith.constant dense<0.000000e+00> : vector<32x256xf32>
    %2 = tpu.matmul %0, %1, %cst {dimension_numbers = #tpu.dot_dimension_numbers<[1], [0], [0], [1], [0, 0, 1, 1], [], []>} : vector<32x128xbf16>, vector<128x256xbf16>, vector<32x256xf32> -> vector<32x256xf32>
    %c0_3 = arith.constant 0 : index
    %c0_4 = arith.constant 0 : index
    %3 = vector.load %arg3[%c0_3, %c0_4] : memref<1x256xf32, #tpu.memory_space<vmem>>, vector<1x256xf32>
    %4 = vector.broadcast %3 : vector<1x256xf32> to vector<32x256xf32>
    %5 = arith.addf %2, %4 : vector<32x256xf32>
    %6 = arith.truncf %5 : vector<32x256xf32> to vector<32x256xbf16>
    %c0_5 = arith.constant 0 : index
    %c0_6 = arith.constant 0 : index
    %7 = vector.load %arg4[%c0_5, %c0_6] : memref<32x256xbf16, #tpu.memory_space<vmem>>, vector<32x256xbf16>
    tpu.vector_store %arg4[%c0_5, %c0_6], %6 {strides = array<i32>} : memref<32x256xbf16, #tpu.memory_space<vmem>>, vector<32x256xbf16>,
    return
  }
  func.func @transform_0(%arg0: i32) -> (i32, i32) {
    %c0_i32 = arith.constant 0 : i32
    %c0_i32_0 = arith.constant 0 : i32
    return %arg0, %c0_i32 : i32, i32
  }
  func.func @transform_1(%arg0: i32) -> (i32, i32) {
    %c0_i32 = arith.constant 0 : i32
    %c0_i32_0 = arith.constant 0 : i32
    %c0_i32_1 = arith.constant 0 : i32
    return %c0_i32, %c0_i32_0 : i32, i32
  }
  func.func @transform_2(%arg0: i32) -> (i32, i32) {
    %c0_i32 = arith.constant 0 : i32
    %c0_i32_0 = arith.constant 0 : i32
    %c0_i32_1 = arith.constant 0 : i32
    return %c0_i32, %c0_i32_0 : i32, i32
  }
  func.func @transform_3(%arg0: i32) -> (i32, i32) {
    %c0_i32 = arith.constant 0 : i32
    %c0_i32_0 = arith.constant 0 : i32
    return %arg0, %c0_i32 : i32, i32
  }
}

module attributes {stable_mosaic.version = 11 : i64} {
  func.func @_vq_kernel(%arg0: i32, %arg1: memref<128x128xf32, #tpu.memory_space<vmem>>, %arg2: memref<128x128xf32, #tpu.memory_space<vmem>>, %arg3: memref<128x128xf32, #tpu.memory_space<vmem>>, %arg4: memref<128x1xi32, #tpu.memory_space<vmem>>, %arg5: memref<1x1xf32, #tpu.memory_space<vmem>>, %arg6: memref<1x128xf32, #tpu.memory_space<vmem>>) attributes {dimension_semantics = [#tpu.dimension_semantics<arbitrary>], iteration_bounds = array<i64: 1>, scalar_prefetch = 0 : i64, scratch_operands = 0 : i64, tpu.core_type = #tpu.core_type<tc>, window_params = [{transform_indices = @transform_0, window_bounds = array<i64: 128, 128>}, {pipeline_mode = #tpu.pipeline_mode<synchronous>, transform_indices = @transform_1, window_bounds = array<i64: 128, 128>}, {transform_indices = @transform_2, window_bounds = array<i64: 128, 128>}, {transform_indices = @transform_3, window_bounds = array<i64: 128, 1>}, {pipeline_mode = #tpu.pipeline_mode<synchronous>, transform_indices = @transform_4, window_bounds = array<i64: 1, 1>}, {pipeline_mode = #tpu.pipeline_mode<synchronous>, transform_indices = @transform_5, window_bounds = array<i64: 1, 128>}]} {
    %c0 = arith.constant 0 : index
    %c0_0 = arith.constant 0 : index
    %0 = vector.load %arg1[%c0, %c0_0] : memref<128x128xf32, #tpu.memory_space<vmem>>, vector<128x128xf32>
    %c0_1 = arith.constant 0 : index
    %c0_2 = arith.constant 0 : index
    %1 = vector.load %arg2[%c0_1, %c0_2] : memref<128x128xf32, #tpu.memory_space<vmem>>, vector<128x128xf32>
    %2 = arith.mulf %0, %0 : vector<128x128xf32>
    %cst = arith.constant dense<0.000000e+00> : vector<128xf32>
    %3 = vector.multi_reduction <add>, %2, %cst [1] : vector<128x128xf32> to vector<128xf32>
    %4 = vector.shape_cast %3 : vector<128xf32> to vector<128x1xf32>
    %5 = arith.mulf %1, %1 : vector<128x128xf32>
    %cst_3 = arith.constant dense<0.000000e+00> : vector<128xf32>
    %6 = vector.multi_reduction <add>, %5, %cst_3 [1] : vector<128x128xf32> to vector<128xf32>
    %7 = vector.shape_cast %6 : vector<128xf32> to vector<1x128xf32>
    %8 = arith.truncf %0 : vector<128x128xf32> to vector<128x128xbf16>
    %9 = arith.truncf %1 : vector<128x128xf32> to vector<128x128xbf16>
    %cst_4 = arith.constant dense<0.000000e+00> : vector<128x128xf32>
    %10 = tpu.matmul %8, %9, %cst_4 {dimension_numbers = #tpu.dot_dimension_numbers<[1], [1], [0], [0], [0, 0, 1, 0], [], []>} : vector<128x128xbf16>, vector<128x128xbf16>, vector<128x128xf32> -> vector<128x128xf32>
    %cst_5 = arith.constant 2.000000e+00 : f32
    %11 = vector.broadcast %cst_5 : f32 to vector<128x128xf32>
    %12 = arith.mulf %11, %10 : vector<128x128xf32>
    %13 = vector.broadcast %4 : vector<128x1xf32> to vector<128x128xf32>
    %14 = arith.subf %13, %12 : vector<128x128xf32>
    %15 = vector.broadcast %7 : vector<1x128xf32> to vector<128x128xf32>
    %16 = arith.addf %14, %15 : vector<128x128xf32>
    %17 = tpu.iota {dimensions = array<i32: 1>} : vector<128x128xi32>
    %c64_i32 = arith.constant 64 : i32
    %18 = vector.broadcast %c64_i32 : i32 to vector<128x128xi32>
    %19 = arith.cmpi slt, %17, %18 : vector<128x128xi32>
    %cst_6 = arith.constant 1.000000e+30 : f32
    %20 = vector.broadcast %cst_6 : f32 to vector<128x128xf32>
    %21 = arith.select %19, %16, %20 : vector<128x128xi1>, vector<128x128xf32>
    %22 = tpu.reduce_index %21 {axis = 1 : i32, kind = #tpu.reduction_kind<arg_min>} : vector<128x128xf32> -> vector<128xi32>
    %23 = vector.shape_cast %22 : vector<128xi32> to vector<128x1xi32>
    %24 = vector.broadcast %23 : vector<128x1xi32> to vector<128x128xi32>
    %25 = arith.cmpi eq, %24, %17 : vector<128x128xi32>
    %26 = arith.extui %25 : vector<128x128xi1> to vector<128x128xi32>
    %27 = arith.sitofp %26 : vector<128x128xi32> to vector<128x128xf32>
    %cst_7 = arith.constant dense<0.000000e+00> : vector<128x128xf32>
    %28 = tpu.matmul %27, %1, %cst_7 {dimension_numbers = #tpu.dot_dimension_numbers<[1], [0], [0], [1], [0, 0, 1, 1], [], []>} : vector<128x128xf32>, vector<128x128xf32>, vector<128x128xf32> -> vector<128x128xf32>
    %c0_8 = arith.constant 0 : index
    %c0_9 = arith.constant 0 : index
    %29 = vector.load %arg3[%c0_8, %c0_9] : memref<128x128xf32, #tpu.memory_space<vmem>>, vector<128x128xf32>
    tpu.vector_store %arg3[%c0_8, %c0_9], %28 {strides = array<i32>} : memref<128x128xf32, #tpu.memory_space<vmem>>, vector<128x128xf32>,
    %30 = vector.shape_cast %22 : vector<128xi32> to vector<128x1xi32>
    %c0_10 = arith.constant 0 : index
    %c0_11 = arith.constant 0 : index
    %31 = vector.load %arg4[%c0_10, %c0_11] : memref<128x1xi32, #tpu.memory_space<vmem>>, vector<128x1xi32>
    tpu.vector_store %arg4[%c0_10, %c0_11], %30 {strides = array<i32>} : memref<128x1xi32, #tpu.memory_space<vmem>>, vector<128x1xi32>,
    %c128_i32 = arith.constant 128 : i32
    %32 = arith.muli %arg0, %c128_i32 : i32
    %33 = tpu.iota {dimensions = array<i32: 0>} : vector<128x1xi32>
    %34 = vector.broadcast %32 : i32 to vector<128x1xi32>
    %35 = arith.addi %34, %33 : vector<128x1xi32>
    %c128_i32_12 = arith.constant 128 : i32
    %36 = vector.broadcast %c128_i32_12 : i32 to vector<128x1xi32>
    %37 = arith.cmpi slt, %35, %36 : vector<128x1xi32>
    %38 = arith.extui %37 : vector<128x1xi1> to vector<128x1xi32>
    %39 = arith.sitofp %38 : vector<128x1xi32> to vector<128x1xf32>
    %c0_i32 = arith.constant 0 : i32
    %40 = arith.cmpi eq, %arg0, %c0_i32 : i32
    %41 = arith.extui %40 : i1 to i32
    %c0_i32_13 = arith.constant 0 : i32
    %42 = arith.cmpi ne, %41, %c0_i32_13 : i32
    scf.if %42 {
      %cst_24 = arith.constant 0.000000e+00 : f32
      %62 = vector.broadcast %cst_24 : f32 to vector<1x1xf32>
      %c0_25 = arith.constant 0 : index
      %c0_26 = arith.constant 0 : index
      %63 = vector.load %arg5[%c0_25, %c0_26] : memref<1x1xf32, #tpu.memory_space<vmem>>, vector<1x1xf32>
      tpu.vector_store %arg5[%c0_25, %c0_26], %62 {strides = array<i32>} : memref<1x1xf32, #tpu.memory_space<vmem>>, vector<1x1xf32>,
      %cst_27 = arith.constant 0.000000e+00 : f32
      %64 = vector.broadcast %cst_27 : f32 to vector<1x128xf32>
      %c0_28 = arith.constant 0 : index
      %c0_29 = arith.constant 0 : index
      %65 = vector.load %arg6[%c0_28, %c0_29] : memref<1x128xf32, #tpu.memory_space<vmem>>, vector<1x128xf32>
      tpu.vector_store %arg6[%c0_28, %c0_29], %64 {strides = array<i32>} : memref<1x128xf32, #tpu.memory_space<vmem>>, vector<1x128xf32>,
    } else {
    }
    %43 = arith.subf %0, %28 : vector<128x128xf32>
    %44 = vector.broadcast %39 : vector<128x1xf32> to vector<128x128xf32>
    %45 = arith.mulf %43, %44 : vector<128x128xf32>
    %c0_14 = arith.constant 0 : index
    %c0_15 = arith.constant 0 : index
    %46 = vector.load %arg5[%c0_14, %c0_15] : memref<1x1xf32, #tpu.memory_space<vmem>>, vector<1x1xf32>
    %47 = arith.mulf %45, %45 : vector<128x128xf32>
    %48 = vector.shape_cast %47 : vector<128x128xf32> to vector<1x128x128xf32>
    %cst_16 = arith.constant dense<0.000000e+00> : vector<1xf32>
    %49 = vector.multi_reduction <add>, %48, %cst_16 [1, 2] : vector<1x128x128xf32> to vector<1xf32>
    %50 = vector.shape_cast %49 : vector<1xf32> to vector<1x1x1xf32>
    %51 = vector.extract %50[0, 0, 0] : f32 from vector<1x1x1xf32>
    %52 = vector.broadcast %51 : f32 to vector<1x1xf32>
    %53 = arith.addf %46, %52 : vector<1x1xf32>
    %c0_17 = arith.constant 0 : index
    %c0_18 = arith.constant 0 : index
    %54 = vector.load %arg5[%c0_17, %c0_18] : memref<1x1xf32, #tpu.memory_space<vmem>>, vector<1x1xf32>
    tpu.vector_store %arg5[%c0_17, %c0_18], %53 {strides = array<i32>} : memref<1x1xf32, #tpu.memory_space<vmem>>, vector<1x1xf32>,
    %c0_19 = arith.constant 0 : index
    %c0_20 = arith.constant 0 : index
    %55 = vector.load %arg6[%c0_19, %c0_20] : memref<1x128xf32, #tpu.memory_space<vmem>>, vector<1x128xf32>
    %56 = vector.broadcast %39 : vector<128x1xf32> to vector<128x128xf32>
    %57 = arith.mulf %27, %56 : vector<128x128xf32>
    %cst_21 = arith.constant dense<0.000000e+00> : vector<128xf32>
    %58 = vector.multi_reduction <add>, %57, %cst_21 [0] : vector<128x128xf32> to vector<128xf32>
    %59 = vector.shape_cast %58 : vector<128xf32> to vector<1x128xf32>
    %60 = arith.addf %55, %59 : vector<1x128xf32>
    %c0_22 = arith.constant 0 : index
    %c0_23 = arith.constant 0 : index
    %61 = vector.load %arg6[%c0_22, %c0_23] : memref<1x128xf32, #tpu.memory_space<vmem>>, vector<1x128xf32>
    tpu.vector_store %arg6[%c0_22, %c0_23], %60 {strides = array<i32>} : memref<1x128xf32, #tpu.memory_space<vmem>>, vector<1x128xf32>,
    return
  }
  func.func @transform_0(%arg0: i32) -> (i32, i32) {
    %c0_i32 = arith.constant 0 : i32
    %c0_i32_0 = arith.constant 0 : i32
    return %arg0, %c0_i32 : i32, i32
  }
  func.func @transform_1(%arg0: i32) -> (i32, i32) {
    %c0_i32 = arith.constant 0 : i32
    %c0_i32_0 = arith.constant 0 : i32
    %c0_i32_1 = arith.constant 0 : i32
    return %c0_i32, %c0_i32_0 : i32, i32
  }
  func.func @transform_2(%arg0: i32) -> (i32, i32) {
    %c0_i32 = arith.constant 0 : i32
    %c0_i32_0 = arith.constant 0 : i32
    return %arg0, %c0_i32 : i32, i32
  }
  func.func @transform_3(%arg0: i32) -> (i32, i32) {
    %c0_i32 = arith.constant 0 : i32
    %c0_i32_0 = arith.constant 0 : i32
    return %arg0, %c0_i32 : i32, i32
  }
  func.func @transform_4(%arg0: i32) -> (i32, i32) {
    %c0_i32 = arith.constant 0 : i32
    %c0_i32_0 = arith.constant 0 : i32
    %c0_i32_1 = arith.constant 0 : i32
    return %c0_i32, %c0_i32_0 : i32, i32
  }
  func.func @transform_5(%arg0: i32) -> (i32, i32) {
    %c0_i32 = arith.constant 0 : i32
    %c0_i32_0 = arith.constant 0 : i32
    %c0_i32_1 = arith.constant 0 : i32
    return %c0_i32, %c0_i32_0 : i32, i32
  }
}

module attributes {stable_mosaic.version = 11 : i64} {
  func.func @_matmul_bias_kernel(%arg0: i32, %arg1: memref<64x128xbf16, #tpu.memory_space<vmem>>, %arg2: memref<128x128xbf16, #tpu.memory_space<vmem>>, %arg3: memref<1x128xf32, #tpu.memory_space<vmem>>, %arg4: memref<64x128xf32, #tpu.memory_space<vmem>>) attributes {dimension_semantics = [#tpu.dimension_semantics<parallel>], iteration_bounds = array<i64: 2>, scalar_prefetch = 0 : i64, scratch_operands = 0 : i64, tpu.core_type = #tpu.core_type<tc>, window_params = [{transform_indices = @transform_0, window_bounds = array<i64: 64, 128>}, {pipeline_mode = #tpu.pipeline_mode<synchronous>, transform_indices = @transform_1, window_bounds = array<i64: 128, 128>}, {pipeline_mode = #tpu.pipeline_mode<synchronous>, transform_indices = @transform_2, window_bounds = array<i64: 1, 128>}, {transform_indices = @transform_3, window_bounds = array<i64: 64, 128>}]} {
    %c0 = arith.constant 0 : index
    %c0_0 = arith.constant 0 : index
    %0 = vector.load %arg1[%c0, %c0_0] : memref<64x128xbf16, #tpu.memory_space<vmem>>, vector<64x128xbf16>
    %c0_1 = arith.constant 0 : index
    %c0_2 = arith.constant 0 : index
    %1 = vector.load %arg2[%c0_1, %c0_2] : memref<128x128xbf16, #tpu.memory_space<vmem>>, vector<128x128xbf16>
    %cst = arith.constant dense<0.000000e+00> : vector<64x128xf32>
    %2 = tpu.matmul %0, %1, %cst {dimension_numbers = #tpu.dot_dimension_numbers<[1], [0], [0], [1], [0, 0, 1, 1], [], []>} : vector<64x128xbf16>, vector<128x128xbf16>, vector<64x128xf32> -> vector<64x128xf32>
    %c0_3 = arith.constant 0 : index
    %c0_4 = arith.constant 0 : index
    %3 = vector.load %arg3[%c0_3, %c0_4] : memref<1x128xf32, #tpu.memory_space<vmem>>, vector<1x128xf32>
    %4 = vector.broadcast %3 : vector<1x128xf32> to vector<64x128xf32>
    %5 = arith.addf %2, %4 : vector<64x128xf32>
    %c0_5 = arith.constant 0 : index
    %c0_6 = arith.constant 0 : index
    %6 = vector.load %arg4[%c0_5, %c0_6] : memref<64x128xf32, #tpu.memory_space<vmem>>, vector<64x128xf32>
    tpu.vector_store %arg4[%c0_5, %c0_6], %5 {strides = array<i32>} : memref<64x128xf32, #tpu.memory_space<vmem>>, vector<64x128xf32>,
    return
  }
  func.func @transform_0(%arg0: i32) -> (i32, i32) {
    %c0_i32 = arith.constant 0 : i32
    %c0_i32_0 = arith.constant 0 : i32
    return %arg0, %c0_i32 : i32, i32
  }
  func.func @transform_1(%arg0: i32) -> (i32, i32) {
    %c0_i32 = arith.constant 0 : i32
    %c0_i32_0 = arith.constant 0 : i32
    %c0_i32_1 = arith.constant 0 : i32
    return %c0_i32, %c0_i32_0 : i32, i32
  }
  func.func @transform_2(%arg0: i32) -> (i32, i32) {
    %c0_i32 = arith.constant 0 : i32
    %c0_i32_0 = arith.constant 0 : i32
    %c0_i32_1 = arith.constant 0 : i32
    return %c0_i32, %c0_i32_0 : i32, i32
  }
  func.func @transform_3(%arg0: i32) -> (i32, i32) {
    %c0_i32 = arith.constant 0 : i32
    %c0_i32_0 = arith.constant 0 : i32
    return %arg0, %c0_i32 : i32, i32
  }
}

module attributes {stable_mosaic.version = 11 : i64} {
  func.func @_matmul_bias_kernel(%arg0: i32, %arg1: memref<96x256xbf16, #tpu.memory_space<vmem>>, %arg2: memref<256x128xbf16, #tpu.memory_space<vmem>>, %arg3: memref<1x128xf32, #tpu.memory_space<vmem>>, %arg4: memref<96x128xbf16, #tpu.memory_space<vmem>>) attributes {dimension_semantics = [#tpu.dimension_semantics<parallel>], iteration_bounds = array<i64: 2>, scalar_prefetch = 0 : i64, scratch_operands = 0 : i64, tpu.core_type = #tpu.core_type<tc>, window_params = [{transform_indices = @transform_0, window_bounds = array<i64: 96, 256>}, {pipeline_mode = #tpu.pipeline_mode<synchronous>, transform_indices = @transform_1, window_bounds = array<i64: 256, 128>}, {pipeline_mode = #tpu.pipeline_mode<synchronous>, transform_indices = @transform_2, window_bounds = array<i64: 1, 128>}, {transform_indices = @transform_3, window_bounds = array<i64: 96, 128>}]} {
    %c0 = arith.constant 0 : index
    %c0_0 = arith.constant 0 : index
    %0 = vector.load %arg1[%c0, %c0_0] : memref<96x256xbf16, #tpu.memory_space<vmem>>, vector<96x256xbf16>
    %c0_1 = arith.constant 0 : index
    %c0_2 = arith.constant 0 : index
    %1 = vector.load %arg2[%c0_1, %c0_2] : memref<256x128xbf16, #tpu.memory_space<vmem>>, vector<256x128xbf16>
    %cst = arith.constant dense<0.000000e+00> : vector<96x128xf32>
    %2 = tpu.matmul %0, %1, %cst {dimension_numbers = #tpu.dot_dimension_numbers<[1], [0], [0], [1], [0, 0, 1, 1], [], []>} : vector<96x256xbf16>, vector<256x128xbf16>, vector<96x128xf32> -> vector<96x128xf32>
    %c0_3 = arith.constant 0 : index
    %c0_4 = arith.constant 0 : index
    %3 = vector.load %arg3[%c0_3, %c0_4] : memref<1x128xf32, #tpu.memory_space<vmem>>, vector<1x128xf32>
    %4 = vector.broadcast %3 : vector<1x128xf32> to vector<96x128xf32>
    %5 = arith.addf %2, %4 : vector<96x128xf32>
    %cst_5 = arith.constant 0.000000e+00 : f32
    %6 = vector.broadcast %cst_5 : f32 to vector<96x128xf32>
    %7 = arith.maximumf %5, %6 : vector<96x128xf32>
    %8 = arith.truncf %7 : vector<96x128xf32> to vector<96x128xbf16>
    %c0_6 = arith.constant 0 : index
    %c0_7 = arith.constant 0 : index
    %9 = vector.load %arg4[%c0_6, %c0_7] : memref<96x128xbf16, #tpu.memory_space<vmem>>, vector<96x128xbf16>
    tpu.vector_store %arg4[%c0_6, %c0_7], %8 {strides = array<i32>} : memref<96x128xbf16, #tpu.memory_space<vmem>>, vector<96x128xbf16>,
    return
  }
  func.func @transform_0(%arg0: i32) -> (i32, i32) {
    %c0_i32 = arith.constant 0 : i32
    %c0_i32_0 = arith.constant 0 : i32
    return %arg0, %c0_i32 : i32, i32
  }
  func.func @transform_1(%arg0: i32) -> (i32, i32) {
    %c0_i32 = arith.constant 0 : i32
    %c0_i32_0 = arith.constant 0 : i32
    %c0_i32_1 = arith.constant 0 : i32
    return %c0_i32, %c0_i32_0 : i32, i32
  }
  func.func @transform_2(%arg0: i32) -> (i32, i32) {
    %c0_i32 = arith.constant 0 : i32
    %c0_i32_0 = arith.constant 0 : i32
    %c0_i32_1 = arith.constant 0 : i32
    return %c0_i32, %c0_i32_0 : i32, i32
  }
  func.func @transform_3(%arg0: i32) -> (i32, i32) {
    %c0_i32 = arith.constant 0 : i32
    %c0_i32_0 = arith.constant 0 : i32
    return %arg0, %c0_i32 : i32, i32
  }
}

module attributes {stable_mosaic.version = 11 : i64} {
  func.func @_matmul_bias_kernel(%arg0: i32, %arg1: memref<256x384xbf16, #tpu.memory_space<vmem>>, %arg2: memref<384x128xbf16, #tpu.memory_space<vmem>>, %arg3: memref<1x128xf32, #tpu.memory_space<vmem>>, %arg4: memref<256x128xf32, #tpu.memory_space<vmem>>) attributes {dimension_semantics = [#tpu.dimension_semantics<parallel>], iteration_bounds = array<i64: 2>, scalar_prefetch = 0 : i64, scratch_operands = 0 : i64, tpu.core_type = #tpu.core_type<tc>, window_params = [{transform_indices = @transform_0, window_bounds = array<i64: 256, 384>}, {pipeline_mode = #tpu.pipeline_mode<synchronous>, transform_indices = @transform_1, window_bounds = array<i64: 384, 128>}, {pipeline_mode = #tpu.pipeline_mode<synchronous>, transform_indices = @transform_2, window_bounds = array<i64: 1, 128>}, {transform_indices = @transform_3, window_bounds = array<i64: 256, 128>}]} {
    %c0 = arith.constant 0 : index
    %c0_0 = arith.constant 0 : index
    %0 = vector.load %arg1[%c0, %c0_0] : memref<256x384xbf16, #tpu.memory_space<vmem>>, vector<256x384xbf16>
    %c0_1 = arith.constant 0 : index
    %c0_2 = arith.constant 0 : index
    %1 = vector.load %arg2[%c0_1, %c0_2] : memref<384x128xbf16, #tpu.memory_space<vmem>>, vector<384x128xbf16>
    %cst = arith.constant dense<0.000000e+00> : vector<256x128xf32>
    %2 = tpu.matmul %0, %1, %cst {dimension_numbers = #tpu.dot_dimension_numbers<[1], [0], [0], [1], [0, 0, 1, 1], [], []>} : vector<256x384xbf16>, vector<384x128xbf16>, vector<256x128xf32> -> vector<256x128xf32>
    %c0_3 = arith.constant 0 : index
    %c0_4 = arith.constant 0 : index
    %3 = vector.load %arg3[%c0_3, %c0_4] : memref<1x128xf32, #tpu.memory_space<vmem>>, vector<1x128xf32>
    %4 = vector.broadcast %3 : vector<1x128xf32> to vector<256x128xf32>
    %5 = arith.addf %2, %4 : vector<256x128xf32>
    %c0_5 = arith.constant 0 : index
    %c0_6 = arith.constant 0 : index
    %6 = vector.load %arg4[%c0_5, %c0_6] : memref<256x128xf32, #tpu.memory_space<vmem>>, vector<256x128xf32>
    tpu.vector_store %arg4[%c0_5, %c0_6], %5 {strides = array<i32>} : memref<256x128xf32, #tpu.memory_space<vmem>>, vector<256x128xf32>,
    return
  }
  func.func @transform_0(%arg0: i32) -> (i32, i32) {
    %c0_i32 = arith.constant 0 : i32
    %c0_i32_0 = arith.constant 0 : i32
    return %arg0, %c0_i32 : i32, i32
  }
  func.func @transform_1(%arg0: i32) -> (i32, i32) {
    %c0_i32 = arith.constant 0 : i32
    %c0_i32_0 = arith.constant 0 : i32
    %c0_i32_1 = arith.constant 0 : i32
    return %c0_i32, %c0_i32_0 : i32, i32
  }
  func.func @transform_2(%arg0: i32) -> (i32, i32) {
    %c0_i32 = arith.constant 0 : i32
    %c0_i32_0 = arith.constant 0 : i32
    %c0_i32_1 = arith.constant 0 : i32
    return %c0_i32, %c0_i32_0 : i32, i32
  }
  func.func @transform_3(%arg0: i32) -> (i32, i32) {
    %c0_i32 = arith.constant 0 : i32
    %c0_i32_0 = arith.constant 0 : i32
    return %arg0, %c0_i32 : i32, i32
  }
}

</mosaic_0001>

<llo_original>
// kernel: vqvae_hierarchical_forward.10
$region0: #{vqvae_hierarchical_forward.10}
  #allocation0 [shape = 'u32[]', space=smem, size = 0x4, offset = 0x4, fixed_abs, tag = 'smem constant byte address 0x4 - core index']
  #allocation1 [shape = 'u32[72,128]{1,0:T(1,128)}', space=vmem, size = 0x9000, scoped, tag = 'internal scratch']
  %s0 = inlined_call_operand.vmem [shape: bf16[128,128], index: 0, kind: input, shape index: {}]
  %s1 = inlined_call_operand.vmem [shape: bf16[128,128], index: 1, kind: input, shape index: {}]
  %s2 = inlined_call_operand.vmem [shape: f32[1,128], index: 2, kind: input, shape index: {}]
  %s3 = inlined_call_operand.vmem [shape: bf16[128,128], index: 3, kind: output, shape index: {}]
  %s4 = sld [smem:[#allocation0]]
  $region45: #{vqvae_hierarchical_forward.10} parent=0
    _
  %s6 = ssub.s32 1, %s4
  %s7 = scalar_select 0, %s6, %s4
  loop: start=0, step=1, limit=4
  $region2: #{vqvae_hierarchical_forward.10} parent=0 // loop_pre_header
    _
  $region3: #{vqvae_hierarchical_forward.10} parent=0 // loop_header
    %s9 = sphi 0, %s13
    %p10 = scmp.ge.s32.totalorder %s9, 4
    %s19 = sphi 0, %s21
    %s22 = sphi 0, %s19
    %s23 = sphi 0, %s22
    %s39 = sphi 0, %s23
    %s43 = sphi 0, %s43
    %s45 = sphi 0, %s43
    %s46 = sphi 0, %s45
    %s60 = sphi 0, %s46
    %s64 = sphi 0, %s64
    %s66 = sphi 0, %s64
    %s67 = sphi 0, %s66
    %s81 = sphi 0, %s67
    %s87 = sphi 0, %s89
    %s90 = sphi 0, %s87
    %s91 = sphi 0, %s90
    %s107 = sphi 0, %s91
  $region4: #{vqvae_hierarchical_forward.10} parent=0 // loop_header_branch
    %12 = sbr.rel (%p10) target = $region8
  $region5: #{vqvae_hierarchical_forward.10} parent=0 // loop_body
    %s14 = ssub.s32 %s9, 1
    %s15 = ssub.s32 %s9, 2
    %s16 = sadd.s32 %s9, 1
    %s17 = ssub.s32 %s9, %s16
    %p18 = scmp.eq.s32.totalorder %s17, 0
    %s20 = sadd.s32 %s19, 1
    %s21 = scalar_select %p18, %s19, %s20
    %p24 = pneg %p18
    %p25 = scmp.eq.s32.totalorder %s9, 1
    %p26 = por %p24, %p25
    %p27 = scmp.ne.s32.totalorder %s19, %s22
    %p28 = scmp.eq.s32.totalorder %s9, 0
    %p29 = por %p27, %p28
    %p30 = scmp.ne.s32.totalorder %s19, %s22
    %p31 = scmp.eq.s32.totalorder %s14, 1
    %p32 = por %p30, %p31
    %p33 = scmp.ne.s32.totalorder %s22, %s23
    %p34 = scmp.eq.s32.totalorder %s14, 0
    %p35 = por %p33, %p34
    %p36 = scmp.ne.s32.totalorder %s22, %s23
    %p37 = scmp.eq.s32.totalorder %s15, 1
    %p38 = por %p36, %p37
    %p40 = scmp.ne.s32.totalorder %s23, %s39
    %p41 = scmp.eq.s32.totalorder %s15, 0
    %p42 = por %p40, %p41
    %s44 = sadd.s32 %s43, 1
    %p47 = scmp.eq.s32.totalorder %s9, 1
    %p48 = scmp.ne.s32.totalorder %s43, %s45
    %p49 = scmp.eq.s32.totalorder %s9, 0
    %p50 = por %p48, %p49
    %p51 = scmp.ne.s32.totalorder %s43, %s45
    %p52 = scmp.eq.s32.totalorder %s14, 1
    %p53 = por %p51, %p52
    %p54 = scmp.ne.s32.totalorder %s45, %s46
    %p55 = scmp.eq.s32.totalorder %s14, 0
    %p56 = por %p54, %p55
    %p57 = scmp.ne.s32.totalorder %s45, %s46
    %p58 = scmp.eq.s32.totalorder %s15, 1
    %p59 = por %p57, %p58
    %p61 = scmp.ne.s32.totalorder %s46, %s60
    %p62 = scmp.eq.s32.totalorder %s15, 0
    %p63 = por %p61, %p62
    %s65 = sadd.s32 %s64, 1
    %p68 = scmp.eq.s32.totalorder %s9, 1
    %p69 = scmp.ne.s32.totalorder %s64, %s66
    %p70 = scmp.eq.s32.totalorder %s9, 0
    %p71 = por %p69, %p70
    %p72 = scmp.ne.s32.totalorder %s64, %s66
    %p73 = scmp.eq.s32.totalorder %s14, 1
    %p74 = por %p72, %p73
    %p75 = scmp.ne.s32.totalorder %s66, %s67
    %p76 = scmp.eq.s32.totalorder %s14, 0
    %p77 = por %p75, %p76
    %p78 = scmp.ne.s32.totalorder %s66, %s67
    %p79 = scmp.eq.s32.totalorder %s15, 1
    %p80 = por %p78, %p79
    %p82 = scmp.ne.s32.totalorder %s67, %s81
    %p83 = scmp.eq.s32.totalorder %s15, 0
    %p84 = por %p82, %p83
    %s85 = ssub.s32 %s9, %s16
    %p86 = scmp.eq.s32.totalorder %s85, 0
    %s88 = sadd.s32 %s87, 1
    %s89 = scalar_select %p86, %s87, %s88
    %p92 = pneg %p86
    %p93 = scmp.eq.s32.totalorder %s9, 1
    %p94 = por %p92, %p93
    %p95 = scmp.ne.s32.totalorder %s87, %s90
    %p96 = scmp.eq.s32.totalorder %s9, 0
    %p97 = por %p95, %p96
    %p98 = scmp.ne.s32.totalorder %s87, %s90
    %p99 = scmp.eq.s32.totalorder %s14, 1
    %p100 = por %p98, %p99
    %p101 = scmp.ne.s32.totalorder %s90, %s91
    %p102 = scmp.eq.s32.totalorder %s14, 0
    %p103 = por %p101, %p102
    %p104 = scmp.ne.s32.totalorder %s90, %s91
    %p105 = scmp.eq.s32.totalorder %s15, 1
    %p106 = por %p104, %p105
    %p108 = scmp.ne.s32.totalorder %s91, %s107
    %p109 = scmp.eq.s32.totalorder %s15, 0
    %p110 = por %p108, %p109
    %p111 = scmp.le.s32.totalorder 1, %s9
    %p112 = scmp.lt.s32.totalorder %s9, 3
    %p113 = pnand %p111, %p112
    %p114 = pneg %p113
    // Predicated region
    $region9: #{vqvae_hierarchical_forward.10} parent=5 // pred_check
      _
    $region10: #{vqvae_hierarchical_forward.10} parent=5 // pred_check_branch
      %116 = sbr.rel (%p113) target = $region12
    $region11: #{vqvae_hierarchical_forward.10} parent=5 // pred_region
      %s117 = ssub.s32 %s9, 1
      // Predicated region
      $region13: #{vqvae_hierarchical_forward.10} parent=11 // pred_check
        %p118 = pneg %p56
      $region14: #{vqvae_hierarchical_forward.10} parent=11 // pred_check_branch
        %120 = sbr.rel (%p118) target = $region16
      $region15: #{vqvae_hierarchical_forward.10} parent=11 // pred_region
        _
      $region16: #{vqvae_hierarchical_forward.10} parent=11 // pred_fallthru
        _
      // Predicated region
      $region17: #{vqvae_hierarchical_forward.10} parent=11 // pred_check
        %p121 = pneg %p77
      $region18: #{vqvae_hierarchical_forward.10} parent=11 // pred_check_branch
        %123 = sbr.rel (%p121) target = $region20
      $region19: #{vqvae_hierarchical_forward.10} parent=11 // pred_region
        _
      $region20: #{vqvae_hierarchical_forward.10} parent=11 // pred_fallthru
        _
    $region12: #{vqvae_hierarchical_forward.10} parent=5 // pred_fallthru
      _
    %p124 = scmp.lt.s32.totalorder %s9, 2
    // Predicated region
    $region21: #{vqvae_hierarchical_forward.10} parent=5 // pred_check
      %p125 = pneg %p124
    $region22: #{vqvae_hierarchical_forward.10} parent=5 // pred_check_branch
      %127 = sbr.rel (%p125) target = $region24
    $region23: #{vqvae_hierarchical_forward.10} parent=5 // pred_region
      // Predicated region
      $region25: #{vqvae_hierarchical_forward.10} parent=23 // pred_check
        %p128 = pneg %p29
      $region26: #{vqvae_hierarchical_forward.10} parent=23 // pred_check_branch
        %130 = sbr.rel (%p128) target = $region28
      $region27: #{vqvae_hierarchical_forward.10} parent=23 // pred_region
        %s131 = smul.u32 8, %s9
        %p132 = scmp.lt.s32.totalorder %s131, 15
        %s133 = scalar_select %p132, %s131, 15
        %s134 = smul.addr %s133, 4
        %s135 = scalar_lea.vmem %s0, %s134
        %s136 = smul.u32 8, %s9
      $region28: #{vqvae_hierarchical_forward.10} parent=23 // pred_fallthru
        _
    $region24: #{vqvae_hierarchical_forward.10} parent=5 // pred_fallthru
      _
    %p137 = scmp.le.s32.totalorder 1, %s9
    %p138 = scmp.lt.s32.totalorder %s9, 3
    %p139 = pnand %p137, %p138
    %p140 = pneg %p139
    // Predicated region
    $region29: #{vqvae_hierarchical_forward.10} parent=5 // pred_check
      _
    $region30: #{vqvae_hierarchical_forward.10} parent=5 // pred_check_branch
      %142 = sbr.rel (%p139) target = $region32
    $region31: #{vqvae_hierarchical_forward.10} parent=5 // pred_region
      %s143 = ssub.s32 %s9, 1
      %s144 = smul.u32 8, %s14
      %p145 = scmp.lt.s32.totalorder %s144, 15
      %s146 = scalar_select %p145, %s144, 15
      %s147 = smul.addr %s146, 4
      %s148 = scalar_lea.vmem %s0, %s147
      %p149 = pneg %p35
      %p150 = pneg %p32
      %p151 = pneg %p56
      %p152 = pneg %p53
      %p153 = pneg %p77
      %p154 = pneg %p74
      %p155 = pneg %p103
      %p156 = pneg %p100
      %s157 = smul.u32 8, %s14
      %p158 = scmp.lt.s32.totalorder %s157, 15
      %s159 = scalar_select %p158, %s157, 15
      %s160 = smul.addr %s159, 4
      %s161 = scalar_lea.vmem %s3, %s160
      %s162 = smul.u32 8, %s14
      %p163 = scmp.lt.s32.totalorder %s162, 15
      %s164 = scalar_select %p163, %s162, 15
      %s165 = smul.addr %s164, 4
      %s166 = scalar_lea.vmem %s0, %s165
      %s167 = smul.u32 8, %s14
      %s168 = smul.u32 8, %s14
      %p169 = scmp.lt.s32.totalorder %s168, 15
      %s170 = scalar_select %p169, %s168, 15
      %s171 = smul.addr %s170, 4
      %s172 = scalar_lea.vmem %s3, %s171
      %s173 = smul.u32 8, %s14
      %v174 = vld [vmem:[%s166] sm:$0xf]
      %v175 = vld [vmem:[%s166 + $0x4] sm:$0xf]
      %v176 = vld [vmem:[%s166 + $0x8] sm:$0xf]
      %v177 = vld [vmem:[%s166 + $0xc] sm:$0xf]
      %v178 = vld [vmem:[%s166 + $0x10] sm:$0xf]
      %v179 = vld [vmem:[%s166 + $0x14] sm:$0xf]
      %v180 = vld [vmem:[%s166 + $0x18] sm:$0xf]
      %v181 = vld [vmem:[%s166 + $0x1c] sm:$0xf]
      %v182 = vld [vmem:[%s1] sm:$0xf]
      %v183 = vld [vmem:[%s1 + $0x4] sm:$0xf]
      %v184 = vld [vmem:[%s1 + $0x8] sm:$0xf]
      %v185 = vld [vmem:[%s1 + $0xc] sm:$0xf]
      %v186 = vld [vmem:[%s1 + $0x10] sm:$0xf]
      %v187 = vld [vmem:[%s1 + $0x14] sm:$0xf]
      %v188 = vld [vmem:[%s1 + $0x18] sm:$0xf]
      %v189 = vld [vmem:[%s1 + $0x1c] sm:$0xf]
      %v190 = vld [vmem:[%s1 + $0x20] sm:$0xf]
      %v191 = vld [vmem:[%s1 + $0x24] sm:$0xf]
      %v192 = vld [vmem:[%s1 + $0x28] sm:$0xf]
      %v193 = vld [vmem:[%s1 + $0x2c] sm:$0xf]
      %v194 = vld [vmem:[%s1 + $0x30] sm:$0xf]
      %v195 = vld [vmem:[%s1 + $0x34] sm:$0xf]
      %v196 = vld [vmem:[%s1 + $0x38] sm:$0xf]
      %v197 = vld [vmem:[%s1 + $0x3c] sm:$0xf]
      %v198 = vld [vmem:[%s2] sm:$0x1]
      %v200 = vperm.slane %v198, 0
      %v210 = vunpack.c.l.b16 %v174
      %v211 = vunpack.c.l.b16 %v175
      %v212 = vunpack.c.l.b16 %v176
      %v213 = vunpack.c.l.b16 %v177
      %v214 = vunpack.c.l.b16 %v178
      %v215 = vunpack.c.l.b16 %v179
      %v216 = vunpack.c.l.b16 %v180
      %v217 = vunpack.c.l.b16 %v181
      %v218 = vpack.c.b16 %v211, %v210
      %v219 = vpack.c.b16 %v213, %v212
      %v220 = vpack.c.b16 %v215, %v214
      %v221 = vpack.c.b16 %v217, %v216
      %v242 = vunpack.c.l.b16 %v182
      %v243 = vunpack.c.l.b16 %v183
      %v244 = vunpack.c.l.b16 %v184
      %v245 = vunpack.c.l.b16 %v185
      %v246 = vunpack.c.l.b16 %v186
      %v247 = vunpack.c.l.b16 %v187
      %v248 = vunpack.c.l.b16 %v188
      %v249 = vunpack.c.l.b16 %v189
      %v250 = vunpack.c.l.b16 %v190
      %v251 = vunpack.c.l.b16 %v191
      %v252 = vunpack.c.l.b16 %v192
      %v253 = vunpack.c.l.b16 %v193
      %v254 = vunpack.c.l.b16 %v194
      %v255 = vunpack.c.l.b16 %v195
      %v256 = vunpack.c.l.b16 %v196
      %v257 = vunpack.c.l.b16 %v197
      %v258 = vpack.c.b16 %v243, %v242
      %v259 = vpack.c.b16 %v245, %v244
      %v260 = vpack.c.b16 %v247, %v246
      %v261 = vpack.c.b16 %v249, %v248
      %v262 = vpack.c.b16 %v251, %v250
      %v263 = vpack.c.b16 %v253, %v252
      %v264 = vpack.c.b16 %v255, %v254
      %v265 = vpack.c.b16 %v257, %v256
      %274 = vmatpush.bf16.msra.mxu0 %v265
      %275 = vmatpush.bf16.msra.mxu0 %v264
      %276 = vmatpush.bf16.msra.mxu0 %v263
      %277 = vmatpush.bf16.msra.mxu0 %v262
      %278 = vmatpush.bf16.msra.mxu0 %v261
      %279 = vmatpush.bf16.msra.mxu0 %v260
      %280 = vmatpush.bf16.msra.mxu0 %v259
      %281 = vmatpush.bf16.msra.mxu0 %v258
      %282 = vmatmul.bf16.gmra.mxu0 %v218
      %v283 = vpop.f32.mrf.mxu0
      %v284 = vadd.f32 %v200, %v283
      %v285 = vpop.f32.mrf.mxu0
      %v286 = vadd.f32 %v200, %v285
      %287 = vmatmul.bf16.gmra.mxu0 %v219
      %v288 = vpop.f32.mrf.mxu0
      %v289 = vadd.f32 %v200, %v288
      %v290 = vpop.f32.mrf.mxu0
      %v291 = vadd.f32 %v200, %v290
      %292 = vmatmul.bf16.gmra.mxu0 %v220
      %v293 = vpop.f32.mrf.mxu0
      %v294 = vadd.f32 %v200, %v293
      %v295 = vpop.f32.mrf.mxu0
      %v296 = vadd.f32 %v200, %v295
      %297 = vmatmul.bf16.gmra.mxu0 %v221
      %v298 = vpop.f32.mrf.mxu0
      %v299 = vadd.f32 %v200, %v298
      %v300 = vpop.f32.mrf.mxu0
      %v301 = vadd.f32 %v200, %v300
      %302 = vdwg.mxu0
      %v303 = vmax.f32 %v284, 0.0
      %v304 = vmax.f32 %v286, 0.0
      %v305 = vmax.f32 %v289, 0.0
      %v306 = vmax.f32 %v291, 0.0
      %v307 = vmax.f32 %v294, 0.0
      %v308 = vmax.f32 %v296, 0.0
      %v309 = vmax.f32 %v299, 0.0
      %v310 = vmax.f32 %v301, 0.0
      %v311 = vpack.c.bf16 %v303, %v303
      %v312 = vpack.c.bf16 %v304, %v304
      %v313 = vpack.c.bf16 %v305, %v305
      %v314 = vpack.c.bf16 %v306, %v306
      %v315 = vpack.c.bf16 %v307, %v307
      %v316 = vpack.c.bf16 %v308, %v308
      %v317 = vpack.c.bf16 %v309, %v309
      %v318 = vpack.c.bf16 %v310, %v310
      %319 = vst [vmem:[%s172] sm:$0xf] %v311
      %320 = vst [vmem:[%s172 + $0x4] sm:$0xf] %v312
      %321 = vst [vmem:[%s172 + $0x8] sm:$0xf] %v313
      %322 = vst [vmem:[%s172 + $0xc] sm:$0xf] %v314
      %323 = vst [vmem:[%s172 + $0x10] sm:$0xf] %v315
      %324 = vst [vmem:[%s172 + $0x14] sm:$0xf] %v316
      %325 = vst [vmem:[%s172 + $0x18] sm:$0xf] %v317
      %326 = vst [vmem:[%s172 + $0x1c] sm:$0xf] %v318
      %s327 = smul.u32 8, %s14
      %p328 = scmp.lt.s32.totalorder %s327, 15
      %s329 = scalar_select %p328, %s327, 15
      %s330 = smul.addr %s329, 4
      %s331 = scalar_lea.vmem %s3, %s330
      // Predicated region
      $region33: #{vqvae_hierarchical_forward.10} parent=31 // pred_check
        %p332 = pneg %p100
      $region34: #{vqvae_hierarchical_forward.10} parent=31 // pred_check_branch
        %334 = sbr.rel (%p332) target = $region36
      $region35: #{vqvae_hierarchical_forward.10} parent=31 // pred_region
        %s335 = smul.u32 8, %s14
      $region36: #{vqvae_hierarchical_forward.10} parent=31 // pred_fallthru
        _
    $region32: #{vqvae_hierarchical_forward.10} parent=5 // pred_fallthru
      _
    %p336 = scmp.le.s32.totalorder 2, %s9
    // Predicated region
    $region37: #{vqvae_hierarchical_forward.10} parent=5 // pred_check
      %p337 = pneg %p336
    $region38: #{vqvae_hierarchical_forward.10} parent=5 // pred_check_branch
      %339 = sbr.rel (%p337) target = $region40
    $region39: #{vqvae_hierarchical_forward.10} parent=5 // pred_region
      %s340 = ssub.s32 %s9, 2
      // Predicated region
      $region41: #{vqvae_hierarchical_forward.10} parent=39 // pred_check
        %p341 = pneg %p106
      $region42: #{vqvae_hierarchical_forward.10} parent=39 // pred_check_branch
        %343 = sbr.rel (%p341) target = $region44
      $region43: #{vqvae_hierarchical_forward.10} parent=39 // pred_region
        %s344 = smul.u32 8, %s15
        %p345 = scmp.lt.s32.totalorder %s344, 15
        %s346 = scalar_select %p345, %s344, 15
        %s347 = smul.addr %s346, 4
        %s348 = scalar_lea.vmem %s3, %s347
      $region44: #{vqvae_hierarchical_forward.10} parent=39 // pred_fallthru
        _
    $region40: #{vqvae_hierarchical_forward.10} parent=5 // pred_fallthru
      _
  $region6: #{vqvae_hierarchical_forward.10} parent=0 // loop_footer
    %s13 = sadd.s32 1, %s9
  $region7: #{vqvae_hierarchical_forward.10} parent=0 // loop_footer_branch
    %8 = sbr.rel target = $region3
  $region8: #{vqvae_hierarchical_forward.10} parent=0 // loop_exit
    _

// kernel: vqvae_hierarchical_forward.11
$region0: #{vqvae_hierarchical_forward.11}
  #allocation0 [shape = 'u32[]', space=smem, size = 0x4, offset = 0x4, fixed_abs, tag = 'smem constant byte address 0x4 - core index']
  #allocation1 [shape = 'u32[72,128]{1,0:T(1,128)}', space=vmem, size = 0x9000, scoped, tag = 'internal scratch']
  %s0 = inlined_call_operand.vmem [shape: bf16[128,384], index: 0, kind: input, shape index: {}]
  %s1 = inlined_call_operand.vmem [shape: bf16[384,128], index: 1, kind: input, shape index: {}]
  %s2 = inlined_call_operand.vmem [shape: f32[1,128], index: 2, kind: input, shape index: {}]
  %s3 = inlined_call_operand.vmem [shape: bf16[128,128], index: 3, kind: output, shape index: {}]
  %s4 = sld [smem:[#allocation0]]
  $region45: #{vqvae_hierarchical_forward.11} parent=0
    _
  %s6 = ssub.s32 1, %s4
  %s7 = scalar_select 0, %s6, %s4
  loop: start=0, step=1, limit=4
  $region2: #{vqvae_hierarchical_forward.11} parent=0 // loop_pre_header
    _
  $region3: #{vqvae_hierarchical_forward.11} parent=0 // loop_header
    %s9 = sphi 0, %s13
    %p10 = scmp.ge.s32.totalorder %s9, 4
    %s19 = sphi 0, %s21
    %s22 = sphi 0, %s19
    %s23 = sphi 0, %s22
    %s39 = sphi 0, %s23
    %s43 = sphi 0, %s43
    %s45 = sphi 0, %s43
    %s46 = sphi 0, %s45
    %s60 = sphi 0, %s46
    %s64 = sphi 0, %s64
    %s66 = sphi 0, %s64
    %s67 = sphi 0, %s66
    %s81 = sphi 0, %s67
    %s87 = sphi 0, %s89
    %s90 = sphi 0, %s87
    %s91 = sphi 0, %s90
    %s107 = sphi 0, %s91
  $region4: #{vqvae_hierarchical_forward.11} parent=0 // loop_header_branch
    %12 = sbr.rel (%p10) target = $region8
  $region5: #{vqvae_hierarchical_forward.11} parent=0 // loop_body
    %s14 = ssub.s32 %s9, 1
    %s15 = ssub.s32 %s9, 2
    %s16 = sadd.s32 %s9, 1
    %s17 = ssub.s32 %s9, %s16
    %p18 = scmp.eq.s32.totalorder %s17, 0
    %s20 = sadd.s32 %s19, 1
    %s21 = scalar_select %p18, %s19, %s20
    %p24 = pneg %p18
    %p25 = scmp.eq.s32.totalorder %s9, 1
    %p26 = por %p24, %p25
    %p27 = scmp.ne.s32.totalorder %s19, %s22
    %p28 = scmp.eq.s32.totalorder %s9, 0
    %p29 = por %p27, %p28
    %p30 = scmp.ne.s32.totalorder %s19, %s22
    %p31 = scmp.eq.s32.totalorder %s14, 1
    %p32 = por %p30, %p31
    %p33 = scmp.ne.s32.totalorder %s22, %s23
    %p34 = scmp.eq.s32.totalorder %s14, 0
    %p35 = por %p33, %p34
    %p36 = scmp.ne.s32.totalorder %s22, %s23
    %p37 = scmp.eq.s32.totalorder %s15, 1
    %p38 = por %p36, %p37
    %p40 = scmp.ne.s32.totalorder %s23, %s39
    %p41 = scmp.eq.s32.totalorder %s15, 0
    %p42 = por %p40, %p41
    %s44 = sadd.s32 %s43, 1
    %p47 = scmp.eq.s32.totalorder %s9, 1
    %p48 = scmp.ne.s32.totalorder %s43, %s45
    %p49 = scmp.eq.s32.totalorder %s9, 0
    %p50 = por %p48, %p49
    %p51 = scmp.ne.s32.totalorder %s43, %s45
    %p52 = scmp.eq.s32.totalorder %s14, 1
    %p53 = por %p51, %p52
    %p54 = scmp.ne.s32.totalorder %s45, %s46
    %p55 = scmp.eq.s32.totalorder %s14, 0
    %p56 = por %p54, %p55
    %p57 = scmp.ne.s32.totalorder %s45, %s46
    %p58 = scmp.eq.s32.totalorder %s15, 1
    %p59 = por %p57, %p58
    %p61 = scmp.ne.s32.totalorder %s46, %s60
    %p62 = scmp.eq.s32.totalorder %s15, 0
    %p63 = por %p61, %p62
    %s65 = sadd.s32 %s64, 1
    %p68 = scmp.eq.s32.totalorder %s9, 1
    %p69 = scmp.ne.s32.totalorder %s64, %s66
    %p70 = scmp.eq.s32.totalorder %s9, 0
    %p71 = por %p69, %p70
    %p72 = scmp.ne.s32.totalorder %s64, %s66
    %p73 = scmp.eq.s32.totalorder %s14, 1
    %p74 = por %p72, %p73
    %p75 = scmp.ne.s32.totalorder %s66, %s67
    %p76 = scmp.eq.s32.totalorder %s14, 0
    %p77 = por %p75, %p76
    %p78 = scmp.ne.s32.totalorder %s66, %s67
    %p79 = scmp.eq.s32.totalorder %s15, 1
    %p80 = por %p78, %p79
    %p82 = scmp.ne.s32.totalorder %s67, %s81
    %p83 = scmp.eq.s32.totalorder %s15, 0
    %p84 = por %p82, %p83
    %s85 = ssub.s32 %s9, %s16
    %p86 = scmp.eq.s32.totalorder %s85, 0
    %s88 = sadd.s32 %s87, 1
    %s89 = scalar_select %p86, %s87, %s88
    %p92 = pneg %p86
    %p93 = scmp.eq.s32.totalorder %s9, 1
    %p94 = por %p92, %p93
    %p95 = scmp.ne.s32.totalorder %s87, %s90
    %p96 = scmp.eq.s32.totalorder %s9, 0
    %p97 = por %p95, %p96
    %p98 = scmp.ne.s32.totalorder %s87, %s90
    %p99 = scmp.eq.s32.totalorder %s14, 1
    %p100 = por %p98, %p99
    %p101 = scmp.ne.s32.totalorder %s90, %s91
    %p102 = scmp.eq.s32.totalorder %s14, 0
    %p103 = por %p101, %p102
    %p104 = scmp.ne.s32.totalorder %s90, %s91
    %p105 = scmp.eq.s32.totalorder %s15, 1
    %p106 = por %p104, %p105
    %p108 = scmp.ne.s32.totalorder %s91, %s107
    %p109 = scmp.eq.s32.totalorder %s15, 0
    %p110 = por %p108, %p109
    %p111 = scmp.le.s32.totalorder 1, %s9
    %p112 = scmp.lt.s32.totalorder %s9, 3
    %p113 = pnand %p111, %p112
    %p114 = pneg %p113
    // Predicated region
    $region9: #{vqvae_hierarchical_forward.11} parent=5 // pred_check
      _
    $region10: #{vqvae_hierarchical_forward.11} parent=5 // pred_check_branch
      %116 = sbr.rel (%p113) target = $region12
    $region11: #{vqvae_hierarchical_forward.11} parent=5 // pred_region
      %s117 = ssub.s32 %s9, 1
      // Predicated region
      $region13: #{vqvae_hierarchical_forward.11} parent=11 // pred_check
        %p118 = pneg %p56
      $region14: #{vqvae_hierarchical_forward.11} parent=11 // pred_check_branch
        %120 = sbr.rel (%p118) target = $region16
      $region15: #{vqvae_hierarchical_forward.11} parent=11 // pred_region
        _
      $region16: #{vqvae_hierarchical_forward.11} parent=11 // pred_fallthru
        _
      // Predicated region
      $region17: #{vqvae_hierarchical_forward.11} parent=11 // pred_check
        %p121 = pneg %p77
      $region18: #{vqvae_hierarchical_forward.11} parent=11 // pred_check_branch
        %123 = sbr.rel (%p121) target = $region20
      $region19: #{vqvae_hierarchical_forward.11} parent=11 // pred_region
        _
      $region20: #{vqvae_hierarchical_forward.11} parent=11 // pred_fallthru
        _
    $region12: #{vqvae_hierarchical_forward.11} parent=5 // pred_fallthru
      _
    %p124 = scmp.lt.s32.totalorder %s9, 2
    // Predicated region
    $region21: #{vqvae_hierarchical_forward.11} parent=5 // pred_check
      %p125 = pneg %p124
    $region22: #{vqvae_hierarchical_forward.11} parent=5 // pred_check_branch
      %127 = sbr.rel (%p125) target = $region24
    $region23: #{vqvae_hierarchical_forward.11} parent=5 // pred_region
      // Predicated region
      $region25: #{vqvae_hierarchical_forward.11} parent=23 // pred_check
        %p128 = pneg %p29
      $region26: #{vqvae_hierarchical_forward.11} parent=23 // pred_check_branch
        %130 = sbr.rel (%p128) target = $region28
      $region27: #{vqvae_hierarchical_forward.11} parent=23 // pred_region
        %s131 = smul.u32 8, %s9
        %p132 = scmp.lt.s32.totalorder %s131, 15
        %s133 = scalar_select %p132, %s131, 15
        %s134 = smul.addr %s133, 3
        %s135 = smul.addr %s134, 4
        %s136 = scalar_lea.vmem %s0, %s135
        %s137 = smul.u32 8, %s9
      $region28: #{vqvae_hierarchical_forward.11} parent=23 // pred_fallthru
        _
    $region24: #{vqvae_hierarchical_forward.11} parent=5 // pred_fallthru
      _
    %p138 = scmp.le.s32.totalorder 1, %s9
    %p139 = scmp.lt.s32.totalorder %s9, 3
    %p140 = pnand %p138, %p139
    %p141 = pneg %p140
    // Predicated region
    $region29: #{vqvae_hierarchical_forward.11} parent=5 // pred_check
      _
    $region30: #{vqvae_hierarchical_forward.11} parent=5 // pred_check_branch
      %143 = sbr.rel (%p140) target = $region32
    $region31: #{vqvae_hierarchical_forward.11} parent=5 // pred_region
      %s144 = ssub.s32 %s9, 1
      %s145 = smul.u32 8, %s14
      %p146 = scmp.lt.s32.totalorder %s145, 15
      %s147 = scalar_select %p146, %s145, 15
      %s148 = smul.addr %s147, 3
      %s149 = smul.addr %s148, 4
      %s150 = scalar_lea.vmem %s0, %s149
      %p151 = pneg %p35
      %p152 = pneg %p32
      %p153 = pneg %p56
      %p154 = pneg %p53
      %p155 = pneg %p77
      %p156 = pneg %p74
      %p157 = pneg %p103
      %p158 = pneg %p100
      %s159 = smul.u32 8, %s14
      %p160 = scmp.lt.s32.totalorder %s159, 15
      %s161 = scalar_select %p160, %s159, 15
      %s162 = smul.addr %s161, 4
      %s163 = scalar_lea.vmem %s3, %s162
      %s164 = smul.u32 8, %s14
      %p165 = scmp.lt.s32.totalorder %s164, 15
      %s166 = scalar_select %p165, %s164, 15
      %s167 = smul.addr %s166, 3
      %s168 = smul.addr %s167, 4
      %s169 = scalar_lea.vmem %s0, %s168
      %s170 = smul.u32 8, %s14
      %s171 = smul.u32 8, %s14
      %p172 = scmp.lt.s32.totalorder %s171, 15
      %s173 = scalar_select %p172, %s171, 15
      %s174 = smul.addr %s173, 4
      %s175 = scalar_lea.vmem %s3, %s174
      %s176 = smul.u32 8, %s14
      %v177 = vld [vmem:[%s169] sm:$0xff]
      %v178 = vld [vmem:[%s169 + $0x8] sm:$0xf]
      %v179 = vld [vmem:[%s169 + $0xc] sm:$0xff]
      %v180 = vld [vmem:[%s169 + $0x14] sm:$0xf]
      %v181 = vld [vmem:[%s169 + $0x18] sm:$0xff]
      %v182 = vld [vmem:[%s169 + $0x20] sm:$0xf]
      %v183 = vld [vmem:[%s169 + $0x24] sm:$0xff]
      %v184 = vld [vmem:[%s169 + $0x2c] sm:$0xf]
      %v185 = vld [vmem:[%s169 + $0x30] sm:$0xff]
      %v186 = vld [vmem:[%s169 + $0x38] sm:$0xf]
      %v187 = vld [vmem:[%s169 + $0x3c] sm:$0xff]
      %v188 = vld [vmem:[%s169 + $0x44] sm:$0xf]
      %v189 = vld [vmem:[%s169 + $0x48] sm:$0xff]
      %v190 = vld [vmem:[%s169 + $0x50] sm:$0xf]
      %v191 = vld [vmem:[%s169 + $0x54] sm:$0xff]
      %v192 = vld [vmem:[%s169 + $0x5c] sm:$0xf]
      %v193 = vld [vmem:[%s1] sm:$0xf]
      %v194 = vld [vmem:[%s1 + $0x4] sm:$0xf]
      %v195 = vld [vmem:[%s1 + $0x8] sm:$0xf]
      %v196 = vld [vmem:[%s1 + $0xc] sm:$0xf]
      %v197 = vld [vmem:[%s1 + $0x10] sm:$0xf]
      %v198 = vld [vmem:[%s1 + $0x14] sm:$0xf]
      %v199 = vld [vmem:[%s1 + $0x18] sm:$0xf]
      %v200 = vld [vmem:[%s1 + $0x1c] sm:$0xf]
      %v201 = vld [vmem:[%s1 + $0x20] sm:$0xf]
      %v202 = vld [vmem:[%s1 + $0x24] sm:$0xf]
      %v203 = vld [vmem:[%s1 + $0x28] sm:$0xf]
      %v204 = vld [vmem:[%s1 + $0x2c] sm:$0xf]
      %v205 = vld [vmem:[%s1 + $0x30] sm:$0xf]
      %v206 = vld [vmem:[%s1 + $0x34] sm:$0xf]
      %v207 = vld [vmem:[%s1 + $0x38] sm:$0xf]
      %v208 = vld [vmem:[%s1 + $0x3c] sm:$0xf]
      %v209 = vld [vmem:[%s1 + $0x40] sm:$0xf]
      %v210 = vld [vmem:[%s1 + $0x44] sm:$0xf]
      %v211 = vld [vmem:[%s1 + $0x48] sm:$0xf]
      %v212 = vld [vmem:[%s1 + $0x4c] sm:$0xf]
      %v213 = vld [vmem:[%s1 + $0x50] sm:$0xf]
      %v214 = vld [vmem:[%s1 + $0x54] sm:$0xf]
      %v215 = vld [vmem:[%s1 + $0x58] sm:$0xf]
      %v216 = vld [vmem:[%s1 + $0x5c] sm:$0xf]
      %v217 = vld [vmem:[%s1 + $0x60] sm:$0xf]
      %v218 = vld [vmem:[%s1 + $0x64] sm:$0xf]
      %v219 = vld [vmem:[%s1 + $0x68] sm:$0xf]
      %v220 = vld [vmem:[%s1 + $0x6c] sm:$0xf]
      %v221 = vld [vmem:[%s1 + $0x70] sm:$0xf]
      %v222 = vld [vmem:[%s1 + $0x74] sm:$0xf]
      %v223 = vld [vmem:[%s1 + $0x78] sm:$0xf]
      %v224 = vld [vmem:[%s1 + $0x7c] sm:$0xf]
      %v225 = vld [vmem:[%s1 + $0x80] sm:$0xf]
      %v226 = vld [vmem:[%s1 + $0x84] sm:$0xf]
      %v227 = vld [vmem:[%s1 + $0x88] sm:$0xf]
      %v228 = vld [vmem:[%s1 + $0x8c] sm:$0xf]
      %v229 = vld [vmem:[%s1 + $0x90] sm:$0xf]
      %v230 = vld [vmem:[%s1 + $0x94] sm:$0xf]
      %v231 = vld [vmem:[%s1 + $0x98] sm:$0xf]
      %v232 = vld [vmem:[%s1 + $0x9c] sm:$0xf]
      %v233 = vld [vmem:[%s1 + $0xa0] sm:$0xf]
      %v234 = vld [vmem:[%s1 + $0xa4] sm:$0xf]
      %v235 = vld [vmem:[%s1 + $0xa8] sm:$0xf]
      %v236 = vld [vmem:[%s1 + $0xac] sm:$0xf]
      %v237 = vld [vmem:[%s1 + $0xb0] sm:$0xf]
      %v238 = vld [vmem:[%s1 + $0xb4] sm:$0xf]
      %v239 = vld [vmem:[%s1 + $0xb8] sm:$0xf]
      %v240 = vld [vmem:[%s1 + $0xbc] sm:$0xf]
      %v241 = vld [vmem:[%s2] sm:$0x1]
      %v243 = vperm.slane %v241, 0
      %v261 = vunpack.c.l.b16 %v177
      %v262 = vunpack.c.h.b16 %v177
      %v263 = vunpack.c.l.b16 %v178
      %v264 = vunpack.c.l.b16 %v179
      %v265 = vunpack.c.h.b16 %v179
      %v266 = vunpack.c.l.b16 %v180
      %v267 = vunpack.c.l.b16 %v181
      %v268 = vunpack.c.h.b16 %v181
      %v269 = vunpack.c.l.b16 %v182
      %v270 = vunpack.c.l.b16 %v183
      %v271 = vunpack.c.h.b16 %v183
      %v272 = vunpack.c.l.b16 %v184
      %v273 = vunpack.c.l.b16 %v185
      %v274 = vunpack.c.h.b16 %v185
      %v275 = vunpack.c.l.b16 %v186
      %v276 = vunpack.c.l.b16 %v187
      %v277 = vunpack.c.h.b16 %v187
      %v278 = vunpack.c.l.b16 %v188
      %v279 = vunpack.c.l.b16 %v189
      %v280 = vunpack.c.h.b16 %v189
      %v281 = vunpack.c.l.b16 %v190
      %v282 = vunpack.c.l.b16 %v191
      %v283 = vunpack.c.h.b16 %v191
      %v284 = vunpack.c.l.b16 %v192
      %v285 = vpack.c.b16 %v264, %v261
      %v286 = vpack.c.b16 %v265, %v262
      %v287 = vpack.c.b16 %v266, %v263
      %v288 = vpack.c.b16 %v270, %v267
      %v289 = vpack.c.b16 %v271, %v268
      %v290 = vpack.c.b16 %v272, %v269
      %v291 = vpack.c.b16 %v276, %v273
      %v292 = vpack.c.b16 %v277, %v274
      %v293 = vpack.c.b16 %v278, %v275
      %v294 = vpack.c.b16 %v282, %v279
      %v295 = vpack.c.b16 %v283, %v280
      %v296 = vpack.c.b16 %v284, %v281
      %v357 = vunpack.c.l.b16 %v193
      %v358 = vunpack.c.l.b16 %v194
      %v359 = vunpack.c.l.b16 %v195
      %v360 = vunpack.c.l.b16 %v196
      %v361 = vunpack.c.l.b16 %v197
      %v362 = vunpack.c.l.b16 %v198
      %v363 = vunpack.c.l.b16 %v199
      %v364 = vunpack.c.l.b16 %v200
      %v365 = vunpack.c.l.b16 %v201
      %v366 = vunpack.c.l.b16 %v202
      %v367 = vunpack.c.l.b16 %v203
      %v368 = vunpack.c.l.b16 %v204
      %v369 = vunpack.c.l.b16 %v205
      %v370 = vunpack.c.l.b16 %v206
      %v371 = vunpack.c.l.b16 %v207
      %v372 = vunpack.c.l.b16 %v208
      %v373 = vunpack.c.l.b16 %v209
      %v374 = vunpack.c.l.b16 %v210
      %v375 = vunpack.c.l.b16 %v211
      %v376 = vunpack.c.l.b16 %v212
      %v377 = vunpack.c.l.b16 %v213
      %v378 = vunpack.c.l.b16 %v214
      %v379 = vunpack.c.l.b16 %v215
      %v380 = vunpack.c.l.b16 %v216
      %v381 = vunpack.c.l.b16 %v217
      %v382 = vunpack.c.l.b16 %v218
      %v383 = vunpack.c.l.b16 %v219
      %v384 = vunpack.c.l.b16 %v220
      %v385 = vunpack.c.l.b16 %v221
      %v386 = vunpack.c.l.b16 %v222
      %v387 = vunpack.c.l.b16 %v223
      %v388 = vunpack.c.l.b16 %v224
      %v389 = vunpack.c.l.b16 %v225
      %v390 = vunpack.c.l.b16 %v226
      %v391 = vunpack.c.l.b16 %v227
      %v392 = vunpack.c.l.b16 %v228
      %v393 = vunpack.c.l.b16 %v229
      %v394 = vunpack.c.l.b16 %v230
      %v395 = vunpack.c.l.b16 %v231
      %v396 = vunpack.c.l.b16 %v232
      %v397 = vunpack.c.l.b16 %v233
      %v398 = vunpack.c.l.b16 %v234
      %v399 = vunpack.c.l.b16 %v235
      %v400 = vunpack.c.l.b16 %v236
      %v401 = vunpack.c.l.b16 %v237
      %v402 = vunpack.c.l.b16 %v238
      %v403 = vunpack.c.l.b16 %v239
      %v404 = vunpack.c.l.b16 %v240
      %v405 = vpack.c.b16 %v358, %v357
      %v406 = vpack.c.b16 %v360, %v359
      %v407 = vpack.c.b16 %v362, %v361
      %v408 = vpack.c.b16 %v364, %v363
      %v409 = vpack.c.b16 %v366, %v365
      %v410 = vpack.c.b16 %v368, %v367
      %v411 = vpack.c.b16 %v370, %v369
      %v412 = vpack.c.b16 %v372, %v371
      %v413 = vpack.c.b16 %v374, %v373
      %v414 = vpack.c.b16 %v376, %v375
      %v415 = vpack.c.b16 %v378, %v377
      %v416 = vpack.c.b16 %v380, %v379
      %v417 = vpack.c.b16 %v382, %v381
      %v418 = vpack.c.b16 %v384, %v383
      %v419 = vpack.c.b16 %v386, %v385
      %v420 = vpack.c.b16 %v388, %v387
      %v421 = vpack.c.b16 %v390, %v389
      %v422 = vpack.c.b16 %v392, %v391
      %v423 = vpack.c.b16 %v394, %v393
      %v424 = vpack.c.b16 %v396, %v395
      %v425 = vpack.c.b16 %v398, %v397
      %v426 = vpack.c.b16 %v400, %v399
      %v427 = vpack.c.b16 %v402, %v401
      %v428 = vpack.c.b16 %v404, %v403
      %453 = vmatpush.bf16.msra.mxu0 %v412
      %454 = vmatpush.bf16.msra.mxu0 %v411
      %455 = vmatpush.bf16.msra.mxu0 %v410
      %456 = vmatpush.bf16.msra.mxu0 %v409
      %457 = vmatpush.bf16.msra.mxu0 %v408
      %458 = vmatpush.bf16.msra.mxu0 %v407
      %459 = vmatpush.bf16.msra.mxu0 %v406
      %460 = vmatpush.bf16.msra.mxu0 %v405
      %461 = vmatmul.bf16.gmra.mxu0 %v285
      %v462 = vpop.f32.mrf.mxu0
      %v463 = vadd.f32 %v243, %v462
      %v464 = vpop.f32.mrf.mxu0
      %v465 = vadd.f32 %v243, %v464
      %466 = vmatmul.bf16.gmra.mxu0 %v288
      %v467 = vpop.f32.mrf.mxu0
      %v468 = vadd.f32 %v243, %v467
      %v469 = vpop.f32.mrf.mxu0
      %v470 = vadd.f32 %v243, %v469
      %471 = vmatmul.bf16.gmra.mxu0 %v291
      %v472 = vpop.f32.mrf.mxu0
      %v473 = vadd.f32 %v243, %v472
      %v474 = vpop.f32.mrf.mxu0
      %v475 = vadd.f32 %v243, %v474
      %476 = vmatmul.bf16.gmra.mxu0 %v294
      %v477 = vpop.f32.mrf.mxu0
      %v478 = vadd.f32 %v243, %v477
      %v479 = vpop.f32.mrf.mxu0
      %v480 = vadd.f32 %v243, %v479
      %481 = vdwg.mxu0
      %482 = vmatpush.bf16.msra.mxu0 %v420
      %483 = vmatpush.bf16.msra.mxu0 %v419
      %484 = vmatpush.bf16.msra.mxu0 %v418
      %485 = vmatpush.bf16.msra.mxu0 %v417
      %486 = vmatpush.bf16.msra.mxu0 %v416
      %487 = vmatpush.bf16.msra.mxu0 %v415
      %488 = vmatpush.bf16.msra.mxu0 %v414
      %489 = vmatpush.bf16.msra.mxu0 %v413
      %490 = vmatmul.bf16.gmra.mxu0 %v286
      %v491 = vpop.f32.mrf.mxu0
      %v492 = vadd.f32 %v463, %v491
      %v493 = vpop.f32.mrf.mxu0
      %v494 = vadd.f32 %v465, %v493
      %495 = vmatmul.bf16.gmra.mxu0 %v289
      %v496 = vpop.f32.mrf.mxu0
      %v497 = vadd.f32 %v468, %v496
      %v498 = vpop.f32.mrf.mxu0
      %v499 = vadd.f32 %v470, %v498
      %500 = vmatmul.bf16.gmra.mxu0 %v292
      %v501 = vpop.f32.mrf.mxu0
      %v502 = vadd.f32 %v473, %v501
      %v503 = vpop.f32.mrf.mxu0
      %v504 = vadd.f32 %v475, %v503
      %505 = vmatmul.bf16.gmra.mxu0 %v295
      %v506 = vpop.f32.mrf.mxu0
      %v507 = vadd.f32 %v478, %v506
      %v508 = vpop.f32.mrf.mxu0
      %v509 = vadd.f32 %v480, %v508
      %510 = vdwg.mxu0
      %511 = vmatpush.bf16.msra.mxu0 %v428
      %512 = vmatpush.bf16.msra.mxu0 %v427
      %513 = vmatpush.bf16.msra.mxu0 %v426
      %514 = vmatpush.bf16.msra.mxu0 %v425
      %515 = vmatpush.bf16.msra.mxu0 %v424
      %516 = vmatpush.bf16.msra.mxu0 %v423
      %517 = vmatpush.bf16.msra.mxu0 %v422
      %518 = vmatpush.bf16.msra.mxu0 %v421
      %519 = vmatmul.bf16.gmra.mxu0 %v287
      %v520 = vpop.f32.mrf.mxu0
      %v521 = vadd.f32 %v492, %v520
      %v522 = vpop.f32.mrf.mxu0
      %v523 = vadd.f32 %v494, %v522
      %524 = vmatmul.bf16.gmra.mxu0 %v290
      %v525 = vpop.f32.mrf.mxu0
      %v526 = vadd.f32 %v497, %v525
      %v527 = vpop.f32.mrf.mxu0
      %v528 = vadd.f32 %v499, %v527
      %529 = vmatmul.bf16.gmra.mxu0 %v293
      %v530 = vpop.f32.mrf.mxu0
      %v531 = vadd.f32 %v502, %v530
      %v532 = vpop.f32.mrf.mxu0
      %v533 = vadd.f32 %v504, %v532
      %534 = vmatmul.bf16.gmra.mxu0 %v296
      %v535 = vpop.f32.mrf.mxu0
      %v536 = vadd.f32 %v507, %v535
      %v537 = vpop.f32.mrf.mxu0
      %v538 = vadd.f32 %v509, %v537
      %539 = vdwg.mxu0
      %v540 = vpack.c.bf16 %v521, %v521
      %v541 = vpack.c.bf16 %v523, %v523
      %v542 = vpack.c.bf16 %v526, %v526
      %v543 = vpack.c.bf16 %v528, %v528
      %v544 = vpack.c.bf16 %v531, %v531
      %v545 = vpack.c.bf16 %v533, %v533
      %v546 = vpack.c.bf16 %v536, %v536
      %v547 = vpack.c.bf16 %v538, %v538
      %548 = vst [vmem:[%s175] sm:$0xf] %v540
      %549 = vst [vmem:[%s175 + $0x4] sm:$0xf] %v541
      %550 = vst [vmem:[%s175 + $0x8] sm:$0xf] %v542
      %551 = vst [vmem:[%s175 + $0xc] sm:$0xf] %v543
      %552 = vst [vmem:[%s175 + $0x10] sm:$0xf] %v544
      %553 = vst [vmem:[%s175 + $0x14] sm:$0xf] %v545
      %554 = vst [vmem:[%s175 + $0x18] sm:$0xf] %v546
      %555 = vst [vmem:[%s175 + $0x1c] sm:$0xf] %v547
      %s556 = smul.u32 8, %s14
      %p557 = scmp.lt.s32.totalorder %s556, 15
      %s558 = scalar_select %p557, %s556, 15
      %s559 = smul.addr %s558, 4
      %s560 = scalar_lea.vmem %s3, %s559
      // Predicated region
      $region33: #{vqvae_hierarchical_forward.11} parent=31 // pred_check
        %p561 = pneg %p100
      $region34: #{vqvae_hierarchical_forward.11} parent=31 // pred_check_branch
        %563 = sbr.rel (%p561) target = $region36
      $region35: #{vqvae_hierarchical_forward.11} parent=31 // pred_region
        %s564 = smul.u32 8, %s14
      $region36: #{vqvae_hierarchical_forward.11} parent=31 // pred_fallthru
        _
    $region32: #{vqvae_hierarchical_forward.11} parent=5 // pred_fallthru
      _
    %p565 = scmp.le.s32.totalorder 2, %s9
    // Predicated region
    $region37: #{vqvae_hierarchical_forward.11} parent=5 // pred_check
      %p566 = pneg %p565
    $region38: #{vqvae_hierarchical_forward.11} parent=5 // pred_check_branch
      %568 = sbr.rel (%p566) target = $region40
    $region39: #{vqvae_hierarchical_forward.11} parent=5 // pred_region
      %s569 = ssub.s32 %s9, 2
      // Predicated region
      $region41: #{vqvae_hierarchical_forward.11} parent=39 // pred_check
        %p570 = pneg %p106
      $region42: #{vqvae_hierarchical_forward.11} parent=39 // pred_check_branch
        %572 = sbr.rel (%p570) target = $region44
      $region43: #{vqvae_hierarchical_forward.11} parent=39 // pred_region
        %s573 = smul.u32 8, %s15
        %p574 = scmp.lt.s32.totalorder %s573, 15
        %s575 = scalar_select %p574, %s573, 15
        %s576 = smul.addr %s575, 4
        %s577 = scalar_lea.vmem %s3, %s576
      $region44: #{vqvae_hierarchical_forward.11} parent=39 // pred_fallthru
        _
    $region40: #{vqvae_hierarchical_forward.11} parent=5 // pred_fallthru
      _
  $region6: #{vqvae_hierarchical_forward.11} parent=0 // loop_footer
    %s13 = sadd.s32 1, %s9
  $region7: #{vqvae_hierarchical_forward.11} parent=0 // loop_footer_branch
    %8 = sbr.rel target = $region3
  $region8: #{vqvae_hierarchical_forward.11} parent=0 // loop_exit
    _

// kernel: vqvae_hierarchical_forward.12
$region0: #{vqvae_hierarchical_forward.12}
  #allocation0 [shape = 'u32[]', space=smem, size = 0x4, offset = 0x4, fixed_abs, tag = 'smem constant byte address 0x4 - core index']
  #allocation1 [shape = 'u32[72,128]{1,0:T(1,128)}', space=vmem, size = 0x9000, scoped, tag = 'internal scratch']
  %s0 = inlined_call_operand.vmem [shape: bf16[32,512], index: 0, kind: input, shape index: {}]
  %s1 = inlined_call_operand.vmem [shape: bf16[512,128], index: 1, kind: input, shape index: {}]
  %s2 = inlined_call_operand.vmem [shape: f32[1,128], index: 2, kind: input, shape index: {}]
  %s3 = inlined_call_operand.vmem [shape: bf16[32,128], index: 3, kind: output, shape index: {}]
  %s4 = sld [smem:[#allocation0]]
  $region45: #{vqvae_hierarchical_forward.12} parent=0
    _
  %s6 = ssub.s32 1, %s4
  %s7 = scalar_select 0, %s6, %s4
  loop: start=0, step=1, limit=4
  $region2: #{vqvae_hierarchical_forward.12} parent=0 // loop_pre_header
    _
  $region3: #{vqvae_hierarchical_forward.12} parent=0 // loop_header
    %s9 = sphi 0, %s13
    %p10 = scmp.ge.s32.totalorder %s9, 4
    %s19 = sphi 0, %s21
    %s22 = sphi 0, %s19
    %s23 = sphi 0, %s22
    %s39 = sphi 0, %s23
    %s43 = sphi 0, %s43
    %s45 = sphi 0, %s43
    %s46 = sphi 0, %s45
    %s60 = sphi 0, %s46
    %s64 = sphi 0, %s64
    %s66 = sphi 0, %s64
    %s67 = sphi 0, %s66
    %s81 = sphi 0, %s67
    %s87 = sphi 0, %s89
    %s90 = sphi 0, %s87
    %s91 = sphi 0, %s90
    %s107 = sphi 0, %s91
  $region4: #{vqvae_hierarchical_forward.12} parent=0 // loop_header_branch
    %12 = sbr.rel (%p10) target = $region8
  $region5: #{vqvae_hierarchical_forward.12} parent=0 // loop_body
    %s14 = ssub.s32 %s9, 1
    %s15 = ssub.s32 %s9, 2
    %s16 = sadd.s32 %s9, 1
    %s17 = ssub.s32 %s9, %s16
    %p18 = scmp.eq.s32.totalorder %s17, 0
    %s20 = sadd.s32 %s19, 1
    %s21 = scalar_select %p18, %s19, %s20
    %p24 = pneg %p18
    %p25 = scmp.eq.s32.totalorder %s9, 1
    %p26 = por %p24, %p25
    %p27 = scmp.ne.s32.totalorder %s19, %s22
    %p28 = scmp.eq.s32.totalorder %s9, 0
    %p29 = por %p27, %p28
    %p30 = scmp.ne.s32.totalorder %s19, %s22
    %p31 = scmp.eq.s32.totalorder %s14, 1
    %p32 = por %p30, %p31
    %p33 = scmp.ne.s32.totalorder %s22, %s23
    %p34 = scmp.eq.s32.totalorder %s14, 0
    %p35 = por %p33, %p34
    %p36 = scmp.ne.s32.totalorder %s22, %s23
    %p37 = scmp.eq.s32.totalorder %s15, 1
    %p38 = por %p36, %p37
    %p40 = scmp.ne.s32.totalorder %s23, %s39
    %p41 = scmp.eq.s32.totalorder %s15, 0
    %p42 = por %p40, %p41
    %s44 = sadd.s32 %s43, 1
    %p47 = scmp.eq.s32.totalorder %s9, 1
    %p48 = scmp.ne.s32.totalorder %s43, %s45
    %p49 = scmp.eq.s32.totalorder %s9, 0
    %p50 = por %p48, %p49
    %p51 = scmp.ne.s32.totalorder %s43, %s45
    %p52 = scmp.eq.s32.totalorder %s14, 1
    %p53 = por %p51, %p52
    %p54 = scmp.ne.s32.totalorder %s45, %s46
    %p55 = scmp.eq.s32.totalorder %s14, 0
    %p56 = por %p54, %p55
    %p57 = scmp.ne.s32.totalorder %s45, %s46
    %p58 = scmp.eq.s32.totalorder %s15, 1
    %p59 = por %p57, %p58
    %p61 = scmp.ne.s32.totalorder %s46, %s60
    %p62 = scmp.eq.s32.totalorder %s15, 0
    %p63 = por %p61, %p62
    %s65 = sadd.s32 %s64, 1
    %p68 = scmp.eq.s32.totalorder %s9, 1
    %p69 = scmp.ne.s32.totalorder %s64, %s66
    %p70 = scmp.eq.s32.totalorder %s9, 0
    %p71 = por %p69, %p70
    %p72 = scmp.ne.s32.totalorder %s64, %s66
    %p73 = scmp.eq.s32.totalorder %s14, 1
    %p74 = por %p72, %p73
    %p75 = scmp.ne.s32.totalorder %s66, %s67
    %p76 = scmp.eq.s32.totalorder %s14, 0
    %p77 = por %p75, %p76
    %p78 = scmp.ne.s32.totalorder %s66, %s67
    %p79 = scmp.eq.s32.totalorder %s15, 1
    %p80 = por %p78, %p79
    %p82 = scmp.ne.s32.totalorder %s67, %s81
    %p83 = scmp.eq.s32.totalorder %s15, 0
    %p84 = por %p82, %p83
    %s85 = ssub.s32 %s9, %s16
    %p86 = scmp.eq.s32.totalorder %s85, 0
    %s88 = sadd.s32 %s87, 1
    %s89 = scalar_select %p86, %s87, %s88
    %p92 = pneg %p86
    %p93 = scmp.eq.s32.totalorder %s9, 1
    %p94 = por %p92, %p93
    %p95 = scmp.ne.s32.totalorder %s87, %s90
    %p96 = scmp.eq.s32.totalorder %s9, 0
    %p97 = por %p95, %p96
    %p98 = scmp.ne.s32.totalorder %s87, %s90
    %p99 = scmp.eq.s32.totalorder %s14, 1
    %p100 = por %p98, %p99
    %p101 = scmp.ne.s32.totalorder %s90, %s91
    %p102 = scmp.eq.s32.totalorder %s14, 0
    %p103 = por %p101, %p102
    %p104 = scmp.ne.s32.totalorder %s90, %s91
    %p105 = scmp.eq.s32.totalorder %s15, 1
    %p106 = por %p104, %p105
    %p108 = scmp.ne.s32.totalorder %s91, %s107
    %p109 = scmp.eq.s32.totalorder %s15, 0
    %p110 = por %p108, %p109
    %p111 = scmp.le.s32.totalorder 1, %s9
    %p112 = scmp.lt.s32.totalorder %s9, 3
    %p113 = pnand %p111, %p112
    %p114 = pneg %p113
    // Predicated region
    $region9: #{vqvae_hierarchical_forward.12} parent=5 // pred_check
      _
    $region10: #{vqvae_hierarchical_forward.12} parent=5 // pred_check_branch
      %116 = sbr.rel (%p113) target = $region12
    $region11: #{vqvae_hierarchical_forward.12} parent=5 // pred_region
      %s117 = ssub.s32 %s9, 1
      // Predicated region
      $region13: #{vqvae_hierarchical_forward.12} parent=11 // pred_check
        %p118 = pneg %p56
      $region14: #{vqvae_hierarchical_forward.12} parent=11 // pred_check_branch
        %120 = sbr.rel (%p118) target = $region16
      $region15: #{vqvae_hierarchical_forward.12} parent=11 // pred_region
        _
      $region16: #{vqvae_hierarchical_forward.12} parent=11 // pred_fallthru
        _
      // Predicated region
      $region17: #{vqvae_hierarchical_forward.12} parent=11 // pred_check
        %p121 = pneg %p77
      $region18: #{vqvae_hierarchical_forward.12} parent=11 // pred_check_branch
        %123 = sbr.rel (%p121) target = $region20
      $region19: #{vqvae_hierarchical_forward.12} parent=11 // pred_region
        _
      $region20: #{vqvae_hierarchical_forward.12} parent=11 // pred_fallthru
        _
    $region12: #{vqvae_hierarchical_forward.12} parent=5 // pred_fallthru
      _
    %p124 = scmp.lt.s32.totalorder %s9, 2
    // Predicated region
    $region21: #{vqvae_hierarchical_forward.12} parent=5 // pred_check
      %p125 = pneg %p124
    $region22: #{vqvae_hierarchical_forward.12} parent=5 // pred_check_branch
      %127 = sbr.rel (%p125) target = $region24
    $region23: #{vqvae_hierarchical_forward.12} parent=5 // pred_region
      // Predicated region
      $region25: #{vqvae_hierarchical_forward.12} parent=23 // pred_check
        %p128 = pneg %p29
      $region26: #{vqvae_hierarchical_forward.12} parent=23 // pred_check_branch
        %130 = sbr.rel (%p128) target = $region28
      $region27: #{vqvae_hierarchical_forward.12} parent=23 // pred_region
        %s131 = smul.u32 2, %s9
        %p132 = scmp.lt.s32.totalorder %s131, 3
        %s133 = scalar_select %p132, %s131, 3
        %s134 = smul.addr %s133, 4
        %s135 = smul.addr %s134, 4
        %s136 = scalar_lea.vmem %s0, %s135
        %s137 = smul.u32 2, %s9
      $region28: #{vqvae_hierarchical_forward.12} parent=23 // pred_fallthru
        _
    $region24: #{vqvae_hierarchical_forward.12} parent=5 // pred_fallthru
      _
    %p138 = scmp.le.s32.totalorder 1, %s9
    %p139 = scmp.lt.s32.totalorder %s9, 3
    %p140 = pnand %p138, %p139
    %p141 = pneg %p140
    // Predicated region
    $region29: #{vqvae_hierarchical_forward.12} parent=5 // pred_check
      _
    $region30: #{vqvae_hierarchical_forward.12} parent=5 // pred_check_branch
      %143 = sbr.rel (%p140) target = $region32
    $region31: #{vqvae_hierarchical_forward.12} parent=5 // pred_region
      %s144 = ssub.s32 %s9, 1
      %s145 = smul.u32 2, %s14
      %p146 = scmp.lt.s32.totalorder %s145, 3
      %s147 = scalar_select %p146, %s145, 3
      %s148 = smul.addr %s147, 4
      %s149 = smul.addr %s148, 4
      %s150 = scalar_lea.vmem %s0, %s149
      %p151 = pneg %p35
      %p152 = pneg %p32
      %p153 = pneg %p56
      %p154 = pneg %p53
      %p155 = pneg %p77
      %p156 = pneg %p74
      %p157 = pneg %p103
      %p158 = pneg %p100
      %s159 = smul.u32 2, %s14
      %p160 = scmp.lt.s32.totalorder %s159, 3
      %s161 = scalar_select %p160, %s159, 3
      %s162 = smul.addr %s161, 4
      %s163 = scalar_lea.vmem %s3, %s162
      %s164 = smul.u32 2, %s14
      %p165 = scmp.lt.s32.totalorder %s164, 3
      %s166 = scalar_select %p165, %s164, 3
      %s167 = smul.addr %s166, 4
      %s168 = smul.addr %s167, 4
      %s169 = scalar_lea.vmem %s0, %s168
      %s170 = smul.u32 2, %s14
      %s171 = smul.u32 2, %s14
      %p172 = scmp.lt.s32.totalorder %s171, 3
      %s173 = scalar_select %p172, %s171, 3
      %s174 = smul.addr %s173, 4
      %s175 = scalar_lea.vmem %s3, %s174
      %s176 = smul.u32 2, %s14
      %v177 = vld [vmem:[%s169] sm:$0xff]
      %v178 = vld [vmem:[%s169 + $0x8] sm:$0xff]
      %v179 = vld [vmem:[%s169 + $0x10] sm:$0xff]
      %v180 = vld [vmem:[%s169 + $0x18] sm:$0xff]
      %v181 = vld [vmem:[%s1] sm:$0xf]
      %v182 = vld [vmem:[%s1 + $0x4] sm:$0xf]
      %v183 = vld [vmem:[%s1 + $0x8] sm:$0xf]
      %v184 = vld [vmem:[%s1 + $0xc] sm:$0xf]
      %v185 = vld [vmem:[%s1 + $0x10] sm:$0xf]
      %v186 = vld [vmem:[%s1 + $0x14] sm:$0xf]
      %v187 = vld [vmem:[%s1 + $0x18] sm:$0xf]
      %v188 = vld [vmem:[%s1 + $0x1c] sm:$0xf]
      %v189 = vld [vmem:[%s1 + $0x20] sm:$0xf]
      %v190 = vld [vmem:[%s1 + $0x24] sm:$0xf]
      %v191 = vld [vmem:[%s1 + $0x28] sm:$0xf]
      %v192 = vld [vmem:[%s1 + $0x2c] sm:$0xf]
      %v193 = vld [vmem:[%s1 + $0x30] sm:$0xf]
      %v194 = vld [vmem:[%s1 + $0x34] sm:$0xf]
      %v195 = vld [vmem:[%s1 + $0x38] sm:$0xf]
      %v196 = vld [vmem:[%s1 + $0x3c] sm:$0xf]
      %v197 = vld [vmem:[%s1 + $0x40] sm:$0xf]
      %v198 = vld [vmem:[%s1 + $0x44] sm:$0xf]
      %v199 = vld [vmem:[%s1 + $0x48] sm:$0xf]
      %v200 = vld [vmem:[%s1 + $0x4c] sm:$0xf]
      %v201 = vld [vmem:[%s1 + $0x50] sm:$0xf]
      %v202 = vld [vmem:[%s1 + $0x54] sm:$0xf]
      %v203 = vld [vmem:[%s1 + $0x58] sm:$0xf]
      %v204 = vld [vmem:[%s1 + $0x5c] sm:$0xf]
      %v205 = vld [vmem:[%s1 + $0x60] sm:$0xf]
      %v206 = vld [vmem:[%s1 + $0x64] sm:$0xf]
      %v207 = vld [vmem:[%s1 + $0x68] sm:$0xf]
      %v208 = vld [vmem:[%s1 + $0x6c] sm:$0xf]
      %v209 = vld [vmem:[%s1 + $0x70] sm:$0xf]
      %v210 = vld [vmem:[%s1 + $0x74] sm:$0xf]
      %v211 = vld [vmem:[%s1 + $0x78] sm:$0xf]
      %v212 = vld [vmem:[%s1 + $0x7c] sm:$0xf]
      %v213 = vld [vmem:[%s1 + $0x80] sm:$0xf]
      %v214 = vld [vmem:[%s1 + $0x84] sm:$0xf]
      %v215 = vld [vmem:[%s1 + $0x88] sm:$0xf]
      %v216 = vld [vmem:[%s1 + $0x8c] sm:$0xf]
      %v217 = vld [vmem:[%s1 + $0x90] sm:$0xf]
      %v218 = vld [vmem:[%s1 + $0x94] sm:$0xf]
      %v219 = vld [vmem:[%s1 + $0x98] sm:$0xf]
      %v220 = vld [vmem:[%s1 + $0x9c] sm:$0xf]
      %v221 = vld [vmem:[%s1 + $0xa0] sm:$0xf]
      %v222 = vld [vmem:[%s1 + $0xa4] sm:$0xf]
      %v223 = vld [vmem:[%s1 + $0xa8] sm:$0xf]
      %v224 = vld [vmem:[%s1 + $0xac] sm:$0xf]
      %v225 = vld [vmem:[%s1 + $0xb0] sm:$0xf]
      %v226 = vld [vmem:[%s1 + $0xb4] sm:$0xf]
      %v227 = vld [vmem:[%s1 + $0xb8] sm:$0xf]
      %v228 = vld [vmem:[%s1 + $0xbc] sm:$0xf]
      %v229 = vld [vmem:[%s1 + $0xc0] sm:$0xf]
      %v230 = vld [vmem:[%s1 + $0xc4] sm:$0xf]
      %v231 = vld [vmem:[%s1 + $0xc8] sm:$0xf]
      %v232 = vld [vmem:[%s1 + $0xcc] sm:$0xf]
      %v233 = vld [vmem:[%s1 + $0xd0] sm:$0xf]
      %v234 = vld [vmem:[%s1 + $0xd4] sm:$0xf]
      %v235 = vld [vmem:[%s1 + $0xd8] sm:$0xf]
      %v236 = vld [vmem:[%s1 + $0xdc] sm:$0xf]
      %v237 = vld [vmem:[%s1 + $0xe0] sm:$0xf]
      %v238 = vld [vmem:[%s1 + $0xe4] sm:$0xf]
      %v239 = vld [vmem:[%s1 + $0xe8] sm:$0xf]
      %v240 = vld [vmem:[%s1 + $0xec] sm:$0xf]
      %v241 = vld [vmem:[%s1 + $0xf0] sm:$0xf]
      %v242 = vld [vmem:[%s1 + $0xf4] sm:$0xf]
      %v243 = vld [vmem:[%s1 + $0xf8] sm:$0xf]
      %v244 = vld [vmem:[%s1 + $0xfc] sm:$0xf]
      %v245 = vld [vmem:[%s2] sm:$0x1]
      %v247 = vperm.slane %v245, 0
      %v253 = vunpack.c.l.b16 %v177
      %v254 = vunpack.c.h.b16 %v177
      %v255 = vunpack.c.l.b16 %v178
      %v256 = vunpack.c.h.b16 %v178
      %v257 = vunpack.c.l.b16 %v179
      %v258 = vunpack.c.h.b16 %v179
      %v259 = vunpack.c.l.b16 %v180
      %v260 = vunpack.c.h.b16 %v180
      %v261 = vpack.c.b16 %v257, %v253
      %v262 = vpack.c.b16 %v258, %v254
      %v263 = vpack.c.b16 %v259, %v255
      %v264 = vpack.c.b16 %v260, %v256
      %v333 = vunpack.c.l.b16 %v181
      %v334 = vunpack.c.l.b16 %v182
      %v335 = vunpack.c.l.b16 %v183
      %v336 = vunpack.c.l.b16 %v184
      %v337 = vunpack.c.l.b16 %v185
      %v338 = vunpack.c.l.b16 %v186
      %v339 = vunpack.c.l.b16 %v187
      %v340 = vunpack.c.l.b16 %v188
      %v341 = vunpack.c.l.b16 %v189
      %v342 = vunpack.c.l.b16 %v190
      %v343 = vunpack.c.l.b16 %v191
      %v344 = vunpack.c.l.b16 %v192
      %v345 = vunpack.c.l.b16 %v193
      %v346 = vunpack.c.l.b16 %v194
      %v347 = vunpack.c.l.b16 %v195
      %v348 = vunpack.c.l.b16 %v196
      %v349 = vunpack.c.l.b16 %v197
      %v350 = vunpack.c.l.b16 %v198
      %v351 = vunpack.c.l.b16 %v199
      %v352 = vunpack.c.l.b16 %v200
      %v353 = vunpack.c.l.b16 %v201
      %v354 = vunpack.c.l.b16 %v202
      %v355 = vunpack.c.l.b16 %v203
      %v356 = vunpack.c.l.b16 %v204
      %v357 = vunpack.c.l.b16 %v205
      %v358 = vunpack.c.l.b16 %v206
      %v359 = vunpack.c.l.b16 %v207
      %v360 = vunpack.c.l.b16 %v208
      %v361 = vunpack.c.l.b16 %v209
      %v362 = vunpack.c.l.b16 %v210
      %v363 = vunpack.c.l.b16 %v211
      %v364 = vunpack.c.l.b16 %v212
      %v365 = vunpack.c.l.b16 %v213
      %v366 = vunpack.c.l.b16 %v214
      %v367 = vunpack.c.l.b16 %v215
      %v368 = vunpack.c.l.b16 %v216
      %v369 = vunpack.c.l.b16 %v217
      %v370 = vunpack.c.l.b16 %v218
      %v371 = vunpack.c.l.b16 %v219
      %v372 = vunpack.c.l.b16 %v220
      %v373 = vunpack.c.l.b16 %v221
      %v374 = vunpack.c.l.b16 %v222
      %v375 = vunpack.c.l.b16 %v223
      %v376 = vunpack.c.l.b16 %v224
      %v377 = vunpack.c.l.b16 %v225
      %v378 = vunpack.c.l.b16 %v226
      %v379 = vunpack.c.l.b16 %v227
      %v380 = vunpack.c.l.b16 %v228
      %v381 = vunpack.c.l.b16 %v229
      %v382 = vunpack.c.l.b16 %v230
      %v383 = vunpack.c.l.b16 %v231
      %v384 = vunpack.c.l.b16 %v232
      %v385 = vunpack.c.l.b16 %v233
      %v386 = vunpack.c.l.b16 %v234
      %v387 = vunpack.c.l.b16 %v235
      %v388 = vunpack.c.l.b16 %v236
      %v389 = vunpack.c.l.b16 %v237
      %v390 = vunpack.c.l.b16 %v238
      %v391 = vunpack.c.l.b16 %v239
      %v392 = vunpack.c.l.b16 %v240
      %v393 = vunpack.c.l.b16 %v241
      %v394 = vunpack.c.l.b16 %v242
      %v395 = vunpack.c.l.b16 %v243
      %v396 = vunpack.c.l.b16 %v244
      %v397 = vpack.c.b16 %v334, %v333
      %v398 = vpack.c.b16 %v336, %v335
      %v399 = vpack.c.b16 %v338, %v337
      %v400 = vpack.c.b16 %v340, %v339
      %v401 = vpack.c.b16 %v342, %v341
      %v402 = vpack.c.b16 %v344, %v343
      %v403 = vpack.c.b16 %v346, %v345
      %v404 = vpack.c.b16 %v348, %v347
      %v405 = vpack.c.b16 %v350, %v349
      %v406 = vpack.c.b16 %v352, %v351
      %v407 = vpack.c.b16 %v354, %v353
      %v408 = vpack.c.b16 %v356, %v355
      %v409 = vpack.c.b16 %v358, %v357
      %v410 = vpack.c.b16 %v360, %v359
      %v411 = vpack.c.b16 %v362, %v361
      %v412 = vpack.c.b16 %v364, %v363
      %v413 = vpack.c.b16 %v366, %v365
      %v414 = vpack.c.b16 %v368, %v367
      %v415 = vpack.c.b16 %v370, %v369
      %v416 = vpack.c.b16 %v372, %v371
      %v417 = vpack.c.b16 %v374, %v373
      %v418 = vpack.c.b16 %v376, %v375
      %v419 = vpack.c.b16 %v378, %v377
      %v420 = vpack.c.b16 %v380, %v379
      %v421 = vpack.c.b16 %v382, %v381
      %v422 = vpack.c.b16 %v384, %v383
      %v423 = vpack.c.b16 %v386, %v385
      %v424 = vpack.c.b16 %v388, %v387
      %v425 = vpack.c.b16 %v390, %v389
      %v426 = vpack.c.b16 %v392, %v391
      %v427 = vpack.c.b16 %v394, %v393
      %v428 = vpack.c.b16 %v396, %v395
      %461 = vmatpush.bf16.msra.mxu0 %v404
      %462 = vmatpush.bf16.msra.mxu0 %v403
      %463 = vmatpush.bf16.msra.mxu0 %v402
      %464 = vmatpush.bf16.msra.mxu0 %v401
      %465 = vmatpush.bf16.msra.mxu0 %v400
      %466 = vmatpush.bf16.msra.mxu0 %v399
      %467 = vmatpush.bf16.msra.mxu0 %v398
      %468 = vmatpush.bf16.msra.mxu0 %v397
      %469 = vmatmul.bf16.gmra.mxu0 %v261
      %v470 = vpop.f32.mrf.mxu0
      %v471 = vadd.f32 %v247, %v470
      %v472 = vpop.f32.mrf.mxu0
      %v473 = vadd.f32 %v247, %v472
      %474 = vdwg.mxu0
      %475 = vmatpush.bf16.msra.mxu0 %v412
      %476 = vmatpush.bf16.msra.mxu0 %v411
      %477 = vmatpush.bf16.msra.mxu0 %v410
      %478 = vmatpush.bf16.msra.mxu0 %v409
      %479 = vmatpush.bf16.msra.mxu0 %v408
      %480 = vmatpush.bf16.msra.mxu0 %v407
      %481 = vmatpush.bf16.msra.mxu0 %v406
      %482 = vmatpush.bf16.msra.mxu0 %v405
      %483 = vmatmul.bf16.gmra.mxu0 %v262
      %v484 = vpop.f32.mrf.mxu0
      %v485 = vadd.f32 %v471, %v484
      %v486 = vpop.f32.mrf.mxu0
      %v487 = vadd.f32 %v473, %v486
      %488 = vdwg.mxu0
      %489 = vmatpush.bf16.msra.mxu0 %v420
      %490 = vmatpush.bf16.msra.mxu0 %v419
      %491 = vmatpush.bf16.msra.mxu0 %v418
      %492 = vmatpush.bf16.msra.mxu0 %v417
      %493 = vmatpush.bf16.msra.mxu0 %v416
      %494 = vmatpush.bf16.msra.mxu0 %v415
      %495 = vmatpush.bf16.msra.mxu0 %v414
      %496 = vmatpush.bf16.msra.mxu0 %v413
      %497 = vmatmul.bf16.gmra.mxu0 %v263
      %v498 = vpop.f32.mrf.mxu0
      %v499 = vadd.f32 %v485, %v498
      %v500 = vpop.f32.mrf.mxu0
      %v501 = vadd.f32 %v487, %v500
      %502 = vdwg.mxu0
      %503 = vmatpush.bf16.msra.mxu0 %v428
      %504 = vmatpush.bf16.msra.mxu0 %v427
      %505 = vmatpush.bf16.msra.mxu0 %v426
      %506 = vmatpush.bf16.msra.mxu0 %v425
      %507 = vmatpush.bf16.msra.mxu0 %v424
      %508 = vmatpush.bf16.msra.mxu0 %v423
      %509 = vmatpush.bf16.msra.mxu0 %v422
      %510 = vmatpush.bf16.msra.mxu0 %v421
      %511 = vmatmul.bf16.gmra.mxu0 %v264
      %v512 = vpop.f32.mrf.mxu0
      %v513 = vadd.f32 %v499, %v512
      %v514 = vpop.f32.mrf.mxu0
      %v515 = vadd.f32 %v501, %v514
      %516 = vdwg.mxu0
      %v517 = vmax.f32 %v513, 0.0
      %v518 = vmax.f32 %v515, 0.0
      %v519 = vpack.c.bf16 %v517, %v517
      %v520 = vpack.c.bf16 %v518, %v518
      %521 = vst [vmem:[%s175] sm:$0xf] %v519
      %522 = vst [vmem:[%s175 + $0x4] sm:$0xf] %v520
      %s523 = smul.u32 2, %s14
      %p524 = scmp.lt.s32.totalorder %s523, 3
      %s525 = scalar_select %p524, %s523, 3
      %s526 = smul.addr %s525, 4
      %s527 = scalar_lea.vmem %s3, %s526
      // Predicated region
      $region33: #{vqvae_hierarchical_forward.12} parent=31 // pred_check
        %p528 = pneg %p100
      $region34: #{vqvae_hierarchical_forward.12} parent=31 // pred_check_branch
        %530 = sbr.rel (%p528) target = $region36
      $region35: #{vqvae_hierarchical_forward.12} parent=31 // pred_region
        %s531 = smul.u32 2, %s14
      $region36: #{vqvae_hierarchical_forward.12} parent=31 // pred_fallthru
        _
    $region32: #{vqvae_hierarchical_forward.12} parent=5 // pred_fallthru
      _
    %p532 = scmp.le.s32.totalorder 2, %s9
    // Predicated region
    $region37: #{vqvae_hierarchical_forward.12} parent=5 // pred_check
      %p533 = pneg %p532
    $region38: #{vqvae_hierarchical_forward.12} parent=5 // pred_check_branch
      %535 = sbr.rel (%p533) target = $region40
    $region39: #{vqvae_hierarchical_forward.12} parent=5 // pred_region
      %s536 = ssub.s32 %s9, 2
      // Predicated region
      $region41: #{vqvae_hierarchical_forward.12} parent=39 // pred_check
        %p537 = pneg %p106
      $region42: #{vqvae_hierarchical_forward.12} parent=39 // pred_check_branch
        %539 = sbr.rel (%p537) target = $region44
      $region43: #{vqvae_hierarchical_forward.12} parent=39 // pred_region
        %s540 = smul.u32 2, %s15
        %p541 = scmp.lt.s32.totalorder %s540, 3
        %s542 = scalar_select %p541, %s540, 3
        %s543 = smul.addr %s542, 4
        %s544 = scalar_lea.vmem %s3, %s543
      $region44: #{vqvae_hierarchical_forward.12} parent=39 // pred_fallthru
        _
    $region40: #{vqvae_hierarchical_forward.12} parent=5 // pred_fallthru
      _
  $region6: #{vqvae_hierarchical_forward.12} parent=0 // loop_footer
    %s13 = sadd.s32 1, %s9
  $region7: #{vqvae_hierarchical_forward.12} parent=0 // loop_footer_branch
    %8 = sbr.rel target = $region3
  $region8: #{vqvae_hierarchical_forward.12} parent=0 // loop_exit
    _

// kernel: vqvae_hierarchical_forward.13
$region0: #{vqvae_hierarchical_forward.13}
  #allocation0 [shape = 'u32[]', space=smem, size = 0x4, offset = 0x4, fixed_abs, tag = 'smem constant byte address 0x4 - core index']
  #allocation1 [shape = 'u32[72,128]{1,0:T(1,128)}', space=vmem, size = 0x9000, scoped, tag = 'internal scratch']
  %s0 = inlined_call_operand.vmem [shape: bf16[32,384], index: 0, kind: input, shape index: {}]
  %s1 = inlined_call_operand.vmem [shape: bf16[384,128], index: 1, kind: input, shape index: {}]
  %s2 = inlined_call_operand.vmem [shape: f32[1,128], index: 2, kind: input, shape index: {}]
  %s3 = inlined_call_operand.vmem [shape: f32[32,128], index: 3, kind: output, shape index: {}]
  %s4 = sld [smem:[#allocation0]]
  $region45: #{vqvae_hierarchical_forward.13} parent=0
    _
  %s6 = ssub.s32 1, %s4
  %s7 = scalar_select 0, %s6, %s4
  loop: start=0, step=1, limit=4
  $region2: #{vqvae_hierarchical_forward.13} parent=0 // loop_pre_header
    _
  $region3: #{vqvae_hierarchical_forward.13} parent=0 // loop_header
    %s9 = sphi 0, %s13
    %p10 = scmp.ge.s32.totalorder %s9, 4
    %s19 = sphi 0, %s21
    %s22 = sphi 0, %s19
    %s23 = sphi 0, %s22
    %s39 = sphi 0, %s23
    %s43 = sphi 0, %s43
    %s45 = sphi 0, %s43
    %s46 = sphi 0, %s45
    %s60 = sphi 0, %s46
    %s64 = sphi 0, %s64
    %s66 = sphi 0, %s64
    %s67 = sphi 0, %s66
    %s81 = sphi 0, %s67
    %s87 = sphi 0, %s89
    %s90 = sphi 0, %s87
    %s91 = sphi 0, %s90
    %s107 = sphi 0, %s91
  $region4: #{vqvae_hierarchical_forward.13} parent=0 // loop_header_branch
    %12 = sbr.rel (%p10) target = $region8
  $region5: #{vqvae_hierarchical_forward.13} parent=0 // loop_body
    %s14 = ssub.s32 %s9, 1
    %s15 = ssub.s32 %s9, 2
    %s16 = sadd.s32 %s9, 1
    %s17 = ssub.s32 %s9, %s16
    %p18 = scmp.eq.s32.totalorder %s17, 0
    %s20 = sadd.s32 %s19, 1
    %s21 = scalar_select %p18, %s19, %s20
    %p24 = pneg %p18
    %p25 = scmp.eq.s32.totalorder %s9, 1
    %p26 = por %p24, %p25
    %p27 = scmp.ne.s32.totalorder %s19, %s22
    %p28 = scmp.eq.s32.totalorder %s9, 0
    %p29 = por %p27, %p28
    %p30 = scmp.ne.s32.totalorder %s19, %s22
    %p31 = scmp.eq.s32.totalorder %s14, 1
    %p32 = por %p30, %p31
    %p33 = scmp.ne.s32.totalorder %s22, %s23
    %p34 = scmp.eq.s32.totalorder %s14, 0
    %p35 = por %p33, %p34
    %p36 = scmp.ne.s32.totalorder %s22, %s23
    %p37 = scmp.eq.s32.totalorder %s15, 1
    %p38 = por %p36, %p37
    %p40 = scmp.ne.s32.totalorder %s23, %s39
    %p41 = scmp.eq.s32.totalorder %s15, 0
    %p42 = por %p40, %p41
    %s44 = sadd.s32 %s43, 1
    %p47 = scmp.eq.s32.totalorder %s9, 1
    %p48 = scmp.ne.s32.totalorder %s43, %s45
    %p49 = scmp.eq.s32.totalorder %s9, 0
    %p50 = por %p48, %p49
    %p51 = scmp.ne.s32.totalorder %s43, %s45
    %p52 = scmp.eq.s32.totalorder %s14, 1
    %p53 = por %p51, %p52
    %p54 = scmp.ne.s32.totalorder %s45, %s46
    %p55 = scmp.eq.s32.totalorder %s14, 0
    %p56 = por %p54, %p55
    %p57 = scmp.ne.s32.totalorder %s45, %s46
    %p58 = scmp.eq.s32.totalorder %s15, 1
    %p59 = por %p57, %p58
    %p61 = scmp.ne.s32.totalorder %s46, %s60
    %p62 = scmp.eq.s32.totalorder %s15, 0
    %p63 = por %p61, %p62
    %s65 = sadd.s32 %s64, 1
    %p68 = scmp.eq.s32.totalorder %s9, 1
    %p69 = scmp.ne.s32.totalorder %s64, %s66
    %p70 = scmp.eq.s32.totalorder %s9, 0
    %p71 = por %p69, %p70
    %p72 = scmp.ne.s32.totalorder %s64, %s66
    %p73 = scmp.eq.s32.totalorder %s14, 1
    %p74 = por %p72, %p73
    %p75 = scmp.ne.s32.totalorder %s66, %s67
    %p76 = scmp.eq.s32.totalorder %s14, 0
    %p77 = por %p75, %p76
    %p78 = scmp.ne.s32.totalorder %s66, %s67
    %p79 = scmp.eq.s32.totalorder %s15, 1
    %p80 = por %p78, %p79
    %p82 = scmp.ne.s32.totalorder %s67, %s81
    %p83 = scmp.eq.s32.totalorder %s15, 0
    %p84 = por %p82, %p83
    %s85 = ssub.s32 %s9, %s16
    %p86 = scmp.eq.s32.totalorder %s85, 0
    %s88 = sadd.s32 %s87, 1
    %s89 = scalar_select %p86, %s87, %s88
    %p92 = pneg %p86
    %p93 = scmp.eq.s32.totalorder %s9, 1
    %p94 = por %p92, %p93
    %p95 = scmp.ne.s32.totalorder %s87, %s90
    %p96 = scmp.eq.s32.totalorder %s9, 0
    %p97 = por %p95, %p96
    %p98 = scmp.ne.s32.totalorder %s87, %s90
    %p99 = scmp.eq.s32.totalorder %s14, 1
    %p100 = por %p98, %p99
    %p101 = scmp.ne.s32.totalorder %s90, %s91
    %p102 = scmp.eq.s32.totalorder %s14, 0
    %p103 = por %p101, %p102
    %p104 = scmp.ne.s32.totalorder %s90, %s91
    %p105 = scmp.eq.s32.totalorder %s15, 1
    %p106 = por %p104, %p105
    %p108 = scmp.ne.s32.totalorder %s91, %s107
    %p109 = scmp.eq.s32.totalorder %s15, 0
    %p110 = por %p108, %p109
    %p111 = scmp.le.s32.totalorder 1, %s9
    %p112 = scmp.lt.s32.totalorder %s9, 3
    %p113 = pnand %p111, %p112
    %p114 = pneg %p113
    // Predicated region
    $region9: #{vqvae_hierarchical_forward.13} parent=5 // pred_check
      _
    $region10: #{vqvae_hierarchical_forward.13} parent=5 // pred_check_branch
      %116 = sbr.rel (%p113) target = $region12
    $region11: #{vqvae_hierarchical_forward.13} parent=5 // pred_region
      %s117 = ssub.s32 %s9, 1
      // Predicated region
      $region13: #{vqvae_hierarchical_forward.13} parent=11 // pred_check
        %p118 = pneg %p56
      $region14: #{vqvae_hierarchical_forward.13} parent=11 // pred_check_branch
        %120 = sbr.rel (%p118) target = $region16
      $region15: #{vqvae_hierarchical_forward.13} parent=11 // pred_region
        _
      $region16: #{vqvae_hierarchical_forward.13} parent=11 // pred_fallthru
        _
      // Predicated region
      $region17: #{vqvae_hierarchical_forward.13} parent=11 // pred_check
        %p121 = pneg %p77
      $region18: #{vqvae_hierarchical_forward.13} parent=11 // pred_check_branch
        %123 = sbr.rel (%p121) target = $region20
      $region19: #{vqvae_hierarchical_forward.13} parent=11 // pred_region
        _
      $region20: #{vqvae_hierarchical_forward.13} parent=11 // pred_fallthru
        _
    $region12: #{vqvae_hierarchical_forward.13} parent=5 // pred_fallthru
      _
    %p124 = scmp.lt.s32.totalorder %s9, 2
    // Predicated region
    $region21: #{vqvae_hierarchical_forward.13} parent=5 // pred_check
      %p125 = pneg %p124
    $region22: #{vqvae_hierarchical_forward.13} parent=5 // pred_check_branch
      %127 = sbr.rel (%p125) target = $region24
    $region23: #{vqvae_hierarchical_forward.13} parent=5 // pred_region
      // Predicated region
      $region25: #{vqvae_hierarchical_forward.13} parent=23 // pred_check
        %p128 = pneg %p29
      $region26: #{vqvae_hierarchical_forward.13} parent=23 // pred_check_branch
        %130 = sbr.rel (%p128) target = $region28
      $region27: #{vqvae_hierarchical_forward.13} parent=23 // pred_region
        %s131 = smul.u32 2, %s9
        %p132 = scmp.lt.s32.totalorder %s131, 3
        %s133 = scalar_select %p132, %s131, 3
        %s134 = smul.addr %s133, 3
        %s135 = smul.addr %s134, 4
        %s136 = scalar_lea.vmem %s0, %s135
        %s137 = smul.u32 2, %s9
      $region28: #{vqvae_hierarchical_forward.13} parent=23 // pred_fallthru
        _
    $region24: #{vqvae_hierarchical_forward.13} parent=5 // pred_fallthru
      _
    %p138 = scmp.le.s32.totalorder 1, %s9
    %p139 = scmp.lt.s32.totalorder %s9, 3
    %p140 = pnand %p138, %p139
    %p141 = pneg %p140
    // Predicated region
    $region29: #{vqvae_hierarchical_forward.13} parent=5 // pred_check
      _
    $region30: #{vqvae_hierarchical_forward.13} parent=5 // pred_check_branch
      %143 = sbr.rel (%p140) target = $region32
    $region31: #{vqvae_hierarchical_forward.13} parent=5 // pred_region
      %s144 = ssub.s32 %s9, 1
      %s145 = smul.u32 2, %s14
      %p146 = scmp.lt.s32.totalorder %s145, 3
      %s147 = scalar_select %p146, %s145, 3
      %s148 = smul.addr %s147, 3
      %s149 = smul.addr %s148, 4
      %s150 = scalar_lea.vmem %s0, %s149
      %p151 = pneg %p35
      %p152 = pneg %p32
      %p153 = pneg %p56
      %p154 = pneg %p53
      %p155 = pneg %p77
      %p156 = pneg %p74
      %p157 = pneg %p103
      %p158 = pneg %p100
      %s159 = smul.u32 2, %s14
      %p160 = scmp.lt.s32.totalorder %s159, 3
      %s161 = scalar_select %p160, %s159, 3
      %s162 = smul.addr %s161, 8
      %s163 = scalar_lea.vmem %s3, %s162
      %s164 = smul.u32 2, %s14
      %p165 = scmp.lt.s32.totalorder %s164, 3
      %s166 = scalar_select %p165, %s164, 3
      %s167 = smul.addr %s166, 3
      %s168 = smul.addr %s167, 4
      %s169 = scalar_lea.vmem %s0, %s168
      %s170 = smul.u32 2, %s14
      %s171 = smul.u32 2, %s14
      %p172 = scmp.lt.s32.totalorder %s171, 3
      %s173 = scalar_select %p172, %s171, 3
      %s174 = smul.addr %s173, 8
      %s175 = scalar_lea.vmem %s3, %s174
      %s176 = smul.u32 2, %s14
      %v177 = vld [vmem:[%s169] sm:$0xff]
      %v178 = vld [vmem:[%s169 + $0x8] sm:$0xf]
      %v179 = vld [vmem:[%s169 + $0xc] sm:$0xff]
      %v180 = vld [vmem:[%s169 + $0x14] sm:$0xf]
      %v181 = vld [vmem:[%s1] sm:$0xf]
      %v182 = vld [vmem:[%s1 + $0x4] sm:$0xf]
      %v183 = vld [vmem:[%s1 + $0x8] sm:$0xf]
      %v184 = vld [vmem:[%s1 + $0xc] sm:$0xf]
      %v185 = vld [vmem:[%s1 + $0x10] sm:$0xf]
      %v186 = vld [vmem:[%s1 + $0x14] sm:$0xf]
      %v187 = vld [vmem:[%s1 + $0x18] sm:$0xf]
      %v188 = vld [vmem:[%s1 + $0x1c] sm:$0xf]
      %v189 = vld [vmem:[%s1 + $0x20] sm:$0xf]
      %v190 = vld [vmem:[%s1 + $0x24] sm:$0xf]
      %v191 = vld [vmem:[%s1 + $0x28] sm:$0xf]
      %v192 = vld [vmem:[%s1 + $0x2c] sm:$0xf]
      %v193 = vld [vmem:[%s1 + $0x30] sm:$0xf]
      %v194 = vld [vmem:[%s1 + $0x34] sm:$0xf]
      %v195 = vld [vmem:[%s1 + $0x38] sm:$0xf]
      %v196 = vld [vmem:[%s1 + $0x3c] sm:$0xf]
      %v197 = vld [vmem:[%s1 + $0x40] sm:$0xf]
      %v198 = vld [vmem:[%s1 + $0x44] sm:$0xf]
      %v199 = vld [vmem:[%s1 + $0x48] sm:$0xf]
      %v200 = vld [vmem:[%s1 + $0x4c] sm:$0xf]
      %v201 = vld [vmem:[%s1 + $0x50] sm:$0xf]
      %v202 = vld [vmem:[%s1 + $0x54] sm:$0xf]
      %v203 = vld [vmem:[%s1 + $0x58] sm:$0xf]
      %v204 = vld [vmem:[%s1 + $0x5c] sm:$0xf]
      %v205 = vld [vmem:[%s1 + $0x60] sm:$0xf]
      %v206 = vld [vmem:[%s1 + $0x64] sm:$0xf]
      %v207 = vld [vmem:[%s1 + $0x68] sm:$0xf]
      %v208 = vld [vmem:[%s1 + $0x6c] sm:$0xf]
      %v209 = vld [vmem:[%s1 + $0x70] sm:$0xf]
      %v210 = vld [vmem:[%s1 + $0x74] sm:$0xf]
      %v211 = vld [vmem:[%s1 + $0x78] sm:$0xf]
      %v212 = vld [vmem:[%s1 + $0x7c] sm:$0xf]
      %v213 = vld [vmem:[%s1 + $0x80] sm:$0xf]
      %v214 = vld [vmem:[%s1 + $0x84] sm:$0xf]
      %v215 = vld [vmem:[%s1 + $0x88] sm:$0xf]
      %v216 = vld [vmem:[%s1 + $0x8c] sm:$0xf]
      %v217 = vld [vmem:[%s1 + $0x90] sm:$0xf]
      %v218 = vld [vmem:[%s1 + $0x94] sm:$0xf]
      %v219 = vld [vmem:[%s1 + $0x98] sm:$0xf]
      %v220 = vld [vmem:[%s1 + $0x9c] sm:$0xf]
      %v221 = vld [vmem:[%s1 + $0xa0] sm:$0xf]
      %v222 = vld [vmem:[%s1 + $0xa4] sm:$0xf]
      %v223 = vld [vmem:[%s1 + $0xa8] sm:$0xf]
      %v224 = vld [vmem:[%s1 + $0xac] sm:$0xf]
      %v225 = vld [vmem:[%s1 + $0xb0] sm:$0xf]
      %v226 = vld [vmem:[%s1 + $0xb4] sm:$0xf]
      %v227 = vld [vmem:[%s1 + $0xb8] sm:$0xf]
      %v228 = vld [vmem:[%s1 + $0xbc] sm:$0xf]
      %v229 = vld [vmem:[%s2] sm:$0x1]
      %v231 = vperm.slane %v229, 0
      %v237 = vunpack.c.l.b16 %v177
      %v238 = vunpack.c.h.b16 %v177
      %v239 = vunpack.c.l.b16 %v178
      %v240 = vunpack.c.l.b16 %v179
      %v241 = vunpack.c.h.b16 %v179
      %v242 = vunpack.c.l.b16 %v180
      %v243 = vpack.c.b16 %v240, %v237
      %v244 = vpack.c.b16 %v241, %v238
      %v245 = vpack.c.b16 %v242, %v239
      %v297 = vunpack.c.l.b16 %v181
      %v298 = vunpack.c.l.b16 %v182
      %v299 = vunpack.c.l.b16 %v183
      %v300 = vunpack.c.l.b16 %v184
      %v301 = vunpack.c.l.b16 %v185
      %v302 = vunpack.c.l.b16 %v186
      %v303 = vunpack.c.l.b16 %v187
      %v304 = vunpack.c.l.b16 %v188
      %v305 = vunpack.c.l.b16 %v189
      %v306 = vunpack.c.l.b16 %v190
      %v307 = vunpack.c.l.b16 %v191
      %v308 = vunpack.c.l.b16 %v192
      %v309 = vunpack.c.l.b16 %v193
      %v310 = vunpack.c.l.b16 %v194
      %v311 = vunpack.c.l.b16 %v195
      %v312 = vunpack.c.l.b16 %v196
      %v313 = vunpack.c.l.b16 %v197
      %v314 = vunpack.c.l.b16 %v198
      %v315 = vunpack.c.l.b16 %v199
      %v316 = vunpack.c.l.b16 %v200
      %v317 = vunpack.c.l.b16 %v201
      %v318 = vunpack.c.l.b16 %v202
      %v319 = vunpack.c.l.b16 %v203
      %v320 = vunpack.c.l.b16 %v204
      %v321 = vunpack.c.l.b16 %v205
      %v322 = vunpack.c.l.b16 %v206
      %v323 = vunpack.c.l.b16 %v207
      %v324 = vunpack.c.l.b16 %v208
      %v325 = vunpack.c.l.b16 %v209
      %v326 = vunpack.c.l.b16 %v210
      %v327 = vunpack.c.l.b16 %v211
      %v328 = vunpack.c.l.b16 %v212
      %v329 = vunpack.c.l.b16 %v213
      %v330 = vunpack.c.l.b16 %v214
      %v331 = vunpack.c.l.b16 %v215
      %v332 = vunpack.c.l.b16 %v216
      %v333 = vunpack.c.l.b16 %v217
      %v334 = vunpack.c.l.b16 %v218
      %v335 = vunpack.c.l.b16 %v219
      %v336 = vunpack.c.l.b16 %v220
      %v337 = vunpack.c.l.b16 %v221
      %v338 = vunpack.c.l.b16 %v222
      %v339 = vunpack.c.l.b16 %v223
      %v340 = vunpack.c.l.b16 %v224
      %v341 = vunpack.c.l.b16 %v225
      %v342 = vunpack.c.l.b16 %v226
      %v343 = vunpack.c.l.b16 %v227
      %v344 = vunpack.c.l.b16 %v228
      %v345 = vpack.c.b16 %v298, %v297
      %v346 = vpack.c.b16 %v300, %v299
      %v347 = vpack.c.b16 %v302, %v301
      %v348 = vpack.c.b16 %v304, %v303
      %v349 = vpack.c.b16 %v306, %v305
      %v350 = vpack.c.b16 %v308, %v307
      %v351 = vpack.c.b16 %v310, %v309
      %v352 = vpack.c.b16 %v312, %v311
      %v353 = vpack.c.b16 %v314, %v313
      %v354 = vpack.c.b16 %v316, %v315
      %v355 = vpack.c.b16 %v318, %v317
      %v356 = vpack.c.b16 %v320, %v319
      %v357 = vpack.c.b16 %v322, %v321
      %v358 = vpack.c.b16 %v324, %v323
      %v359 = vpack.c.b16 %v326, %v325
      %v360 = vpack.c.b16 %v328, %v327
      %v361 = vpack.c.b16 %v330, %v329
      %v362 = vpack.c.b16 %v332, %v331
      %v363 = vpack.c.b16 %v334, %v333
      %v364 = vpack.c.b16 %v336, %v335
      %v365 = vpack.c.b16 %v338, %v337
      %v366 = vpack.c.b16 %v340, %v339
      %v367 = vpack.c.b16 %v342, %v341
      %v368 = vpack.c.b16 %v344, %v343
      %393 = vmatpush.bf16.msra.mxu0 %v352
      %394 = vmatpush.bf16.msra.mxu0 %v351
      %395 = vmatpush.bf16.msra.mxu0 %v350
      %396 = vmatpush.bf16.msra.mxu0 %v349
      %397 = vmatpush.bf16.msra.mxu0 %v348
      %398 = vmatpush.bf16.msra.mxu0 %v347
      %399 = vmatpush.bf16.msra.mxu0 %v346
      %400 = vmatpush.bf16.msra.mxu0 %v345
      %401 = vmatmul.bf16.gmra.mxu0 %v243
      %v402 = vpop.f32.mrf.mxu0
      %v403 = vadd.f32 %v231, %v402
      %v404 = vpop.f32.mrf.mxu0
      %v405 = vadd.f32 %v231, %v404
      %406 = vdwg.mxu0
      %407 = vmatpush.bf16.msra.mxu0 %v360
      %408 = vmatpush.bf16.msra.mxu0 %v359
      %409 = vmatpush.bf16.msra.mxu0 %v358
      %410 = vmatpush.bf16.msra.mxu0 %v357
      %411 = vmatpush.bf16.msra.mxu0 %v356
      %412 = vmatpush.bf16.msra.mxu0 %v355
      %413 = vmatpush.bf16.msra.mxu0 %v354
      %414 = vmatpush.bf16.msra.mxu0 %v353
      %415 = vmatmul.bf16.gmra.mxu0 %v244
      %v416 = vpop.f32.mrf.mxu0
      %v417 = vadd.f32 %v403, %v416
      %v418 = vpop.f32.mrf.mxu0
      %v419 = vadd.f32 %v405, %v418
      %420 = vdwg.mxu0
      %421 = vmatpush.bf16.msra.mxu0 %v368
      %422 = vmatpush.bf16.msra.mxu0 %v367
      %423 = vmatpush.bf16.msra.mxu0 %v366
      %424 = vmatpush.bf16.msra.mxu0 %v365
      %425 = vmatpush.bf16.msra.mxu0 %v364
      %426 = vmatpush.bf16.msra.mxu0 %v363
      %427 = vmatpush.bf16.msra.mxu0 %v362
      %428 = vmatpush.bf16.msra.mxu0 %v361
      %429 = vmatmul.bf16.gmra.mxu0 %v245
      %v430 = vpop.f32.mrf.mxu0
      %v431 = vadd.f32 %v417, %v430
      %v432 = vpop.f32.mrf.mxu0
      %v433 = vadd.f32 %v419, %v432
      %434 = vdwg.mxu0
      %435 = vst [vmem:[%s175] sm:$0xff] %v431
      %436 = vst [vmem:[%s175 + $0x8] sm:$0xff] %v433
      %s437 = smul.u32 2, %s14
      %p438 = scmp.lt.s32.totalorder %s437, 3
      %s439 = scalar_select %p438, %s437, 3
      %s440 = smul.addr %s439, 8
      %s441 = scalar_lea.vmem %s3, %s440
      // Predicated region
      $region33: #{vqvae_hierarchical_forward.13} parent=31 // pred_check
        %p442 = pneg %p100
      $region34: #{vqvae_hierarchical_forward.13} parent=31 // pred_check_branch
        %444 = sbr.rel (%p442) target = $region36
      $region35: #{vqvae_hierarchical_forward.13} parent=31 // pred_region
        %s445 = smul.u32 2, %s14
      $region36: #{vqvae_hierarchical_forward.13} parent=31 // pred_fallthru
        _
    $region32: #{vqvae_hierarchical_forward.13} parent=5 // pred_fallthru
      _
    %p446 = scmp.le.s32.totalorder 2, %s9
    // Predicated region
    $region37: #{vqvae_hierarchical_forward.13} parent=5 // pred_check
      %p447 = pneg %p446
    $region38: #{vqvae_hierarchical_forward.13} parent=5 // pred_check_branch
      %449 = sbr.rel (%p447) target = $region40
    $region39: #{vqvae_hierarchical_forward.13} parent=5 // pred_region
      %s450 = ssub.s32 %s9, 2
      // Predicated region
      $region41: #{vqvae_hierarchical_forward.13} parent=39 // pred_check
        %p451 = pneg %p106
      $region42: #{vqvae_hierarchical_forward.13} parent=39 // pred_check_branch
        %453 = sbr.rel (%p451) target = $region44
      $region43: #{vqvae_hierarchical_forward.13} parent=39 // pred_region
        %s454 = smul.u32 2, %s15
        %p455 = scmp.lt.s32.totalorder %s454, 3
        %s456 = scalar_select %p455, %s454, 3
        %s457 = smul.addr %s456, 8
        %s458 = scalar_lea.vmem %s3, %s457
      $region44: #{vqvae_hierarchical_forward.13} parent=39 // pred_fallthru
        _
    $region40: #{vqvae_hierarchical_forward.13} parent=5 // pred_fallthru
      _
  $region6: #{vqvae_hierarchical_forward.13} parent=0 // loop_footer
    %s13 = sadd.s32 1, %s9
  $region7: #{vqvae_hierarchical_forward.13} parent=0 // loop_footer_branch
    %8 = sbr.rel target = $region3
  $region8: #{vqvae_hierarchical_forward.13} parent=0 // loop_exit
    _

// kernel: vqvae_hierarchical_forward.15
$region0: #{vqvae_hierarchical_forward.15}
  #allocation0 [shape = 'u32[]', space=smem, size = 0x4, offset = 0x4, fixed_abs, tag = 'smem constant byte address 0x4 - core index']
  #allocation1 [shape = 'u32[72,128]{1,0:T(1,128)}', space=vmem, size = 0x9000, scoped, tag = 'internal scratch']
  %s0 = inlined_call_operand.vmem [shape: bf16[64,128], index: 0, kind: input, shape index: {}]
  %s1 = inlined_call_operand.vmem [shape: bf16[128,256], index: 1, kind: input, shape index: {}]
  %s2 = inlined_call_operand.vmem [shape: f32[1,256], index: 2, kind: input, shape index: {}]
  %s3 = inlined_call_operand.vmem [shape: bf16[64,256], index: 3, kind: output, shape index: {}]
  %s4 = sld [smem:[#allocation0]]
  $region45: #{vqvae_hierarchical_forward.15} parent=0
    _
  %s6 = ssub.s32 1, %s4
  %s7 = scalar_select 0, %s6, %s4
  loop: start=0, step=1, limit=4
  $region2: #{vqvae_hierarchical_forward.15} parent=0 // loop_pre_header
    _
  $region3: #{vqvae_hierarchical_forward.15} parent=0 // loop_header
    %s9 = sphi 0, %s13
    %p10 = scmp.ge.s32.totalorder %s9, 4
    %s19 = sphi 0, %s21
    %s22 = sphi 0, %s19
    %s23 = sphi 0, %s22
    %s39 = sphi 0, %s23
    %s43 = sphi 0, %s43
    %s45 = sphi 0, %s43
    %s46 = sphi 0, %s45
    %s60 = sphi 0, %s46
    %s64 = sphi 0, %s64
    %s66 = sphi 0, %s64
    %s67 = sphi 0, %s66
    %s81 = sphi 0, %s67
    %s87 = sphi 0, %s89
    %s90 = sphi 0, %s87
    %s91 = sphi 0, %s90
    %s107 = sphi 0, %s91
  $region4: #{vqvae_hierarchical_forward.15} parent=0 // loop_header_branch
    %12 = sbr.rel (%p10) target = $region8
  $region5: #{vqvae_hierarchical_forward.15} parent=0 // loop_body
    %s14 = ssub.s32 %s9, 1
    %s15 = ssub.s32 %s9, 2
    %s16 = sadd.s32 %s9, 1
    %s17 = ssub.s32 %s9, %s16
    %p18 = scmp.eq.s32.totalorder %s17, 0
    %s20 = sadd.s32 %s19, 1
    %s21 = scalar_select %p18, %s19, %s20
    %p24 = pneg %p18
    %p25 = scmp.eq.s32.totalorder %s9, 1
    %p26 = por %p24, %p25
    %p27 = scmp.ne.s32.totalorder %s19, %s22
    %p28 = scmp.eq.s32.totalorder %s9, 0
    %p29 = por %p27, %p28
    %p30 = scmp.ne.s32.totalorder %s19, %s22
    %p31 = scmp.eq.s32.totalorder %s14, 1
    %p32 = por %p30, %p31
    %p33 = scmp.ne.s32.totalorder %s22, %s23
    %p34 = scmp.eq.s32.totalorder %s14, 0
    %p35 = por %p33, %p34
    %p36 = scmp.ne.s32.totalorder %s22, %s23
    %p37 = scmp.eq.s32.totalorder %s15, 1
    %p38 = por %p36, %p37
    %p40 = scmp.ne.s32.totalorder %s23, %s39
    %p41 = scmp.eq.s32.totalorder %s15, 0
    %p42 = por %p40, %p41
    %s44 = sadd.s32 %s43, 1
    %p47 = scmp.eq.s32.totalorder %s9, 1
    %p48 = scmp.ne.s32.totalorder %s43, %s45
    %p49 = scmp.eq.s32.totalorder %s9, 0
    %p50 = por %p48, %p49
    %p51 = scmp.ne.s32.totalorder %s43, %s45
    %p52 = scmp.eq.s32.totalorder %s14, 1
    %p53 = por %p51, %p52
    %p54 = scmp.ne.s32.totalorder %s45, %s46
    %p55 = scmp.eq.s32.totalorder %s14, 0
    %p56 = por %p54, %p55
    %p57 = scmp.ne.s32.totalorder %s45, %s46
    %p58 = scmp.eq.s32.totalorder %s15, 1
    %p59 = por %p57, %p58
    %p61 = scmp.ne.s32.totalorder %s46, %s60
    %p62 = scmp.eq.s32.totalorder %s15, 0
    %p63 = por %p61, %p62
    %s65 = sadd.s32 %s64, 1
    %p68 = scmp.eq.s32.totalorder %s9, 1
    %p69 = scmp.ne.s32.totalorder %s64, %s66
    %p70 = scmp.eq.s32.totalorder %s9, 0
    %p71 = por %p69, %p70
    %p72 = scmp.ne.s32.totalorder %s64, %s66
    %p73 = scmp.eq.s32.totalorder %s14, 1
    %p74 = por %p72, %p73
    %p75 = scmp.ne.s32.totalorder %s66, %s67
    %p76 = scmp.eq.s32.totalorder %s14, 0
    %p77 = por %p75, %p76
    %p78 = scmp.ne.s32.totalorder %s66, %s67
    %p79 = scmp.eq.s32.totalorder %s15, 1
    %p80 = por %p78, %p79
    %p82 = scmp.ne.s32.totalorder %s67, %s81
    %p83 = scmp.eq.s32.totalorder %s15, 0
    %p84 = por %p82, %p83
    %s85 = ssub.s32 %s9, %s16
    %p86 = scmp.eq.s32.totalorder %s85, 0
    %s88 = sadd.s32 %s87, 1
    %s89 = scalar_select %p86, %s87, %s88
    %p92 = pneg %p86
    %p93 = scmp.eq.s32.totalorder %s9, 1
    %p94 = por %p92, %p93
    %p95 = scmp.ne.s32.totalorder %s87, %s90
    %p96 = scmp.eq.s32.totalorder %s9, 0
    %p97 = por %p95, %p96
    %p98 = scmp.ne.s32.totalorder %s87, %s90
    %p99 = scmp.eq.s32.totalorder %s14, 1
    %p100 = por %p98, %p99
    %p101 = scmp.ne.s32.totalorder %s90, %s91
    %p102 = scmp.eq.s32.totalorder %s14, 0
    %p103 = por %p101, %p102
    %p104 = scmp.ne.s32.totalorder %s90, %s91
    %p105 = scmp.eq.s32.totalorder %s15, 1
    %p106 = por %p104, %p105
    %p108 = scmp.ne.s32.totalorder %s91, %s107
    %p109 = scmp.eq.s32.totalorder %s15, 0
    %p110 = por %p108, %p109
    %p111 = scmp.le.s32.totalorder 1, %s9
    %p112 = scmp.lt.s32.totalorder %s9, 3
    %p113 = pnand %p111, %p112
    %p114 = pneg %p113
    // Predicated region
    $region9: #{vqvae_hierarchical_forward.15} parent=5 // pred_check
      _
    $region10: #{vqvae_hierarchical_forward.15} parent=5 // pred_check_branch
      %116 = sbr.rel (%p113) target = $region12
    $region11: #{vqvae_hierarchical_forward.15} parent=5 // pred_region
      %s117 = ssub.s32 %s9, 1
      // Predicated region
      $region13: #{vqvae_hierarchical_forward.15} parent=11 // pred_check
        %p118 = pneg %p56
      $region14: #{vqvae_hierarchical_forward.15} parent=11 // pred_check_branch
        %120 = sbr.rel (%p118) target = $region16
      $region15: #{vqvae_hierarchical_forward.15} parent=11 // pred_region
        _
      $region16: #{vqvae_hierarchical_forward.15} parent=11 // pred_fallthru
        _
      // Predicated region
      $region17: #{vqvae_hierarchical_forward.15} parent=11 // pred_check
        %p121 = pneg %p77
      $region18: #{vqvae_hierarchical_forward.15} parent=11 // pred_check_branch
        %123 = sbr.rel (%p121) target = $region20
      $region19: #{vqvae_hierarchical_forward.15} parent=11 // pred_region
        _
      $region20: #{vqvae_hierarchical_forward.15} parent=11 // pred_fallthru
        _
    $region12: #{vqvae_hierarchical_forward.15} parent=5 // pred_fallthru
      _
    %p124 = scmp.lt.s32.totalorder %s9, 2
    // Predicated region
    $region21: #{vqvae_hierarchical_forward.15} parent=5 // pred_check
      %p125 = pneg %p124
    $region22: #{vqvae_hierarchical_forward.15} parent=5 // pred_check_branch
      %127 = sbr.rel (%p125) target = $region24
    $region23: #{vqvae_hierarchical_forward.15} parent=5 // pred_region
      // Predicated region
      $region25: #{vqvae_hierarchical_forward.15} parent=23 // pred_check
        %p128 = pneg %p29
      $region26: #{vqvae_hierarchical_forward.15} parent=23 // pred_check_branch
        %130 = sbr.rel (%p128) target = $region28
      $region27: #{vqvae_hierarchical_forward.15} parent=23 // pred_region
        %s131 = smul.u32 4, %s9
        %p132 = scmp.lt.s32.totalorder %s131, 7
        %s133 = scalar_select %p132, %s131, 7
        %s134 = smul.addr %s133, 4
        %s135 = scalar_lea.vmem %s0, %s134
        %s136 = smul.u32 4, %s9
      $region28: #{vqvae_hierarchical_forward.15} parent=23 // pred_fallthru
        _
    $region24: #{vqvae_hierarchical_forward.15} parent=5 // pred_fallthru
      _
    %p137 = scmp.le.s32.totalorder 1, %s9
    %p138 = scmp.lt.s32.totalorder %s9, 3
    %p139 = pnand %p137, %p138
    %p140 = pneg %p139
    // Predicated region
    $region29: #{vqvae_hierarchical_forward.15} parent=5 // pred_check
      _
    $region30: #{vqvae_hierarchical_forward.15} parent=5 // pred_check_branch
      %142 = sbr.rel (%p139) target = $region32
    $region31: #{vqvae_hierarchical_forward.15} parent=5 // pred_region
      %s143 = ssub.s32 %s9, 1
      %s144 = smul.u32 4, %s14
      %p145 = scmp.lt.s32.totalorder %s144, 7
      %s146 = scalar_select %p145, %s144, 7
      %s147 = smul.addr %s146, 4
      %s148 = scalar_lea.vmem %s0, %s147
      %p149 = pneg %p35
      %p150 = pneg %p32
      %p151 = pneg %p56
      %p152 = pneg %p53
      %p153 = pneg %p77
      %p154 = pneg %p74
      %p155 = pneg %p103
      %p156 = pneg %p100
      %s157 = smul.u32 4, %s14
      %p158 = scmp.lt.s32.totalorder %s157, 7
      %s159 = scalar_select %p158, %s157, 7
      %s160 = smul.addr %s159, 2
      %s161 = smul.addr %s160, 4
      %s162 = scalar_lea.vmem %s3, %s161
      %s163 = smul.u32 4, %s14
      %p164 = scmp.lt.s32.totalorder %s163, 7
      %s165 = scalar_select %p164, %s163, 7
      %s166 = smul.addr %s165, 4
      %s167 = scalar_lea.vmem %s0, %s166
      %s168 = smul.u32 4, %s14
      %s169 = smul.u32 4, %s14
      %p170 = scmp.lt.s32.totalorder %s169, 7
      %s171 = scalar_select %p170, %s169, 7
      %s172 = smul.addr %s171, 2
      %s173 = smul.addr %s172, 4
      %s174 = scalar_lea.vmem %s3, %s173
      %s175 = smul.u32 4, %s14
      %v176 = vld [vmem:[%s167] sm:$0xf]
      %v177 = vld [vmem:[%s167 + $0x4] sm:$0xf]
      %v178 = vld [vmem:[%s167 + $0x8] sm:$0xf]
      %v179 = vld [vmem:[%s167 + $0xc] sm:$0xf]
      %v180 = vld [vmem:[%s1] sm:$0xff]
      %v181 = vld [vmem:[%s1 + $0x8] sm:$0xff]
      %v182 = vld [vmem:[%s1 + $0x10] sm:$0xff]
      %v183 = vld [vmem:[%s1 + $0x18] sm:$0xff]
      %v184 = vld [vmem:[%s1 + $0x20] sm:$0xff]
      %v185 = vld [vmem:[%s1 + $0x28] sm:$0xff]
      %v186 = vld [vmem:[%s1 + $0x30] sm:$0xff]
      %v187 = vld [vmem:[%s1 + $0x38] sm:$0xff]
      %v188 = vld [vmem:[%s1 + $0x40] sm:$0xff]
      %v189 = vld [vmem:[%s1 + $0x48] sm:$0xff]
      %v190 = vld [vmem:[%s1 + $0x50] sm:$0xff]
      %v191 = vld [vmem:[%s1 + $0x58] sm:$0xff]
      %v192 = vld [vmem:[%s1 + $0x60] sm:$0xff]
      %v193 = vld [vmem:[%s1 + $0x68] sm:$0xff]
      %v194 = vld [vmem:[%s1 + $0x70] sm:$0xff]
      %v195 = vld [vmem:[%s1 + $0x78] sm:$0xff]
      %v196 = vld [vmem:[%s2] sm:$0x3]
      %v198 = vperm.slane %v196, 0
      %v199 = vperm.slane %v196, 1
      %v206 = vunpack.c.l.b16 %v176
      %v207 = vunpack.c.l.b16 %v177
      %v208 = vunpack.c.l.b16 %v178
      %v209 = vunpack.c.l.b16 %v179
      %v210 = vpack.c.b16 %v207, %v206
      %v211 = vpack.c.b16 %v209, %v208
      %v230 = vunpack.c.l.b16 %v180
      %v231 = vunpack.c.h.b16 %v180
      %v232 = vunpack.c.l.b16 %v181
      %v233 = vunpack.c.h.b16 %v181
      %v234 = vunpack.c.l.b16 %v182
      %v235 = vunpack.c.h.b16 %v182
      %v236 = vunpack.c.l.b16 %v183
      %v237 = vunpack.c.h.b16 %v183
      %v238 = vunpack.c.l.b16 %v184
      %v239 = vunpack.c.h.b16 %v184
      %v240 = vunpack.c.l.b16 %v185
      %v241 = vunpack.c.h.b16 %v185
      %v242 = vunpack.c.l.b16 %v186
      %v243 = vunpack.c.h.b16 %v186
      %v244 = vunpack.c.l.b16 %v187
      %v245 = vunpack.c.h.b16 %v187
      %v246 = vunpack.c.l.b16 %v188
      %v247 = vunpack.c.h.b16 %v188
      %v248 = vunpack.c.l.b16 %v189
      %v249 = vunpack.c.h.b16 %v189
      %v250 = vunpack.c.l.b16 %v190
      %v251 = vunpack.c.h.b16 %v190
      %v252 = vunpack.c.l.b16 %v191
      %v253 = vunpack.c.h.b16 %v191
      %v254 = vunpack.c.l.b16 %v192
      %v255 = vunpack.c.h.b16 %v192
      %v256 = vunpack.c.l.b16 %v193
      %v257 = vunpack.c.h.b16 %v193
      %v258 = vunpack.c.l.b16 %v194
      %v259 = vunpack.c.h.b16 %v194
      %v260 = vunpack.c.l.b16 %v195
      %v261 = vunpack.c.h.b16 %v195
      %v262 = vpack.c.b16 %v232, %v230
      %v263 = vpack.c.b16 %v233, %v231
      %v264 = vpack.c.b16 %v236, %v234
      %v265 = vpack.c.b16 %v237, %v235
      %v266 = vpack.c.b16 %v240, %v238
      %v267 = vpack.c.b16 %v241, %v239
      %v268 = vpack.c.b16 %v244, %v242
      %v269 = vpack.c.b16 %v245, %v243
      %v270 = vpack.c.b16 %v248, %v246
      %v271 = vpack.c.b16 %v249, %v247
      %v272 = vpack.c.b16 %v252, %v250
      %v273 = vpack.c.b16 %v253, %v251
      %v274 = vpack.c.b16 %v256, %v254
      %v275 = vpack.c.b16 %v257, %v255
      %v276 = vpack.c.b16 %v260, %v258
      %v277 = vpack.c.b16 %v261, %v259
      %294 = vmatpush.bf16.msra.mxu0 %v276
      %295 = vmatpush.bf16.msra.mxu0 %v274
      %296 = vmatpush.bf16.msra.mxu0 %v272
      %297 = vmatpush.bf16.msra.mxu0 %v270
      %298 = vmatpush.bf16.msra.mxu0 %v268
      %299 = vmatpush.bf16.msra.mxu0 %v266
      %300 = vmatpush.bf16.msra.mxu0 %v264
      %301 = vmatpush.bf16.msra.mxu0 %v262
      %302 = vmatmul.bf16.gmra.mxu0 %v210
      %v303 = vpop.f32.mrf.mxu0
      %v304 = vadd.f32 %v198, %v303
      %v305 = vpop.f32.mrf.mxu0
      %v306 = vadd.f32 %v198, %v305
      %307 = vmatmul.bf16.gmra.mxu0 %v211
      %v308 = vpop.f32.mrf.mxu0
      %v309 = vadd.f32 %v198, %v308
      %v310 = vpop.f32.mrf.mxu0
      %v311 = vadd.f32 %v198, %v310
      %312 = vdwg.mxu0
      %313 = vmatpush.bf16.msra.mxu0 %v277
      %314 = vmatpush.bf16.msra.mxu0 %v275
      %315 = vmatpush.bf16.msra.mxu0 %v273
      %316 = vmatpush.bf16.msra.mxu0 %v271
      %317 = vmatpush.bf16.msra.mxu0 %v269
      %318 = vmatpush.bf16.msra.mxu0 %v267
      %319 = vmatpush.bf16.msra.mxu0 %v265
      %320 = vmatpush.bf16.msra.mxu0 %v263
      %321 = vmatmul.bf16.gmra.mxu0 %v210
      %v322 = vpop.f32.mrf.mxu0
      %v323 = vadd.f32 %v199, %v322
      %v324 = vpop.f32.mrf.mxu0
      %v325 = vadd.f32 %v199, %v324
      %326 = vmatmul.bf16.gmra.mxu0 %v211
      %v327 = vpop.f32.mrf.mxu0
      %v328 = vadd.f32 %v199, %v327
      %v329 = vpop.f32.mrf.mxu0
      %v330 = vadd.f32 %v199, %v329
      %331 = vdwg.mxu0
      %v332 = vpack.c.bf16 %v323, %v304
      %v333 = vpack.c.bf16 %v325, %v306
      %v334 = vpack.c.bf16 %v328, %v309
      %v335 = vpack.c.bf16 %v330, %v311
      %336 = vst [vmem:[%s174] sm:$0xff] %v332
      %337 = vst [vmem:[%s174 + $0x8] sm:$0xff] %v333
      %338 = vst [vmem:[%s174 + $0x10] sm:$0xff] %v334
      %339 = vst [vmem:[%s174 + $0x18] sm:$0xff] %v335
      %s340 = smul.u32 4, %s14
      %p341 = scmp.lt.s32.totalorder %s340, 7
      %s342 = scalar_select %p341, %s340, 7
      %s343 = smul.addr %s342, 2
      %s344 = smul.addr %s343, 4
      %s345 = scalar_lea.vmem %s3, %s344
      // Predicated region
      $region33: #{vqvae_hierarchical_forward.15} parent=31 // pred_check
        %p346 = pneg %p100
      $region34: #{vqvae_hierarchical_forward.15} parent=31 // pred_check_branch
        %348 = sbr.rel (%p346) target = $region36
      $region35: #{vqvae_hierarchical_forward.15} parent=31 // pred_region
        %s349 = smul.u32 4, %s14
      $region36: #{vqvae_hierarchical_forward.15} parent=31 // pred_fallthru
        _
    $region32: #{vqvae_hierarchical_forward.15} parent=5 // pred_fallthru
      _
    %p350 = scmp.le.s32.totalorder 2, %s9
    // Predicated region
    $region37: #{vqvae_hierarchical_forward.15} parent=5 // pred_check
      %p351 = pneg %p350
    $region38: #{vqvae_hierarchical_forward.15} parent=5 // pred_check_branch
      %353 = sbr.rel (%p351) target = $region40
    $region39: #{vqvae_hierarchical_forward.15} parent=5 // pred_region
      %s354 = ssub.s32 %s9, 2
      // Predicated region
      $region41: #{vqvae_hierarchical_forward.15} parent=39 // pred_check
        %p355 = pneg %p106
      $region42: #{vqvae_hierarchical_forward.15} parent=39 // pred_check_branch
        %357 = sbr.rel (%p355) target = $region44
      $region43: #{vqvae_hierarchical_forward.15} parent=39 // pred_region
        %s358 = smul.u32 4, %s15
        %p359 = scmp.lt.s32.totalorder %s358, 7
        %s360 = scalar_select %p359, %s358, 7
        %s361 = smul.addr %s360, 2
        %s362 = smul.addr %s361, 4
        %s363 = scalar_lea.vmem %s3, %s362
      $region44: #{vqvae_hierarchical_forward.15} parent=39 // pred_fallthru
        _
    $region40: #{vqvae_hierarchical_forward.15} parent=5 // pred_fallthru
      _
  $region6: #{vqvae_hierarchical_forward.15} parent=0 // loop_footer
    %s13 = sadd.s32 1, %s9
  $region7: #{vqvae_hierarchical_forward.15} parent=0 // loop_footer_branch
    %8 = sbr.rel target = $region3
  $region8: #{vqvae_hierarchical_forward.15} parent=0 // loop_exit
    _

// kernel: vqvae_hierarchical_forward.14
$region0: #{vqvae_hierarchical_forward.14}
  #allocation0 [shape = 'u32[]', space=smem, size = 0x4, offset = 0x4, fixed_abs, tag = 'smem constant byte address 0x4 - core index']
  #allocation1 [shape = 'u32[72,128]{1,0:T(1,128)}', space=vmem, size = 0x9000, scoped, tag = 'internal scratch']
  %s0 = inlined_call_operand.vmem [shape: f32[32,128], index: 0, kind: input, shape index: {}]
  %s1 = inlined_call_operand.vmem [shape: f32[128,128], index: 1, kind: input, shape index: {}]
  %s2 = inlined_call_operand.vmem [shape: f32[32,128], index: 2, kind: output, shape index: {0}]
  %s3 = inlined_call_operand.vmem [shape: s32[32,1], index: 3, kind: output, shape index: {1}]
  %s4 = inlined_call_operand.hbm [shape: f32[1,1], index: 4, kind: output, shape index: {2}]
  %s5 = inlined_call_operand.vmem [shape: f32[1,128], index: 5, kind: output, shape index: {3}]
  %6 = xla_tuple %s2, %s3, %s4, %s5
  %s7 = sld [smem:[#allocation0]]
  $region46: #{vqvae_hierarchical_forward.14} parent=0
    _
  %s9 = ssub.s32 1, %s7
  %s10 = scalar_select 0, %s9, %s7
  $region1: #{vqvae_hierarchical_forward.14} parent=0
    #allocation2 [shape = 'u8[512]{0}', space=vmem, size = 0x400, scoped, tag = 'output window, operand 2, single buffered']
    #allocation3 [shape = 's32[1]{0}', space=sflag, size = 0x4, scoped, tag = 'scoped memory for vqvae_hierarchical_forward.14']
    %11 = vsyncpa [#allocation3], 0
    // Predicated region
    $region2: #{vqvae_hierarchical_forward.14} parent=1 // pred_check
      _
    $region3: #{vqvae_hierarchical_forward.14} parent=1 // pred_check_branch
      %13 = sbr.rel (0) target = $region5
    $region4: #{vqvae_hierarchical_forward.14} parent=1 // pred_region
      _
    $region5: #{vqvae_hierarchical_forward.14} parent=1 // pred_fallthru
      _
    // Predicated region
    $region6: #{vqvae_hierarchical_forward.14} parent=1 // pred_check
      _
    $region7: #{vqvae_hierarchical_forward.14} parent=1 // pred_check_branch
      %15 = sbr.rel (0) target = $region9
    $region8: #{vqvae_hierarchical_forward.14} parent=1 // pred_region
      _
    $region9: #{vqvae_hierarchical_forward.14} parent=1 // pred_fallthru
      _
    %v16 = vld [vmem:[%s0] sm:$0xff]
    %v17 = vld [vmem:[%s0 + $0x8] sm:$0xff]
    %v18 = vld [vmem:[%s0 + $0x10] sm:$0xff]
    %v19 = vld [vmem:[%s0 + $0x18] sm:$0xff]
    %v20 = vld [vmem:[%s1] sm:$0xff]
    %v21 = vld [vmem:[%s1 + $0x8] sm:$0xff]
    %v22 = vld [vmem:[%s1 + $0x10] sm:$0xff]
    %v23 = vld [vmem:[%s1 + $0x18] sm:$0xff]
    %v24 = vld [vmem:[%s1 + $0x20] sm:$0xff]
    %v25 = vld [vmem:[%s1 + $0x28] sm:$0xff]
    %v26 = vld [vmem:[%s1 + $0x30] sm:$0xff]
    %v27 = vld [vmem:[%s1 + $0x38] sm:$0xff]
    %v28 = vld [vmem:[%s1 + $0x40] sm:$0xff]
    %v29 = vld [vmem:[%s1 + $0x48] sm:$0xff]
    %v30 = vld [vmem:[%s1 + $0x50] sm:$0xff]
    %v31 = vld [vmem:[%s1 + $0x58] sm:$0xff]
    %v32 = vld [vmem:[%s1 + $0x60] sm:$0xff]
    %v33 = vld [vmem:[%s1 + $0x68] sm:$0xff]
    %v34 = vld [vmem:[%s1 + $0x70] sm:$0xff]
    %v35 = vld [vmem:[%s1 + $0x78] sm:$0xff]
    %v36 = vmul.f32 %v16, %v16
    %v37 = vmul.f32 %v17, %v17
    %v38 = vmul.f32 %v18, %v18
    %v39 = vmul.f32 %v19, %v19
    %40 = vadd.xlane.f32.xlu0 %v36
    %v41 = vpop.xlane.xlu0 %40
    %42 = vadd.xlane.f32.xlu0 %v37
    %v43 = vpop.xlane.xlu0 %42
    %44 = vadd.xlane.f32.xlu0 %v38
    %v45 = vpop.xlane.xlu0 %44
    %46 = vadd.xlane.f32.xlu0 %v39
    %v47 = vpop.xlane.xlu0 %46
    %v48 = vmul.f32 %v20, %v20
    %v49 = vmul.f32 %v21, %v21
    %v50 = vmul.f32 %v22, %v22
    %v51 = vmul.f32 %v23, %v23
    %v52 = vmul.f32 %v24, %v24
    %v53 = vmul.f32 %v25, %v25
    %v54 = vmul.f32 %v26, %v26
    %v55 = vmul.f32 %v27, %v27
    %v56 = vmul.f32 %v28, %v28
    %v57 = vmul.f32 %v29, %v29
    %v58 = vmul.f32 %v30, %v30
    %v59 = vmul.f32 %v31, %v31
    %v60 = vmul.f32 %v32, %v32
    %v61 = vmul.f32 %v33, %v33
    %v62 = vmul.f32 %v34, %v34
    %v63 = vmul.f32 %v35, %v35
    %64 = vadd.xlane.f32.xlu0 %v48
    %v65 = vpop.xlane.xlu0 %64
    %66 = vadd.xlane.f32.xlu0 %v49
    %v67 = vpop.xlane.xlu0 %66
    %68 = vadd.xlane.f32.xlu0 %v50
    %v69 = vpop.xlane.xlu0 %68
    %70 = vadd.xlane.f32.xlu0 %v51
    %v71 = vpop.xlane.xlu0 %70
    %72 = vadd.xlane.f32.xlu0 %v52
    %v73 = vpop.xlane.xlu0 %72
    %74 = vadd.xlane.f32.xlu0 %v53
    %v75 = vpop.xlane.xlu0 %74
    %76 = vadd.xlane.f32.xlu0 %v54
    %v77 = vpop.xlane.xlu0 %76
    %78 = vadd.xlane.f32.xlu0 %v55
    %v79 = vpop.xlane.xlu0 %78
    %80 = vadd.xlane.f32.xlu0 %v56
    %v81 = vpop.xlane.xlu0 %80
    %82 = vadd.xlane.f32.xlu0 %v57
    %v83 = vpop.xlane.xlu0 %82
    %84 = vadd.xlane.f32.xlu0 %v58
    %v85 = vpop.xlane.xlu0 %84
    %86 = vadd.xlane.f32.xlu0 %v59
    %v87 = vpop.xlane.xlu0 %86
    %88 = vadd.xlane.f32.xlu0 %v60
    %v89 = vpop.xlane.xlu0 %88
    %90 = vadd.xlane.f32.xlu0 %v61
    %v91 = vpop.xlane.xlu0 %90
    %92 = vadd.xlane.f32.xlu0 %v62
    %v93 = vpop.xlane.xlu0 %92
    %94 = vadd.xlane.f32.xlu0 %v63
    %v95 = vpop.xlane.xlu0 %94
    %v96 = vpack.c.bf16 %v17, %v16
    %v97 = vpack.c.bf16 %v19, %v18
    %v98 = vpack.c.bf16 %v21, %v20
    %v99 = vpack.c.bf16 %v23, %v22
    %v100 = vpack.c.bf16 %v25, %v24
    %v101 = vpack.c.bf16 %v27, %v26
    %v102 = vpack.c.bf16 %v29, %v28
    %v103 = vpack.c.bf16 %v31, %v30
    %v104 = vpack.c.bf16 %v33, %v32
    %v105 = vpack.c.bf16 %v35, %v34
    %106 = vmatpush.bf16.xpose.msra.mxu0 %v105
    %107 = vmatpush.bf16.xpose.msra.mxu0 %v104
    %108 = vmatpush.bf16.xpose.msra.mxu0 %v103
    %109 = vmatpush.bf16.xpose.msra.mxu0 %v102
    %110 = vmatpush.bf16.xpose.msra.mxu0 %v101
    %111 = vmatpush.bf16.xpose.msra.mxu0 %v100
    %112 = vmatpush.bf16.xpose.msra.mxu0 %v99
    %113 = vmatpush.bf16.xpose.msra.mxu0 %v98
    %114 = vmatmul.bf16.gmra.mxu0 %v96
    %v115 = vpop.f32.mrf.mxu0
    %v116 = vadd.f32 0.0, %v115
    %v117 = vpop.f32.mrf.mxu0
    %v118 = vadd.f32 0.0, %v117
    %119 = vmatmul.bf16.gmra.mxu0 %v97
    %v120 = vpop.f32.mrf.mxu0
    %v121 = vadd.f32 0.0, %v120
    %v122 = vpop.f32.mrf.mxu0
    %v123 = vadd.f32 0.0, %v122
    %124 = vdwg.mxu0
    %v125 = vmul.f32 %v116, 2.0
    %v126 = vmul.f32 %v118, 2.0
    %v127 = vmul.f32 %v121, 2.0
    %v128 = vmul.f32 %v123, 2.0
    %v129 = vsub.f32 %v41, %v125
    %v130 = vsub.f32 %v43, %v126
    %v131 = vsub.f32 %v45, %v127
    %v132 = vsub.f32 %v47, %v128
    %v149 = vlaneseq
    %v150 = vand.u32 %v149, 127
    %v151 = vperm.slane %v65, %v150
    %v152 = vadd.s32 %v150, 4294967288
    %v153 = vperm.slane %v67, %v152
    %vm154 = vcmask 130112
    %v155 = vsel %vm154, %v153, %v151
    %v156 = vadd.s32 %v150, 4294967280
    %v157 = vperm.slane %v69, %v156
    %vm158 = vcmask 195712
    %v159 = vsel %vm158, %v157, %v155
    %v160 = vadd.s32 %v150, 4294967272
    %v161 = vperm.slane %v71, %v160
    %vm162 = vcmask 261312
    %v163 = vsel %vm162, %v161, %v159
    %v164 = vadd.s32 %v150, 4294967264
    %v165 = vperm.slane %v73, %v164
    %vm166 = vcmask 326912
    %v167 = vsel %vm166, %v165, %v163
    %v168 = vadd.s32 %v150, 4294967256
    %v169 = vperm.slane %v75, %v168
    %vm170 = vcmask 392512
    %v171 = vsel %vm170, %v169, %v167
    %v172 = vadd.s32 %v150, 4294967248
    %v173 = vperm.slane %v77, %v172
    %vm174 = vcmask 458112
    %v175 = vsel %vm174, %v173, %v171
    %v176 = vadd.s32 %v150, 4294967240
    %v177 = vperm.slane %v79, %v176
    %vm178 = vcmask 523712
    %v179 = vsel %vm178, %v177, %v175
    %v180 = vadd.s32 %v150, 4294967232
    %v181 = vperm.slane %v81, %v180
    %vm182 = vcmask 589312
    %v183 = vsel %vm182, %v181, %v179
    %v184 = vadd.s32 %v150, 4294967224
    %v185 = vperm.slane %v83, %v184
    %vm186 = vcmask 654912
    %v187 = vsel %vm186, %v185, %v183
    %v188 = vadd.s32 %v150, 4294967216
    %v189 = vperm.slane %v85, %v188
    %vm190 = vcmask 720512
    %v191 = vsel %vm190, %v189, %v187
    %v192 = vadd.s32 %v150, 4294967208
    %v193 = vperm.slane %v87, %v192
    %vm194 = vcmask 786112
    %v195 = vsel %vm194, %v193, %v191
    %v196 = vadd.s32 %v150, 4294967200
    %v197 = vperm.slane %v89, %v196
    %vm198 = vcmask 851712
    %v199 = vsel %vm198, %v197, %v195
    %v200 = vadd.s32 %v150, 4294967192
    %v201 = vperm.slane %v91, %v200
    %vm202 = vcmask 917312
    %v203 = vsel %vm202, %v201, %v199
    %v204 = vadd.s32 %v150, 4294967184
    %v205 = vperm.slane %v93, %v204
    %vm206 = vcmask 982912
    %v207 = vsel %vm206, %v205, %v203
    %v208 = vadd.s32 %v150, 4294967176
    %v209 = vperm.slane %v95, %v208
    %vm210 = vcmask 1048512
    %v211 = vsel %vm210, %v209, %v207
    %vm212 = vcmask 1042434
    %v213 = vsel %vm212, %v211, %v211
    %vm214 = vcmask 1043459
    %v215 = vsel %vm214, %v211, %v213
    %vm216 = vcmask 1044484
    %v217 = vsel %vm216, %v211, %v215
    %vm218 = vcmask 1045509
    %v219 = vsel %vm218, %v211, %v217
    %vm220 = vcmask 1046534
    %v221 = vsel %vm220, %v211, %v219
    %vm222 = vcmask 1047559
    %v223 = vsel %vm222, %v211, %v221
    %v225 = vadd.f32 %v129, %v223
    %v226 = vadd.f32 %v130, %v223
    %v227 = vadd.f32 %v131, %v223
    %v228 = vadd.f32 %v132, %v223
    %vm229 = vcmp.lt.s32.totalorder %v150, 32
    %v230 = vsel %vm229, %v225, 1e+30
    %v231 = vsel %vm229, %v226, 1e+30
    %v232 = vsel %vm229, %v227, 1e+30
    %v233 = vsel %vm229, %v228, 1e+30
    %234 = vmin.index.xlane.f32.xlu0 %v230
    %v235 = vpop.xlane.xlu0 %234
    %236 = vmin.index.xlane.f32.xlu0 %v231
    %v237 = vpop.xlane.xlu0 %236
    %238 = vmin.index.xlane.f32.xlu0 %v232
    %v239 = vpop.xlane.xlu0 %238
    %240 = vmin.index.xlane.f32.xlu0 %v233
    %v241 = vpop.xlane.xlu0 %240
    %vm242 = vcmp.eq.s32.totalorder %v235, %v150
    %vm243 = vcmp.eq.s32.totalorder %v237, %v150
    %vm244 = vcmp.eq.s32.totalorder %v239, %v150
    %vm245 = vcmp.eq.s32.totalorder %v241, %v150
    %v246 = vsel %vm242, 1, 0
    %v247 = vsel %vm243, 1, 0
    %v248 = vsel %vm244, 1, 0
    %v249 = vsel %vm245, 1, 0
    %v250 = vcvt.s32.f32 %v246
    %v251 = vcvt.s32.f32 %v247
    %v252 = vcvt.s32.f32 %v248
    %v253 = vcvt.s32.f32 %v249
    %254 = vmatpush.msra.mxu0 %v35
    %255 = vmatpush.msra.mxu0 %v34
    %256 = vmatpush.msra.mxu0 %v33
    %257 = vmatpush.msra.mxu0 %v32
    %258 = vmatpush.msra.mxu0 %v31
    %259 = vmatpush.msra.mxu0 %v30
    %260 = vmatpush.msra.mxu0 %v29
    %261 = vmatpush.msra.mxu0 %v28
    %262 = vmatpush.msra.mxu0 %v27
    %263 = vmatpush.msra.mxu0 %v26
    %264 = vmatpush.msra.mxu0 %v25
    %265 = vmatpush.msra.mxu0 %v24
    %266 = vmatpush.msra.mxu0 %v23
    %267 = vmatpush.msra.mxu0 %v22
    %268 = vmatpush.msra.mxu0 %v21
    %269 = vmatpush.msra.mxu0 %v20
    %270 = vmatmul.f32.gmra.mxu0 %v250
    %v271 = vpop.f32.mrf.mxu0
    %v272 = vadd.f32 0.0, %v271
    %273 = vmatmul.f32.gmra.mxu0 %v251
    %v274 = vpop.f32.mrf.mxu0
    %v275 = vadd.f32 0.0, %v274
    %276 = vmatmul.f32.gmra.mxu0 %v252
    %v277 = vpop.f32.mrf.mxu0
    %v278 = vadd.f32 0.0, %v277
    %279 = vmatmul.f32.gmra.mxu0 %v253
    %v280 = vpop.f32.mrf.mxu0
    %v281 = vadd.f32 0.0, %v280
    %282 = vdwg.mxu0
    %283 = vst [vmem:[%s2] sm:$0xff] %v272
    %284 = vst [vmem:[%s2 + $0x8] sm:$0xff] %v275
    %285 = vst [vmem:[%s2 + $0x10] sm:$0xff] %v278
    %286 = vst [vmem:[%s2 + $0x18] sm:$0xff] %v281
    %vm287 = vcmask 7168
    %288 = vst.msk [vmem:[%s3] sm:$0xff] %vm287, %v235
    %289 = vst.msk [vmem:[%s3 + $0x8] sm:$0xff] %vm287, %v237
    %290 = vst.msk [vmem:[%s3 + $0x10] sm:$0xff] %vm287, %v239
    %291 = vst.msk [vmem:[%s3 + $0x18] sm:$0xff] %vm287, %v241
    %s292 = smul.u32 0, 32
    %v293 = vlaneseq
    %v294 = vshrl.u32 %v293, 7
    %v295 = vadd.s32 %v294, 8
    %v296 = vadd.s32 %v294, 16
    %v297 = vadd.s32 %v294, 24
    %v298 = vstv %s292
    %v299 = vadd.s32 %v298, %v294
    %v300 = vadd.s32 %v298, %v295
    %v301 = vadd.s32 %v298, %v296
    %v302 = vadd.s32 %v298, %v297
    %vm303 = vcmp.lt.s32.totalorder %v299, 32
    %vm304 = vcmp.lt.s32.totalorder %v300, 32
    %vm305 = vcmp.lt.s32.totalorder %v301, 32
    %vm306 = vcmp.lt.s32.totalorder %v302, 32
    %v307 = vsel %vm303, 1, 0
    %v308 = vsel %vm304, 1, 0
    %v309 = vsel %vm305, 1, 0
    %v310 = vsel %vm306, 1, 0
    %v311 = vcvt.s32.f32 %v307
    %v312 = vcvt.s32.f32 %v308
    %v313 = vcvt.s32.f32 %v309
    %v314 = vcvt.s32.f32 %v310
    %p315 = scmp.eq.s32.totalorder 0, 0
    // Predicated region
    $region10: #{vqvae_hierarchical_forward.14} parent=1 // pred_check
      %p316 = pneg %p315
    $region11: #{vqvae_hierarchical_forward.14} parent=1 // pred_check_branch
      %318 = sbr.rel (%p316) target = $region13
    $region12: #{vqvae_hierarchical_forward.14} parent=1 // pred_region
      %vm319 = vcmask 0
      %320 = vst.msk [vmem:[#allocation2] sm:$0x1] %vm319, 0.0
      %321 = vst [vmem:[%s5] sm:$0x1] 0.0
    $region13: #{vqvae_hierarchical_forward.14} parent=1 // pred_fallthru
      _
    %v322 = vsub.f32 %v16, %v272
    %v323 = vsub.f32 %v17, %v275
    %v324 = vsub.f32 %v18, %v278
    %v325 = vsub.f32 %v19, %v281
    %v326 = vmul.f32 %v322, %v311
    %v327 = vmul.f32 %v323, %v312
    %v328 = vmul.f32 %v324, %v313
    %v329 = vmul.f32 %v325, %v314
    %v330 = vld [vmem:[#allocation2] sm:$0x1]
    %v331 = vmul.f32 %v326, %v326
    %v332 = vmul.f32 %v327, %v327
    %v333 = vmul.f32 %v328, %v328
    %v334 = vmul.f32 %v329, %v329
    %v335 = vadd.f32 %v331, %v332
    %v336 = vadd.f32 %v335, %v333
    %v337 = vadd.f32 %v336, %v334
    %338 = vadd.xlane.f32.xlu0 %v337
    %v339 = vpop.xlane.xlu0 %338
    %v340 = vrot.slane %v339, 4
    %v341 = vadd.f32 %v339, %v340
    %v342 = vrot.slane %v341, 2
    %v343 = vadd.f32 %v341, %v342
    %v344 = vrot.slane %v343, 1
    %v345 = vadd.f32 %v343, %v344
    %s346 = vtos %v345
    %v347 = vstv %s346
    %v348 = vadd.f32 %v330, %v347
    %vm349 = vcmask 0
    %350 = vst.msk [vmem:[#allocation2] sm:$0x1] %vm349, %v348
    %v351 = vld [vmem:[%s5] sm:$0x1]
    %v352 = vmul.f32 %v250, %v311
    %v353 = vmul.f32 %v251, %v312
    %v354 = vmul.f32 %v252, %v313
    %v355 = vmul.f32 %v253, %v314
    %v356 = vadd.f32 %v352, %v353
    %v357 = vadd.f32 %v356, %v354
    %v358 = vadd.f32 %v357, %v355
    %v359 = vrot.slane %v358, 4
    %v360 = vadd.f32 %v358, %v359
    %v361 = vrot.slane %v360, 2
    %v362 = vadd.f32 %v360, %v361
    %v363 = vrot.slane %v362, 1
    %v364 = vadd.f32 %v362, %v363
    %v365 = vadd.f32 %v351, %v364
    %366 = vst [vmem:[%s5] sm:$0x1] %v365
    // Predicated region
    $region14: #{vqvae_hierarchical_forward.14} parent=1 // pred_check
      _
    $region15: #{vqvae_hierarchical_forward.14} parent=1 // pred_check_branch
      %368 = sbr.rel (0) target = $region17
    $region16: #{vqvae_hierarchical_forward.14} parent=1 // pred_region
      _
    $region17: #{vqvae_hierarchical_forward.14} parent=1 // pred_fallthru
      _
    // Predicated region
    $region18: #{vqvae_hierarchical_forward.14} parent=1 // pred_check
      _
    $region19: #{vqvae_hierarchical_forward.14} parent=1 // pred_check_branch
      %370 = sbr.rel (0) target = $region21
    $region20: #{vqvae_hierarchical_forward.14} parent=1 // pred_region
      _
    $region21: #{vqvae_hierarchical_forward.14} parent=1 // pred_fallthru
      _
    // Predicated region
    $region22: #{vqvae_hierarchical_forward.14} parent=1 // pred_check
      _
    $region23: #{vqvae_hierarchical_forward.14} parent=1 // pred_check_branch
      %372 = sbr.rel (0) target = $region25
    $region24: #{vqvae_hierarchical_forward.14} parent=1 // pred_region
      %374 = vsyncadd [#allocation3], 0
      %s376 = sshll.u32 [#allocation2], 4
      %s377 = int_to_ptr.vmem [resolvable:$true] %s376
      %s378 = sshll.u32 %s4, 4
      %s379 = int_to_ptr.hbm [resolvable:$true] %s378
      %381 = dma.vmem_to_hbm [thread:$0]  %s377, 16, %s379, [#allocation3]
    $region25: #{vqvae_hierarchical_forward.14} parent=1 // pred_fallthru
      _
    // Predicated region
    $region26: #{vqvae_hierarchical_forward.14} parent=1 // pred_check
      _
    $region27: #{vqvae_hierarchical_forward.14} parent=1 // pred_check_branch
      %383 = sbr.rel (0) target = $region29
    $region28: #{vqvae_hierarchical_forward.14} parent=1 // pred_region
      _
    $region29: #{vqvae_hierarchical_forward.14} parent=1 // pred_fallthru
      _
    // Predicated region
    $region30: #{vqvae_hierarchical_forward.14} parent=1 // pred_check
      _
    $region31: #{vqvae_hierarchical_forward.14} parent=1 // pred_check_branch
      %385 = sbr.rel (0) target = $region33
    $region32: #{vqvae_hierarchical_forward.14} parent=1 // pred_region
      _
    $region33: #{vqvae_hierarchical_forward.14} parent=1 // pred_fallthru
      _
    // Predicated region
    $region34: #{vqvae_hierarchical_forward.14} parent=1 // pred_check
      _
    $region35: #{vqvae_hierarchical_forward.14} parent=1 // pred_check_branch
      %387 = sbr.rel (0) target = $region37
    $region36: #{vqvae_hierarchical_forward.14} parent=1 // pred_region
      _
    $region37: #{vqvae_hierarchical_forward.14} parent=1 // pred_fallthru
      _
    // Predicated region
    $region38: #{vqvae_hierarchical_forward.14} parent=1 // pred_check
      _
    $region39: #{vqvae_hierarchical_forward.14} parent=1 // pred_check_branch
      %389 = sbr.rel (0) target = $region41
    $region40: #{vqvae_hierarchical_forward.14} parent=1 // pred_region
      %391 = dma.done [#allocation3], 16
    $region41: #{vqvae_hierarchical_forward.14} parent=1 // pred_fallthru
      _
    // Predicated region
    $region42: #{vqvae_hierarchical_forward.14} parent=1 // pred_check
      _
    $region43: #{vqvae_hierarchical_forward.14} parent=1 // pred_check_branch
      %393 = sbr.rel (0) target = $region45
    $region44: #{vqvae_hierarchical_forward.14} parent=1 // pred_region
      _
    $region45: #{vqvae_hierarchical_forward.14} parent=1 // pred_fallthru
      _
    %394 = vsyncpa [#allocation3], 1

// kernel: squeeze.31
$region0: #{squeeze.31}
  %s0 = inlined_call_operand.vmem [shape: s32[128], index: 0, kind: input, shape index: {}]
  %s1 = inlined_call_operand.hbm [shape: s32[2,8,8], index: 1, kind: output, shape index: {}]
  $region1: #{squeeze.31} parent=0
    #allocation0 [shape = 'u8[8192]{0}', space=vmem, size = 0x2000, scoped, tag = 'operand span for operand 1']
    #allocation1 [shape = 's32[1]{0}', space=sflag, size = 0x4, scoped, tag = 'scoped memory for squeeze.31']
    #allocation2 [shape = 'u8[4096]{0}', space=vmem, size = 0x1000, scoped, tag = 'scoped mem for input reshape']
    %2 = vsyncpa [#allocation1], 0
    %s4 = ssub.s32 2, 1
    %v5 = vld [vmem:[%s0] sm:%s4]
    %6 = vst [vmem:[#allocation2] sm:%s4] %v5
    %v7 = vld [vmem:[#allocation2] sm:$0x1]
    %vm8 = vcmask 64512
    %9 = vst.msk [vmem:[#allocation0] sm:$0x1] %vm8, %v7
    %v10 = vld [vmem:[#allocation2] sm:$0x1]
    %11 = vrot.lane.b32.xlu0 %v10, 120
    %v12 = vpop.permute.xlu0 %11
    %vm13 = vcmask 64512
    %s14 = scalar_lea.vmem [#allocation0], 1
    %15 = vst.msk [vmem:[%s14] sm:$0x1] %vm13, %v12
    %v16 = vld [vmem:[#allocation2] sm:$0x1]
    %17 = vrot.lane.b32.xlu0 %v16, 112
    %v18 = vpop.permute.xlu0 %17
    %vm19 = vcmask 64512
    %s20 = scalar_lea.vmem [#allocation0], 2
    %21 = vst.msk [vmem:[%s20] sm:$0x1] %vm19, %v18
    %v22 = vld [vmem:[#allocation2] sm:$0x1]
    %23 = vrot.lane.b32.xlu0 %v22, 104
    %v24 = vpop.permute.xlu0 %23
    %vm25 = vcmask 64512
    %s26 = scalar_lea.vmem [#allocation0], 3
    %27 = vst.msk [vmem:[%s26] sm:$0x1] %vm25, %v24
    %v28 = vld [vmem:[#allocation2] sm:$0x1]
    %29 = vrot.lane.b32.xlu0 %v28, 96
    %v30 = vpop.permute.xlu0 %29
    %vm31 = vcmask 64512
    %s32 = scalar_lea.vmem [#allocation0], 4
    %33 = vst.msk [vmem:[%s32] sm:$0x1] %vm31, %v30
    %v34 = vld [vmem:[#allocation2] sm:$0x1]
    %35 = vrot.lane.b32.xlu0 %v34, 88
    %v36 = vpop.permute.xlu0 %35
    %vm37 = vcmask 64512
    %s38 = scalar_lea.vmem [#allocation0], 5
    %39 = vst.msk [vmem:[%s38] sm:$0x1] %vm37, %v36
    %v40 = vld [vmem:[#allocation2] sm:$0x1]
    %41 = vrot.lane.b32.xlu0 %v40, 80
    %v42 = vpop.permute.xlu0 %41
    %vm43 = vcmask 64512
    %s44 = scalar_lea.vmem [#allocation0], 6
    %45 = vst.msk [vmem:[%s44] sm:$0x1] %vm43, %v42
    %v46 = vld [vmem:[#allocation2] sm:$0x1]
    %47 = vrot.lane.b32.xlu0 %v46, 72
    %v48 = vpop.permute.xlu0 %47
    %vm49 = vcmask 64512
    %s50 = scalar_lea.vmem [#allocation0], 7
    %51 = vst.msk [vmem:[%s50] sm:$0x1] %vm49, %v48
    %v52 = vld [vmem:[#allocation2] sm:$0x1]
    %53 = vrot.lane.b32.xlu0 %v52, 64
    %v54 = vpop.permute.xlu0 %53
    %vm55 = vcmask 64512
    %s56 = scalar_lea.vmem [#allocation0], 8
    %57 = vst.msk [vmem:[%s56] sm:$0x1] %vm55, %v54
    %v58 = vld [vmem:[#allocation2] sm:$0x1]
    %59 = vrot.lane.b32.xlu0 %v58, 56
    %v60 = vpop.permute.xlu0 %59
    %vm61 = vcmask 64512
    %s62 = scalar_lea.vmem [#allocation0], 9
    %63 = vst.msk [vmem:[%s62] sm:$0x1] %vm61, %v60
    %v64 = vld [vmem:[#allocation2] sm:$0x1]
    %65 = vrot.lane.b32.xlu0 %v64, 48
    %v66 = vpop.permute.xlu0 %65
    %vm67 = vcmask 64512
    %s68 = scalar_lea.vmem [#allocation0], 10
    %69 = vst.msk [vmem:[%s68] sm:$0x1] %vm67, %v66
    %v70 = vld [vmem:[#allocation2] sm:$0x1]
    %71 = vrot.lane.b32.xlu0 %v70, 40
    %v72 = vpop.permute.xlu0 %71
    %vm73 = vcmask 64512
    %s74 = scalar_lea.vmem [#allocation0], 11
    %75 = vst.msk [vmem:[%s74] sm:$0x1] %vm73, %v72
    %v76 = vld [vmem:[#allocation2] sm:$0x1]
    %77 = vrot.lane.b32.xlu0 %v76, 32
    %v78 = vpop.permute.xlu0 %77
    %vm79 = vcmask 64512
    %s80 = scalar_lea.vmem [#allocation0], 12
    %81 = vst.msk [vmem:[%s80] sm:$0x1] %vm79, %v78
    %v82 = vld [vmem:[#allocation2] sm:$0x1]
    %83 = vrot.lane.b32.xlu0 %v82, 24
    %v84 = vpop.permute.xlu0 %83
    %vm85 = vcmask 64512
    %s86 = scalar_lea.vmem [#allocation0], 13
    %87 = vst.msk [vmem:[%s86] sm:$0x1] %vm85, %v84
    %v88 = vld [vmem:[#allocation2] sm:$0x1]
    %89 = vrot.lane.b32.xlu0 %v88, 16
    %v90 = vpop.permute.xlu0 %89
    %vm91 = vcmask 64512
    %s92 = scalar_lea.vmem [#allocation0], 14
    %93 = vst.msk [vmem:[%s92] sm:$0x1] %vm91, %v90
    %v94 = vld [vmem:[#allocation2] sm:$0x1]
    %95 = vrot.lane.b32.xlu0 %v94, 8
    %v96 = vpop.permute.xlu0 %95
    %vm97 = vcmask 64512
    %s98 = scalar_lea.vmem [#allocation0], 15
    %99 = vst.msk [vmem:[%s98] sm:$0x1] %vm97, %v96
    %101 = vsyncadd [#allocation1], 0
    %s103 = sshll.u32 [#allocation0], 4
    %s104 = int_to_ptr.vmem [resolvable:$true] %s103
    %s105 = sshll.u32 %s1, 4
    %s106 = int_to_ptr.hbm [resolvable:$true] %s105
    %108 = dma.vmem_to_hbm [thread:$0]  %s104, 256, %s106, [#allocation1]
    %110 = dma.done [#allocation1], 256
    %111 = vsyncpa [#allocation1], 1

// kernel: squeeze.20
$region0: #{squeeze.20}
  %s0 = inlined_call_operand.vmem [shape: s32[32], index: 0, kind: input, shape index: {}]
  %s1 = inlined_call_operand.hbm [shape: s32[2,4,4], index: 1, kind: output, shape index: {}]
  $region1: #{squeeze.20} parent=0
    #allocation0 [shape = 'u8[4096]{0}', space=vmem, size = 0x1000, scoped, tag = 'operand span for operand 1']
    #allocation1 [shape = 's32[1]{0}', space=sflag, size = 0x4, scoped, tag = 'scoped memory for squeeze.20']
    #allocation2 [shape = 'u8[8192]{0}', space=vmem, size = 0x2000, scoped, tag = 'scoped mem for output reshape']
    #allocation3 [shape = 'u8[4096]{0}', space=vmem, size = 0x1000, scoped, tag = 'scoped mem for input reshape']
    %2 = vsyncpa [#allocation1], 0
    %s4 = ssub.s32 2, 1
    %v5 = vld [vmem:[%s0] sm:%s4]
    %6 = vst [vmem:[#allocation3] sm:%s4] %v5
    %v7 = vld [vmem:[#allocation3] sm:$0x1]
    %vm8 = vcmask 31744
    %9 = vst.msk [vmem:[#allocation2] sm:$0x1] %vm8, %v7
    %v10 = vld [vmem:[#allocation3] sm:$0x1]
    %11 = vrot.lane.b32.xlu0 %v10, 124
    %v12 = vpop.permute.xlu0 %11
    %vm13 = vcmask 31744
    %s14 = scalar_lea.vmem [#allocation2], 1
    %15 = vst.msk [vmem:[%s14] sm:$0x1] %vm13, %v12
    %v16 = vld [vmem:[#allocation3] sm:$0x1]
    %17 = vrot.lane.b32.xlu0 %v16, 120
    %v18 = vpop.permute.xlu0 %17
    %vm19 = vcmask 31744
    %s20 = scalar_lea.vmem [#allocation2], 2
    %21 = vst.msk [vmem:[%s20] sm:$0x1] %vm19, %v18
    %v22 = vld [vmem:[#allocation3] sm:$0x1]
    %23 = vrot.lane.b32.xlu0 %v22, 116
    %v24 = vpop.permute.xlu0 %23
    %vm25 = vcmask 31744
    %s26 = scalar_lea.vmem [#allocation2], 3
    %27 = vst.msk [vmem:[%s26] sm:$0x1] %vm25, %v24
    %v28 = vld [vmem:[#allocation3] sm:$0x1]
    %29 = vrot.lane.b32.xlu0 %v28, 112
    %v30 = vpop.permute.xlu0 %29
    %vm31 = vcmask 31744
    %s32 = scalar_lea.vmem [#allocation2], 8
    %33 = vst.msk [vmem:[%s32] sm:$0x1] %vm31, %v30
    %v34 = vld [vmem:[#allocation3] sm:$0x1]
    %35 = vrot.lane.b32.xlu0 %v34, 108
    %v36 = vpop.permute.xlu0 %35
    %vm37 = vcmask 31744
    %s38 = scalar_lea.vmem [#allocation2], 9
    %39 = vst.msk [vmem:[%s38] sm:$0x1] %vm37, %v36
    %v40 = vld [vmem:[#allocation3] sm:$0x1]
    %41 = vrot.lane.b32.xlu0 %v40, 104
    %v42 = vpop.permute.xlu0 %41
    %vm43 = vcmask 31744
    %s44 = scalar_lea.vmem [#allocation2], 10
    %45 = vst.msk [vmem:[%s44] sm:$0x1] %vm43, %v42
    %v46 = vld [vmem:[#allocation3] sm:$0x1]
    %47 = vrot.lane.b32.xlu0 %v46, 100
    %v48 = vpop.permute.xlu0 %47
    %vm49 = vcmask 31744
    %s50 = scalar_lea.vmem [#allocation2], 11
    %51 = vst.msk [vmem:[%s50] sm:$0x1] %vm49, %v48
    %s53 = ssub.s32 16, 1
    %v54 = vld [vmem:[#allocation2] sm:%s53]
    %s56 = ssub.s32 16, 1
    %57 = vst [vmem:[#allocation0] sm:%s56] %v54
    %s58 = scalar_lea.vmem [#allocation2], 8
    %v59 = vld [vmem:[%s58] sm:%s53]
    %s61 = ssub.s32 16, 1
    %s62 = scalar_lea.vmem [#allocation0], 4
    %63 = vst [vmem:[%s62] sm:%s61] %v59
    %65 = vsyncadd [#allocation1], 0
    %s67 = sshll.u32 [#allocation0], 4
    %s68 = int_to_ptr.vmem [resolvable:$true] %s67
    %s69 = sshll.u32 %s1, 4
    %s70 = int_to_ptr.hbm [resolvable:$true] %s69
    %72 = dma.vmem_to_hbm [thread:$0]  %s68, 128, %s70, [#allocation1]
    %74 = dma.done [#allocation1], 128
    %75 = vsyncpa [#allocation1], 1

// kernel: vqvae_hierarchical_forward.16
$region0: #{vqvae_hierarchical_forward.16}
  #allocation0 [shape = 'u32[]', space=smem, size = 0x4, offset = 0x4, fixed_abs, tag = 'smem constant byte address 0x4 - core index']
  #allocation1 [shape = 'u32[72,128]{1,0:T(1,128)}', space=vmem, size = 0x9000, scoped, tag = 'internal scratch']
  %s0 = inlined_call_operand.vmem [shape: bf16[128,128], index: 0, kind: input, shape index: {}]
  %s1 = inlined_call_operand.vmem [shape: bf16[128,128], index: 1, kind: input, shape index: {}]
  %s2 = inlined_call_operand.vmem [shape: f32[1,128], index: 2, kind: input, shape index: {}]
  %s3 = inlined_call_operand.vmem [shape: f32[128,128], index: 3, kind: output, shape index: {}]
  %s4 = sld [smem:[#allocation0]]
  $region45: #{vqvae_hierarchical_forward.16} parent=0
    _
  %s6 = ssub.s32 1, %s4
  %s7 = scalar_select 0, %s6, %s4
  loop: start=0, step=1, limit=4
  $region2: #{vqvae_hierarchical_forward.16} parent=0 // loop_pre_header
    _
  $region3: #{vqvae_hierarchical_forward.16} parent=0 // loop_header
    %s9 = sphi 0, %s13
    %p10 = scmp.ge.s32.totalorder %s9, 4
    %s19 = sphi 0, %s21
    %s22 = sphi 0, %s19
    %s23 = sphi 0, %s22
    %s39 = sphi 0, %s23
    %s43 = sphi 0, %s43
    %s45 = sphi 0, %s43
    %s46 = sphi 0, %s45
    %s60 = sphi 0, %s46
    %s64 = sphi 0, %s64
    %s66 = sphi 0, %s64
    %s67 = sphi 0, %s66
    %s81 = sphi 0, %s67
    %s87 = sphi 0, %s89
    %s90 = sphi 0, %s87
    %s91 = sphi 0, %s90
    %s107 = sphi 0, %s91
  $region4: #{vqvae_hierarchical_forward.16} parent=0 // loop_header_branch
    %12 = sbr.rel (%p10) target = $region8
  $region5: #{vqvae_hierarchical_forward.16} parent=0 // loop_body
    %s14 = ssub.s32 %s9, 1
    %s15 = ssub.s32 %s9, 2
    %s16 = sadd.s32 %s9, 1
    %s17 = ssub.s32 %s9, %s16
    %p18 = scmp.eq.s32.totalorder %s17, 0
    %s20 = sadd.s32 %s19, 1
    %s21 = scalar_select %p18, %s19, %s20
    %p24 = pneg %p18
    %p25 = scmp.eq.s32.totalorder %s9, 1
    %p26 = por %p24, %p25
    %p27 = scmp.ne.s32.totalorder %s19, %s22
    %p28 = scmp.eq.s32.totalorder %s9, 0
    %p29 = por %p27, %p28
    %p30 = scmp.ne.s32.totalorder %s19, %s22
    %p31 = scmp.eq.s32.totalorder %s14, 1
    %p32 = por %p30, %p31
    %p33 = scmp.ne.s32.totalorder %s22, %s23
    %p34 = scmp.eq.s32.totalorder %s14, 0
    %p35 = por %p33, %p34
    %p36 = scmp.ne.s32.totalorder %s22, %s23
    %p37 = scmp.eq.s32.totalorder %s15, 1
    %p38 = por %p36, %p37
    %p40 = scmp.ne.s32.totalorder %s23, %s39
    %p41 = scmp.eq.s32.totalorder %s15, 0
    %p42 = por %p40, %p41
    %s44 = sadd.s32 %s43, 1
    %p47 = scmp.eq.s32.totalorder %s9, 1
    %p48 = scmp.ne.s32.totalorder %s43, %s45
    %p49 = scmp.eq.s32.totalorder %s9, 0
    %p50 = por %p48, %p49
    %p51 = scmp.ne.s32.totalorder %s43, %s45
    %p52 = scmp.eq.s32.totalorder %s14, 1
    %p53 = por %p51, %p52
    %p54 = scmp.ne.s32.totalorder %s45, %s46
    %p55 = scmp.eq.s32.totalorder %s14, 0
    %p56 = por %p54, %p55
    %p57 = scmp.ne.s32.totalorder %s45, %s46
    %p58 = scmp.eq.s32.totalorder %s15, 1
    %p59 = por %p57, %p58
    %p61 = scmp.ne.s32.totalorder %s46, %s60
    %p62 = scmp.eq.s32.totalorder %s15, 0
    %p63 = por %p61, %p62
    %s65 = sadd.s32 %s64, 1
    %p68 = scmp.eq.s32.totalorder %s9, 1
    %p69 = scmp.ne.s32.totalorder %s64, %s66
    %p70 = scmp.eq.s32.totalorder %s9, 0
    %p71 = por %p69, %p70
    %p72 = scmp.ne.s32.totalorder %s64, %s66
    %p73 = scmp.eq.s32.totalorder %s14, 1
    %p74 = por %p72, %p73
    %p75 = scmp.ne.s32.totalorder %s66, %s67
    %p76 = scmp.eq.s32.totalorder %s14, 0
    %p77 = por %p75, %p76
    %p78 = scmp.ne.s32.totalorder %s66, %s67
    %p79 = scmp.eq.s32.totalorder %s15, 1
    %p80 = por %p78, %p79
    %p82 = scmp.ne.s32.totalorder %s67, %s81
    %p83 = scmp.eq.s32.totalorder %s15, 0
    %p84 = por %p82, %p83
    %s85 = ssub.s32 %s9, %s16
    %p86 = scmp.eq.s32.totalorder %s85, 0
    %s88 = sadd.s32 %s87, 1
    %s89 = scalar_select %p86, %s87, %s88
    %p92 = pneg %p86
    %p93 = scmp.eq.s32.totalorder %s9, 1
    %p94 = por %p92, %p93
    %p95 = scmp.ne.s32.totalorder %s87, %s90
    %p96 = scmp.eq.s32.totalorder %s9, 0
    %p97 = por %p95, %p96
    %p98 = scmp.ne.s32.totalorder %s87, %s90
    %p99 = scmp.eq.s32.totalorder %s14, 1
    %p100 = por %p98, %p99
    %p101 = scmp.ne.s32.totalorder %s90, %s91
    %p102 = scmp.eq.s32.totalorder %s14, 0
    %p103 = por %p101, %p102
    %p104 = scmp.ne.s32.totalorder %s90, %s91
    %p105 = scmp.eq.s32.totalorder %s15, 1
    %p106 = por %p104, %p105
    %p108 = scmp.ne.s32.totalorder %s91, %s107
    %p109 = scmp.eq.s32.totalorder %s15, 0
    %p110 = por %p108, %p109
    %p111 = scmp.le.s32.totalorder 1, %s9
    %p112 = scmp.lt.s32.totalorder %s9, 3
    %p113 = pnand %p111, %p112
    %p114 = pneg %p113
    // Predicated region
    $region9: #{vqvae_hierarchical_forward.16} parent=5 // pred_check
      _
    $region10: #{vqvae_hierarchical_forward.16} parent=5 // pred_check_branch
      %116 = sbr.rel (%p113) target = $region12
    $region11: #{vqvae_hierarchical_forward.16} parent=5 // pred_region
      %s117 = ssub.s32 %s9, 1
      // Predicated region
      $region13: #{vqvae_hierarchical_forward.16} parent=11 // pred_check
        %p118 = pneg %p56
      $region14: #{vqvae_hierarchical_forward.16} parent=11 // pred_check_branch
        %120 = sbr.rel (%p118) target = $region16
      $region15: #{vqvae_hierarchical_forward.16} parent=11 // pred_region
        _
      $region16: #{vqvae_hierarchical_forward.16} parent=11 // pred_fallthru
        _
      // Predicated region
      $region17: #{vqvae_hierarchical_forward.16} parent=11 // pred_check
        %p121 = pneg %p77
      $region18: #{vqvae_hierarchical_forward.16} parent=11 // pred_check_branch
        %123 = sbr.rel (%p121) target = $region20
      $region19: #{vqvae_hierarchical_forward.16} parent=11 // pred_region
        _
      $region20: #{vqvae_hierarchical_forward.16} parent=11 // pred_fallthru
        _
    $region12: #{vqvae_hierarchical_forward.16} parent=5 // pred_fallthru
      _
    %p124 = scmp.lt.s32.totalorder %s9, 2
    // Predicated region
    $region21: #{vqvae_hierarchical_forward.16} parent=5 // pred_check
      %p125 = pneg %p124
    $region22: #{vqvae_hierarchical_forward.16} parent=5 // pred_check_branch
      %127 = sbr.rel (%p125) target = $region24
    $region23: #{vqvae_hierarchical_forward.16} parent=5 // pred_region
      // Predicated region
      $region25: #{vqvae_hierarchical_forward.16} parent=23 // pred_check
        %p128 = pneg %p29
      $region26: #{vqvae_hierarchical_forward.16} parent=23 // pred_check_branch
        %130 = sbr.rel (%p128) target = $region28
      $region27: #{vqvae_hierarchical_forward.16} parent=23 // pred_region
        %s131 = smul.u32 8, %s9
        %p132 = scmp.lt.s32.totalorder %s131, 15
        %s133 = scalar_select %p132, %s131, 15
        %s134 = smul.addr %s133, 4
        %s135 = scalar_lea.vmem %s0, %s134
        %s136 = smul.u32 8, %s9
      $region28: #{vqvae_hierarchical_forward.16} parent=23 // pred_fallthru
        _
    $region24: #{vqvae_hierarchical_forward.16} parent=5 // pred_fallthru
      _
    %p137 = scmp.le.s32.totalorder 1, %s9
    %p138 = scmp.lt.s32.totalorder %s9, 3
    %p139 = pnand %p137, %p138
    %p140 = pneg %p139
    // Predicated region
    $region29: #{vqvae_hierarchical_forward.16} parent=5 // pred_check
      _
    $region30: #{vqvae_hierarchical_forward.16} parent=5 // pred_check_branch
      %142 = sbr.rel (%p139) target = $region32
    $region31: #{vqvae_hierarchical_forward.16} parent=5 // pred_region
      %s143 = ssub.s32 %s9, 1
      %s144 = smul.u32 8, %s14
      %p145 = scmp.lt.s32.totalorder %s144, 15
      %s146 = scalar_select %p145, %s144, 15
      %s147 = smul.addr %s146, 4
      %s148 = scalar_lea.vmem %s0, %s147
      %p149 = pneg %p35
      %p150 = pneg %p32
      %p151 = pneg %p56
      %p152 = pneg %p53
      %p153 = pneg %p77
      %p154 = pneg %p74
      %p155 = pneg %p103
      %p156 = pneg %p100
      %s157 = smul.u32 8, %s14
      %p158 = scmp.lt.s32.totalorder %s157, 15
      %s159 = scalar_select %p158, %s157, 15
      %s160 = smul.addr %s159, 8
      %s161 = scalar_lea.vmem %s3, %s160
      %s162 = smul.u32 8, %s14
      %p163 = scmp.lt.s32.totalorder %s162, 15
      %s164 = scalar_select %p163, %s162, 15
      %s165 = smul.addr %s164, 4
      %s166 = scalar_lea.vmem %s0, %s165
      %s167 = smul.u32 8, %s14
      %s168 = smul.u32 8, %s14
      %p169 = scmp.lt.s32.totalorder %s168, 15
      %s170 = scalar_select %p169, %s168, 15
      %s171 = smul.addr %s170, 8
      %s172 = scalar_lea.vmem %s3, %s171
      %s173 = smul.u32 8, %s14
      %v174 = vld [vmem:[%s166] sm:$0xf]
      %v175 = vld [vmem:[%s166 + $0x4] sm:$0xf]
      %v176 = vld [vmem:[%s166 + $0x8] sm:$0xf]
      %v177 = vld [vmem:[%s166 + $0xc] sm:$0xf]
      %v178 = vld [vmem:[%s166 + $0x10] sm:$0xf]
      %v179 = vld [vmem:[%s166 + $0x14] sm:$0xf]
      %v180 = vld [vmem:[%s166 + $0x18] sm:$0xf]
      %v181 = vld [vmem:[%s166 + $0x1c] sm:$0xf]
      %v182 = vld [vmem:[%s1] sm:$0xf]
      %v183 = vld [vmem:[%s1 + $0x4] sm:$0xf]
      %v184 = vld [vmem:[%s1 + $0x8] sm:$0xf]
      %v185 = vld [vmem:[%s1 + $0xc] sm:$0xf]
      %v186 = vld [vmem:[%s1 + $0x10] sm:$0xf]
      %v187 = vld [vmem:[%s1 + $0x14] sm:$0xf]
      %v188 = vld [vmem:[%s1 + $0x18] sm:$0xf]
      %v189 = vld [vmem:[%s1 + $0x1c] sm:$0xf]
      %v190 = vld [vmem:[%s1 + $0x20] sm:$0xf]
      %v191 = vld [vmem:[%s1 + $0x24] sm:$0xf]
      %v192 = vld [vmem:[%s1 + $0x28] sm:$0xf]
      %v193 = vld [vmem:[%s1 + $0x2c] sm:$0xf]
      %v194 = vld [vmem:[%s1 + $0x30] sm:$0xf]
      %v195 = vld [vmem:[%s1 + $0x34] sm:$0xf]
      %v196 = vld [vmem:[%s1 + $0x38] sm:$0xf]
      %v197 = vld [vmem:[%s1 + $0x3c] sm:$0xf]
      %v198 = vld [vmem:[%s2] sm:$0x1]
      %v200 = vperm.slane %v198, 0
      %v210 = vunpack.c.l.b16 %v174
      %v211 = vunpack.c.l.b16 %v175
      %v212 = vunpack.c.l.b16 %v176
      %v213 = vunpack.c.l.b16 %v177
      %v214 = vunpack.c.l.b16 %v178
      %v215 = vunpack.c.l.b16 %v179
      %v216 = vunpack.c.l.b16 %v180
      %v217 = vunpack.c.l.b16 %v181
      %v218 = vpack.c.b16 %v211, %v210
      %v219 = vpack.c.b16 %v213, %v212
      %v220 = vpack.c.b16 %v215, %v214
      %v221 = vpack.c.b16 %v217, %v216
      %v242 = vunpack.c.l.b16 %v182
      %v243 = vunpack.c.l.b16 %v183
      %v244 = vunpack.c.l.b16 %v184
      %v245 = vunpack.c.l.b16 %v185
      %v246 = vunpack.c.l.b16 %v186
      %v247 = vunpack.c.l.b16 %v187
      %v248 = vunpack.c.l.b16 %v188
      %v249 = vunpack.c.l.b16 %v189
      %v250 = vunpack.c.l.b16 %v190
      %v251 = vunpack.c.l.b16 %v191
      %v252 = vunpack.c.l.b16 %v192
      %v253 = vunpack.c.l.b16 %v193
      %v254 = vunpack.c.l.b16 %v194
      %v255 = vunpack.c.l.b16 %v195
      %v256 = vunpack.c.l.b16 %v196
      %v257 = vunpack.c.l.b16 %v197
      %v258 = vpack.c.b16 %v243, %v242
      %v259 = vpack.c.b16 %v245, %v244
      %v260 = vpack.c.b16 %v247, %v246
      %v261 = vpack.c.b16 %v249, %v248
      %v262 = vpack.c.b16 %v251, %v250
      %v263 = vpack.c.b16 %v253, %v252
      %v264 = vpack.c.b16 %v255, %v254
      %v265 = vpack.c.b16 %v257, %v256
      %274 = vmatpush.bf16.msra.mxu0 %v265
      %275 = vmatpush.bf16.msra.mxu0 %v264
      %276 = vmatpush.bf16.msra.mxu0 %v263
      %277 = vmatpush.bf16.msra.mxu0 %v262
      %278 = vmatpush.bf16.msra.mxu0 %v261
      %279 = vmatpush.bf16.msra.mxu0 %v260
      %280 = vmatpush.bf16.msra.mxu0 %v259
      %281 = vmatpush.bf16.msra.mxu0 %v258
      %282 = vmatmul.bf16.gmra.mxu0 %v218
      %v283 = vpop.f32.mrf.mxu0
      %v284 = vadd.f32 %v200, %v283
      %v285 = vpop.f32.mrf.mxu0
      %v286 = vadd.f32 %v200, %v285
      %287 = vmatmul.bf16.gmra.mxu0 %v219
      %v288 = vpop.f32.mrf.mxu0
      %v289 = vadd.f32 %v200, %v288
      %v290 = vpop.f32.mrf.mxu0
      %v291 = vadd.f32 %v200, %v290
      %292 = vmatmul.bf16.gmra.mxu0 %v220
      %v293 = vpop.f32.mrf.mxu0
      %v294 = vadd.f32 %v200, %v293
      %v295 = vpop.f32.mrf.mxu0
      %v296 = vadd.f32 %v200, %v295
      %297 = vmatmul.bf16.gmra.mxu0 %v221
      %v298 = vpop.f32.mrf.mxu0
      %v299 = vadd.f32 %v200, %v298
      %v300 = vpop.f32.mrf.mxu0
      %v301 = vadd.f32 %v200, %v300
      %302 = vdwg.mxu0
      %303 = vst [vmem:[%s172] sm:$0xff] %v284
      %304 = vst [vmem:[%s172 + $0x8] sm:$0xff] %v286
      %305 = vst [vmem:[%s172 + $0x10] sm:$0xff] %v289
      %306 = vst [vmem:[%s172 + $0x18] sm:$0xff] %v291
      %307 = vst [vmem:[%s172 + $0x20] sm:$0xff] %v294
      %308 = vst [vmem:[%s172 + $0x28] sm:$0xff] %v296
      %309 = vst [vmem:[%s172 + $0x30] sm:$0xff] %v299
      %310 = vst [vmem:[%s172 + $0x38] sm:$0xff] %v301
      %s311 = smul.u32 8, %s14
      %p312 = scmp.lt.s32.totalorder %s311, 15
      %s313 = scalar_select %p312, %s311, 15
      %s314 = smul.addr %s313, 8
      %s315 = scalar_lea.vmem %s3, %s314
      // Predicated region
      $region33: #{vqvae_hierarchical_forward.16} parent=31 // pred_check
        %p316 = pneg %p100
      $region34: #{vqvae_hierarchical_forward.16} parent=31 // pred_check_branch
        %318 = sbr.rel (%p316) target = $region36
      $region35: #{vqvae_hierarchical_forward.16} parent=31 // pred_region
        %s319 = smul.u32 8, %s14
      $region36: #{vqvae_hierarchical_forward.16} parent=31 // pred_fallthru
        _
    $region32: #{vqvae_hierarchical_forward.16} parent=5 // pred_fallthru
      _
    %p320 = scmp.le.s32.totalorder 2, %s9
    // Predicated region
    $region37: #{vqvae_hierarchical_forward.16} parent=5 // pred_check
      %p321 = pneg %p320
    $region38: #{vqvae_hierarchical_forward.16} parent=5 // pred_check_branch
      %323 = sbr.rel (%p321) target = $region40
    $region39: #{vqvae_hierarchical_forward.16} parent=5 // pred_region
      %s324 = ssub.s32 %s9, 2
      // Predicated region
      $region41: #{vqvae_hierarchical_forward.16} parent=39 // pred_check
        %p325 = pneg %p106
      $region42: #{vqvae_hierarchical_forward.16} parent=39 // pred_check_branch
        %327 = sbr.rel (%p325) target = $region44
      $region43: #{vqvae_hierarchical_forward.16} parent=39 // pred_region
        %s328 = smul.u32 8, %s15
        %p329 = scmp.lt.s32.totalorder %s328, 15
        %s330 = scalar_select %p329, %s328, 15
        %s331 = smul.addr %s330, 8
        %s332 = scalar_lea.vmem %s3, %s331
      $region44: #{vqvae_hierarchical_forward.16} parent=39 // pred_fallthru
        _
    $region40: #{vqvae_hierarchical_forward.16} parent=5 // pred_fallthru
      _
  $region6: #{vqvae_hierarchical_forward.16} parent=0 // loop_footer
    %s13 = sadd.s32 1, %s9
  $region7: #{vqvae_hierarchical_forward.16} parent=0 // loop_footer_branch
    %8 = sbr.rel target = $region3
  $region8: #{vqvae_hierarchical_forward.16} parent=0 // loop_exit
    _

// kernel: vqvae_hierarchical_forward.18
$region0: #{vqvae_hierarchical_forward.18}
  #allocation0 [shape = 'u32[]', space=smem, size = 0x4, offset = 0x4, fixed_abs, tag = 'smem constant byte address 0x4 - core index']
  #allocation1 [shape = 'u32[72,128]{1,0:T(1,128)}', space=vmem, size = 0x9000, scoped, tag = 'internal scratch']
  %s0 = inlined_call_operand.vmem [shape: bf16[192,256], index: 0, kind: input, shape index: {}]
  %s1 = inlined_call_operand.vmem [shape: bf16[256,128], index: 1, kind: input, shape index: {}]
  %s2 = inlined_call_operand.vmem [shape: f32[1,128], index: 2, kind: input, shape index: {}]
  %s3 = inlined_call_operand.vmem [shape: bf16[192,128], index: 3, kind: output, shape index: {}]
  %s4 = sld [smem:[#allocation0]]
  $region45: #{vqvae_hierarchical_forward.18} parent=0
    _
  %s6 = ssub.s32 1, %s4
  %s7 = scalar_select 0, %s6, %s4
  loop: start=0, step=1, limit=4
  $region2: #{vqvae_hierarchical_forward.18} parent=0 // loop_pre_header
    _
  $region3: #{vqvae_hierarchical_forward.18} parent=0 // loop_header
    %s9 = sphi 0, %s13
    %p10 = scmp.ge.s32.totalorder %s9, 4
    %s19 = sphi 0, %s21
    %s22 = sphi 0, %s19
    %s23 = sphi 0, %s22
    %s39 = sphi 0, %s23
    %s43 = sphi 0, %s43
    %s45 = sphi 0, %s43
    %s46 = sphi 0, %s45
    %s60 = sphi 0, %s46
    %s64 = sphi 0, %s64
    %s66 = sphi 0, %s64
    %s67 = sphi 0, %s66
    %s81 = sphi 0, %s67
    %s87 = sphi 0, %s89
    %s90 = sphi 0, %s87
    %s91 = sphi 0, %s90
    %s107 = sphi 0, %s91
  $region4: #{vqvae_hierarchical_forward.18} parent=0 // loop_header_branch
    %12 = sbr.rel (%p10) target = $region8
  $region5: #{vqvae_hierarchical_forward.18} parent=0 // loop_body
    %s14 = ssub.s32 %s9, 1
    %s15 = ssub.s32 %s9, 2
    %s16 = sadd.s32 %s9, 1
    %s17 = ssub.s32 %s9, %s16
    %p18 = scmp.eq.s32.totalorder %s17, 0
    %s20 = sadd.s32 %s19, 1
    %s21 = scalar_select %p18, %s19, %s20
    %p24 = pneg %p18
    %p25 = scmp.eq.s32.totalorder %s9, 1
    %p26 = por %p24, %p25
    %p27 = scmp.ne.s32.totalorder %s19, %s22
    %p28 = scmp.eq.s32.totalorder %s9, 0
    %p29 = por %p27, %p28
    %p30 = scmp.ne.s32.totalorder %s19, %s22
    %p31 = scmp.eq.s32.totalorder %s14, 1
    %p32 = por %p30, %p31
    %p33 = scmp.ne.s32.totalorder %s22, %s23
    %p34 = scmp.eq.s32.totalorder %s14, 0
    %p35 = por %p33, %p34
    %p36 = scmp.ne.s32.totalorder %s22, %s23
    %p37 = scmp.eq.s32.totalorder %s15, 1
    %p38 = por %p36, %p37
    %p40 = scmp.ne.s32.totalorder %s23, %s39
    %p41 = scmp.eq.s32.totalorder %s15, 0
    %p42 = por %p40, %p41
    %s44 = sadd.s32 %s43, 1
    %p47 = scmp.eq.s32.totalorder %s9, 1
    %p48 = scmp.ne.s32.totalorder %s43, %s45
    %p49 = scmp.eq.s32.totalorder %s9, 0
    %p50 = por %p48, %p49
    %p51 = scmp.ne.s32.totalorder %s43, %s45
    %p52 = scmp.eq.s32.totalorder %s14, 1
    %p53 = por %p51, %p52
    %p54 = scmp.ne.s32.totalorder %s45, %s46
    %p55 = scmp.eq.s32.totalorder %s14, 0
    %p56 = por %p54, %p55
    %p57 = scmp.ne.s32.totalorder %s45, %s46
    %p58 = scmp.eq.s32.totalorder %s15, 1
    %p59 = por %p57, %p58
    %p61 = scmp.ne.s32.totalorder %s46, %s60
    %p62 = scmp.eq.s32.totalorder %s15, 0
    %p63 = por %p61, %p62
    %s65 = sadd.s32 %s64, 1
    %p68 = scmp.eq.s32.totalorder %s9, 1
    %p69 = scmp.ne.s32.totalorder %s64, %s66
    %p70 = scmp.eq.s32.totalorder %s9, 0
    %p71 = por %p69, %p70
    %p72 = scmp.ne.s32.totalorder %s64, %s66
    %p73 = scmp.eq.s32.totalorder %s14, 1
    %p74 = por %p72, %p73
    %p75 = scmp.ne.s32.totalorder %s66, %s67
    %p76 = scmp.eq.s32.totalorder %s14, 0
    %p77 = por %p75, %p76
    %p78 = scmp.ne.s32.totalorder %s66, %s67
    %p79 = scmp.eq.s32.totalorder %s15, 1
    %p80 = por %p78, %p79
    %p82 = scmp.ne.s32.totalorder %s67, %s81
    %p83 = scmp.eq.s32.totalorder %s15, 0
    %p84 = por %p82, %p83
    %s85 = ssub.s32 %s9, %s16
    %p86 = scmp.eq.s32.totalorder %s85, 0
    %s88 = sadd.s32 %s87, 1
    %s89 = scalar_select %p86, %s87, %s88
    %p92 = pneg %p86
    %p93 = scmp.eq.s32.totalorder %s9, 1
    %p94 = por %p92, %p93
    %p95 = scmp.ne.s32.totalorder %s87, %s90
    %p96 = scmp.eq.s32.totalorder %s9, 0
    %p97 = por %p95, %p96
    %p98 = scmp.ne.s32.totalorder %s87, %s90
    %p99 = scmp.eq.s32.totalorder %s14, 1
    %p100 = por %p98, %p99
    %p101 = scmp.ne.s32.totalorder %s90, %s91
    %p102 = scmp.eq.s32.totalorder %s14, 0
    %p103 = por %p101, %p102
    %p104 = scmp.ne.s32.totalorder %s90, %s91
    %p105 = scmp.eq.s32.totalorder %s15, 1
    %p106 = por %p104, %p105
    %p108 = scmp.ne.s32.totalorder %s91, %s107
    %p109 = scmp.eq.s32.totalorder %s15, 0
    %p110 = por %p108, %p109
    %p111 = scmp.le.s32.totalorder 1, %s9
    %p112 = scmp.lt.s32.totalorder %s9, 3
    %p113 = pnand %p111, %p112
    %p114 = pneg %p113
    // Predicated region
    $region9: #{vqvae_hierarchical_forward.18} parent=5 // pred_check
      _
    $region10: #{vqvae_hierarchical_forward.18} parent=5 // pred_check_branch
      %116 = sbr.rel (%p113) target = $region12
    $region11: #{vqvae_hierarchical_forward.18} parent=5 // pred_region
      %s117 = ssub.s32 %s9, 1
      // Predicated region
      $region13: #{vqvae_hierarchical_forward.18} parent=11 // pred_check
        %p118 = pneg %p56
      $region14: #{vqvae_hierarchical_forward.18} parent=11 // pred_check_branch
        %120 = sbr.rel (%p118) target = $region16
      $region15: #{vqvae_hierarchical_forward.18} parent=11 // pred_region
        _
      $region16: #{vqvae_hierarchical_forward.18} parent=11 // pred_fallthru
        _
      // Predicated region
      $region17: #{vqvae_hierarchical_forward.18} parent=11 // pred_check
        %p121 = pneg %p77
      $region18: #{vqvae_hierarchical_forward.18} parent=11 // pred_check_branch
        %123 = sbr.rel (%p121) target = $region20
      $region19: #{vqvae_hierarchical_forward.18} parent=11 // pred_region
        _
      $region20: #{vqvae_hierarchical_forward.18} parent=11 // pred_fallthru
        _
    $region12: #{vqvae_hierarchical_forward.18} parent=5 // pred_fallthru
      _
    %p124 = scmp.lt.s32.totalorder %s9, 2
    // Predicated region
    $region21: #{vqvae_hierarchical_forward.18} parent=5 // pred_check
      %p125 = pneg %p124
    $region22: #{vqvae_hierarchical_forward.18} parent=5 // pred_check_branch
      %127 = sbr.rel (%p125) target = $region24
    $region23: #{vqvae_hierarchical_forward.18} parent=5 // pred_region
      // Predicated region
      $region25: #{vqvae_hierarchical_forward.18} parent=23 // pred_check
        %p128 = pneg %p29
      $region26: #{vqvae_hierarchical_forward.18} parent=23 // pred_check_branch
        %130 = sbr.rel (%p128) target = $region28
      $region27: #{vqvae_hierarchical_forward.18} parent=23 // pred_region
        %s131 = smul.u32 12, %s9
        %p132 = scmp.lt.s32.totalorder %s131, 23
        %s133 = scalar_select %p132, %s131, 23
        %s134 = smul.addr %s133, 2
        %s135 = smul.addr %s134, 4
        %s136 = scalar_lea.vmem %s0, %s135
        %s137 = smul.u32 12, %s9
      $region28: #{vqvae_hierarchical_forward.18} parent=23 // pred_fallthru
        _
    $region24: #{vqvae_hierarchical_forward.18} parent=5 // pred_fallthru
      _
    %p138 = scmp.le.s32.totalorder 1, %s9
    %p139 = scmp.lt.s32.totalorder %s9, 3
    %p140 = pnand %p138, %p139
    %p141 = pneg %p140
    // Predicated region
    $region29: #{vqvae_hierarchical_forward.18} parent=5 // pred_check
      _
    $region30: #{vqvae_hierarchical_forward.18} parent=5 // pred_check_branch
      %143 = sbr.rel (%p140) target = $region32
    $region31: #{vqvae_hierarchical_forward.18} parent=5 // pred_region
      %s144 = ssub.s32 %s9, 1
      %s145 = smul.u32 12, %s14
      %p146 = scmp.lt.s32.totalorder %s145, 23
      %s147 = scalar_select %p146, %s145, 23
      %s148 = smul.addr %s147, 2
      %s149 = smul.addr %s148, 4
      %s150 = scalar_lea.vmem %s0, %s149
      %p151 = pneg %p35
      %p152 = pneg %p32
      %p153 = pneg %p56
      %p154 = pneg %p53
      %p155 = pneg %p77
      %p156 = pneg %p74
      %p157 = pneg %p103
      %p158 = pneg %p100
      %s159 = smul.u32 12, %s14
      %p160 = scmp.lt.s32.totalorder %s159, 23
      %s161 = scalar_select %p160, %s159, 23
      %s162 = smul.addr %s161, 4
      %s163 = scalar_lea.vmem %s3, %s162
      %s164 = smul.u32 12, %s14
      %p165 = scmp.lt.s32.totalorder %s164, 23
      %s166 = scalar_select %p165, %s164, 23
      %s167 = smul.addr %s166, 2
      %s168 = smul.addr %s167, 4
      %s169 = scalar_lea.vmem %s0, %s168
      %s170 = smul.u32 12, %s14
      %s171 = smul.u32 12, %s14
      %p172 = scmp.lt.s32.totalorder %s171, 23
      %s173 = scalar_select %p172, %s171, 23
      %s174 = smul.addr %s173, 4
      %s175 = scalar_lea.vmem %s3, %s174
      %s176 = smul.u32 12, %s14
      %v177 = vld [vmem:[%s169] sm:$0xff]
      %v178 = vld [vmem:[%s169 + $0x8] sm:$0xff]
      %v179 = vld [vmem:[%s169 + $0x10] sm:$0xff]
      %v180 = vld [vmem:[%s169 + $0x18] sm:$0xff]
      %v181 = vld [vmem:[%s169 + $0x20] sm:$0xff]
      %v182 = vld [vmem:[%s169 + $0x28] sm:$0xff]
      %v183 = vld [vmem:[%s169 + $0x30] sm:$0xff]
      %v184 = vld [vmem:[%s169 + $0x38] sm:$0xff]
      %v185 = vld [vmem:[%s169 + $0x40] sm:$0xff]
      %v186 = vld [vmem:[%s169 + $0x48] sm:$0xff]
      %v187 = vld [vmem:[%s169 + $0x50] sm:$0xff]
      %v188 = vld [vmem:[%s169 + $0x58] sm:$0xff]
      %v189 = vld [vmem:[%s1] sm:$0xf]
      %v190 = vld [vmem:[%s1 + $0x4] sm:$0xf]
      %v191 = vld [vmem:[%s1 + $0x8] sm:$0xf]
      %v192 = vld [vmem:[%s1 + $0xc] sm:$0xf]
      %v193 = vld [vmem:[%s1 + $0x10] sm:$0xf]
      %v194 = vld [vmem:[%s1 + $0x14] sm:$0xf]
      %v195 = vld [vmem:[%s1 + $0x18] sm:$0xf]
      %v196 = vld [vmem:[%s1 + $0x1c] sm:$0xf]
      %v197 = vld [vmem:[%s1 + $0x20] sm:$0xf]
      %v198 = vld [vmem:[%s1 + $0x24] sm:$0xf]
      %v199 = vld [vmem:[%s1 + $0x28] sm:$0xf]
      %v200 = vld [vmem:[%s1 + $0x2c] sm:$0xf]
      %v201 = vld [vmem:[%s1 + $0x30] sm:$0xf]
      %v202 = vld [vmem:[%s1 + $0x34] sm:$0xf]
      %v203 = vld [vmem:[%s1 + $0x38] sm:$0xf]
      %v204 = vld [vmem:[%s1 + $0x3c] sm:$0xf]
      %v205 = vld [vmem:[%s1 + $0x40] sm:$0xf]
      %v206 = vld [vmem:[%s1 + $0x44] sm:$0xf]
      %v207 = vld [vmem:[%s1 + $0x48] sm:$0xf]
      %v208 = vld [vmem:[%s1 + $0x4c] sm:$0xf]
      %v209 = vld [vmem:[%s1 + $0x50] sm:$0xf]
      %v210 = vld [vmem:[%s1 + $0x54] sm:$0xf]
      %v211 = vld [vmem:[%s1 + $0x58] sm:$0xf]
      %v212 = vld [vmem:[%s1 + $0x5c] sm:$0xf]
      %v213 = vld [vmem:[%s1 + $0x60] sm:$0xf]
      %v214 = vld [vmem:[%s1 + $0x64] sm:$0xf]
      %v215 = vld [vmem:[%s1 + $0x68] sm:$0xf]
      %v216 = vld [vmem:[%s1 + $0x6c] sm:$0xf]
      %v217 = vld [vmem:[%s1 + $0x70] sm:$0xf]
      %v218 = vld [vmem:[%s1 + $0x74] sm:$0xf]
      %v219 = vld [vmem:[%s1 + $0x78] sm:$0xf]
      %v220 = vld [vmem:[%s1 + $0x7c] sm:$0xf]
      %v221 = vld [vmem:[%s2] sm:$0x1]
      %v223 = vperm.slane %v221, 0
      %v237 = vunpack.c.l.b16 %v177
      %v238 = vunpack.c.h.b16 %v177
      %v239 = vunpack.c.l.b16 %v178
      %v240 = vunpack.c.h.b16 %v178
      %v241 = vunpack.c.l.b16 %v179
      %v242 = vunpack.c.h.b16 %v179
      %v243 = vunpack.c.l.b16 %v180
      %v244 = vunpack.c.h.b16 %v180
      %v245 = vunpack.c.l.b16 %v181
      %v246 = vunpack.c.h.b16 %v181
      %v247 = vunpack.c.l.b16 %v182
      %v248 = vunpack.c.h.b16 %v182
      %v249 = vunpack.c.l.b16 %v183
      %v250 = vunpack.c.h.b16 %v183
      %v251 = vunpack.c.l.b16 %v184
      %v252 = vunpack.c.h.b16 %v184
      %v253 = vunpack.c.l.b16 %v185
      %v254 = vunpack.c.h.b16 %v185
      %v255 = vunpack.c.l.b16 %v186
      %v256 = vunpack.c.h.b16 %v186
      %v257 = vunpack.c.l.b16 %v187
      %v258 = vunpack.c.h.b16 %v187
      %v259 = vunpack.c.l.b16 %v188
      %v260 = vunpack.c.h.b16 %v188
      %v261 = vpack.c.b16 %v239, %v237
      %v262 = vpack.c.b16 %v240, %v238
      %v263 = vpack.c.b16 %v243, %v241
      %v264 = vpack.c.b16 %v244, %v242
      %v265 = vpack.c.b16 %v247, %v245
      %v266 = vpack.c.b16 %v248, %v246
      %v267 = vpack.c.b16 %v251, %v249
      %v268 = vpack.c.b16 %v252, %v250
      %v269 = vpack.c.b16 %v255, %v253
      %v270 = vpack.c.b16 %v256, %v254
      %v271 = vpack.c.b16 %v259, %v257
      %v272 = vpack.c.b16 %v260, %v258
      %v317 = vunpack.c.l.b16 %v189
      %v318 = vunpack.c.l.b16 %v190
      %v319 = vunpack.c.l.b16 %v191
      %v320 = vunpack.c.l.b16 %v192
      %v321 = vunpack.c.l.b16 %v193
      %v322 = vunpack.c.l.b16 %v194
      %v323 = vunpack.c.l.b16 %v195
      %v324 = vunpack.c.l.b16 %v196
      %v325 = vunpack.c.l.b16 %v197
      %v326 = vunpack.c.l.b16 %v198
      %v327 = vunpack.c.l.b16 %v199
      %v328 = vunpack.c.l.b16 %v200
      %v329 = vunpack.c.l.b16 %v201
      %v330 = vunpack.c.l.b16 %v202
      %v331 = vunpack.c.l.b16 %v203
      %v332 = vunpack.c.l.b16 %v204
      %v333 = vunpack.c.l.b16 %v205
      %v334 = vunpack.c.l.b16 %v206
      %v335 = vunpack.c.l.b16 %v207
      %v336 = vunpack.c.l.b16 %v208
      %v337 = vunpack.c.l.b16 %v209
      %v338 = vunpack.c.l.b16 %v210
      %v339 = vunpack.c.l.b16 %v211
      %v340 = vunpack.c.l.b16 %v212
      %v341 = vunpack.c.l.b16 %v213
      %v342 = vunpack.c.l.b16 %v214
      %v343 = vunpack.c.l.b16 %v215
      %v344 = vunpack.c.l.b16 %v216
      %v345 = vunpack.c.l.b16 %v217
      %v346 = vunpack.c.l.b16 %v218
      %v347 = vunpack.c.l.b16 %v219
      %v348 = vunpack.c.l.b16 %v220
      %v349 = vpack.c.b16 %v318, %v317
      %v350 = vpack.c.b16 %v320, %v319
      %v351 = vpack.c.b16 %v322, %v321
      %v352 = vpack.c.b16 %v324, %v323
      %v353 = vpack.c.b16 %v326, %v325
      %v354 = vpack.c.b16 %v328, %v327
      %v355 = vpack.c.b16 %v330, %v329
      %v356 = vpack.c.b16 %v332, %v331
      %v357 = vpack.c.b16 %v334, %v333
      %v358 = vpack.c.b16 %v336, %v335
      %v359 = vpack.c.b16 %v338, %v337
      %v360 = vpack.c.b16 %v340, %v339
      %v361 = vpack.c.b16 %v342, %v341
      %v362 = vpack.c.b16 %v344, %v343
      %v363 = vpack.c.b16 %v346, %v345
      %v364 = vpack.c.b16 %v348, %v347
      %381 = vmatpush.bf16.msra.mxu0 %v356
      %382 = vmatpush.bf16.msra.mxu0 %v355
      %383 = vmatpush.bf16.msra.mxu0 %v354
      %384 = vmatpush.bf16.msra.mxu0 %v353
      %385 = vmatpush.bf16.msra.mxu0 %v352
      %386 = vmatpush.bf16.msra.mxu0 %v351
      %387 = vmatpush.bf16.msra.mxu0 %v350
      %388 = vmatpush.bf16.msra.mxu0 %v349
      %389 = vmatmul.bf16.gmra.mxu0 %v261
      %v390 = vpop.f32.mrf.mxu0
      %v391 = vadd.f32 %v223, %v390
      %v392 = vpop.f32.mrf.mxu0
      %v393 = vadd.f32 %v223, %v392
      %394 = vmatmul.bf16.gmra.mxu0 %v263
      %v395 = vpop.f32.mrf.mxu0
      %v396 = vadd.f32 %v223, %v395
      %v397 = vpop.f32.mrf.mxu0
      %v398 = vadd.f32 %v223, %v397
      %399 = vmatmul.bf16.gmra.mxu0 %v265
      %v400 = vpop.f32.mrf.mxu0
      %v401 = vadd.f32 %v223, %v400
      %v402 = vpop.f32.mrf.mxu0
      %v403 = vadd.f32 %v223, %v402
      %404 = vmatmul.bf16.gmra.mxu0 %v267
      %v405 = vpop.f32.mrf.mxu0
      %v406 = vadd.f32 %v223, %v405
      %v407 = vpop.f32.mrf.mxu0
      %v408 = vadd.f32 %v223, %v407
      %409 = vmatmul.bf16.gmra.mxu0 %v269
      %v410 = vpop.f32.mrf.mxu0
      %v411 = vadd.f32 %v223, %v410
      %v412 = vpop.f32.mrf.mxu0
      %v413 = vadd.f32 %v223, %v412
      %414 = vmatmul.bf16.gmra.mxu0 %v271
      %v415 = vpop.f32.mrf.mxu0
      %v416 = vadd.f32 %v223, %v415
      %v417 = vpop.f32.mrf.mxu0
      %v418 = vadd.f32 %v223, %v417
      %419 = vdwg.mxu0
      %420 = vmatpush.bf16.msra.mxu0 %v364
      %421 = vmatpush.bf16.msra.mxu0 %v363
      %422 = vmatpush.bf16.msra.mxu0 %v362
      %423 = vmatpush.bf16.msra.mxu0 %v361
      %424 = vmatpush.bf16.msra.mxu0 %v360
      %425 = vmatpush.bf16.msra.mxu0 %v359
      %426 = vmatpush.bf16.msra.mxu0 %v358
      %427 = vmatpush.bf16.msra.mxu0 %v357
      %428 = vmatmul.bf16.gmra.mxu0 %v262
      %v429 = vpop.f32.mrf.mxu0
      %v430 = vadd.f32 %v391, %v429
      %v431 = vpop.f32.mrf.mxu0
      %v432 = vadd.f32 %v393, %v431
      %433 = vmatmul.bf16.gmra.mxu0 %v264
      %v434 = vpop.f32.mrf.mxu0
      %v435 = vadd.f32 %v396, %v434
      %v436 = vpop.f32.mrf.mxu0
      %v437 = vadd.f32 %v398, %v436
      %438 = vmatmul.bf16.gmra.mxu0 %v266
      %v439 = vpop.f32.mrf.mxu0
      %v440 = vadd.f32 %v401, %v439
      %v441 = vpop.f32.mrf.mxu0
      %v442 = vadd.f32 %v403, %v441
      %443 = vmatmul.bf16.gmra.mxu0 %v268
      %v444 = vpop.f32.mrf.mxu0
      %v445 = vadd.f32 %v406, %v444
      %v446 = vpop.f32.mrf.mxu0
      %v447 = vadd.f32 %v408, %v446
      %448 = vmatmul.bf16.gmra.mxu0 %v270
      %v449 = vpop.f32.mrf.mxu0
      %v450 = vadd.f32 %v411, %v449
      %v451 = vpop.f32.mrf.mxu0
      %v452 = vadd.f32 %v413, %v451
      %453 = vmatmul.bf16.gmra.mxu0 %v272
      %v454 = vpop.f32.mrf.mxu0
      %v455 = vadd.f32 %v416, %v454
      %v456 = vpop.f32.mrf.mxu0
      %v457 = vadd.f32 %v418, %v456
      %458 = vdwg.mxu0
      %v459 = vmax.f32 %v430, 0.0
      %v460 = vmax.f32 %v432, 0.0
      %v461 = vmax.f32 %v435, 0.0
      %v462 = vmax.f32 %v437, 0.0
      %v463 = vmax.f32 %v440, 0.0
      %v464 = vmax.f32 %v442, 0.0
      %v465 = vmax.f32 %v445, 0.0
      %v466 = vmax.f32 %v447, 0.0
      %v467 = vmax.f32 %v450, 0.0
      %v468 = vmax.f32 %v452, 0.0
      %v469 = vmax.f32 %v455, 0.0
      %v470 = vmax.f32 %v457, 0.0
      %v471 = vpack.c.bf16 %v459, %v459
      %v472 = vpack.c.bf16 %v460, %v460
      %v473 = vpack.c.bf16 %v461, %v461
      %v474 = vpack.c.bf16 %v462, %v462
      %v475 = vpack.c.bf16 %v463, %v463
      %v476 = vpack.c.bf16 %v464, %v464
      %v477 = vpack.c.bf16 %v465, %v465
      %v478 = vpack.c.bf16 %v466, %v466
      %v479 = vpack.c.bf16 %v467, %v467
      %v480 = vpack.c.bf16 %v468, %v468
      %v481 = vpack.c.bf16 %v469, %v469
      %v482 = vpack.c.bf16 %v470, %v470
      %483 = vst [vmem:[%s175] sm:$0xf] %v471
      %484 = vst [vmem:[%s175 + $0x4] sm:$0xf] %v472
      %485 = vst [vmem:[%s175 + $0x8] sm:$0xf] %v473
      %486 = vst [vmem:[%s175 + $0xc] sm:$0xf] %v474
      %487 = vst [vmem:[%s175 + $0x10] sm:$0xf] %v475
      %488 = vst [vmem:[%s175 + $0x14] sm:$0xf] %v476
      %489 = vst [vmem:[%s175 + $0x18] sm:$0xf] %v477
      %490 = vst [vmem:[%s175 + $0x1c] sm:$0xf] %v478
      %491 = vst [vmem:[%s175 + $0x20] sm:$0xf] %v479
      %492 = vst [vmem:[%s175 + $0x24] sm:$0xf] %v480
      %493 = vst [vmem:[%s175 + $0x28] sm:$0xf] %v481
      %494 = vst [vmem:[%s175 + $0x2c] sm:$0xf] %v482
      %s495 = smul.u32 12, %s14
      %p496 = scmp.lt.s32.totalorder %s495, 23
      %s497 = scalar_select %p496, %s495, 23
      %s498 = smul.addr %s497, 4
      %s499 = scalar_lea.vmem %s3, %s498
      // Predicated region
      $region33: #{vqvae_hierarchical_forward.18} parent=31 // pred_check
        %p500 = pneg %p100
      $region34: #{vqvae_hierarchical_forward.18} parent=31 // pred_check_branch
        %502 = sbr.rel (%p500) target = $region36
      $region35: #{vqvae_hierarchical_forward.18} parent=31 // pred_region
        %s503 = smul.u32 12, %s14
      $region36: #{vqvae_hierarchical_forward.18} parent=31 // pred_fallthru
        _
    $region32: #{vqvae_hierarchical_forward.18} parent=5 // pred_fallthru
      _
    %p504 = scmp.le.s32.totalorder 2, %s9
    // Predicated region
    $region37: #{vqvae_hierarchical_forward.18} parent=5 // pred_check
      %p505 = pneg %p504
    $region38: #{vqvae_hierarchical_forward.18} parent=5 // pred_check_branch
      %507 = sbr.rel (%p505) target = $region40
    $region39: #{vqvae_hierarchical_forward.18} parent=5 // pred_region
      %s508 = ssub.s32 %s9, 2
      // Predicated region
      $region41: #{vqvae_hierarchical_forward.18} parent=39 // pred_check
        %p509 = pneg %p106
      $region42: #{vqvae_hierarchical_forward.18} parent=39 // pred_check_branch
        %511 = sbr.rel (%p509) target = $region44
      $region43: #{vqvae_hierarchical_forward.18} parent=39 // pred_region
        %s512 = smul.u32 12, %s15
        %p513 = scmp.lt.s32.totalorder %s512, 23
        %s514 = scalar_select %p513, %s512, 23
        %s515 = smul.addr %s514, 4
        %s516 = scalar_lea.vmem %s3, %s515
      $region44: #{vqvae_hierarchical_forward.18} parent=39 // pred_fallthru
        _
    $region40: #{vqvae_hierarchical_forward.18} parent=5 // pred_fallthru
      _
  $region6: #{vqvae_hierarchical_forward.18} parent=0 // loop_footer
    %s13 = sadd.s32 1, %s9
  $region7: #{vqvae_hierarchical_forward.18} parent=0 // loop_footer_branch
    %8 = sbr.rel target = $region3
  $region8: #{vqvae_hierarchical_forward.18} parent=0 // loop_exit
    _

// kernel: vqvae_hierarchical_forward.17
$region0: #{vqvae_hierarchical_forward.17}
  #allocation0 [shape = 'u32[]', space=smem, size = 0x4, offset = 0x4, fixed_abs, tag = 'smem constant byte address 0x4 - core index']
  #allocation1 [shape = 'u32[72,128]{1,0:T(1,128)}', space=vmem, size = 0x9000, scoped, tag = 'internal scratch']
  %s0 = inlined_call_operand.vmem [shape: f32[128,128], index: 0, kind: input, shape index: {}]
  %s1 = inlined_call_operand.vmem [shape: f32[128,128], index: 1, kind: input, shape index: {}]
  %s2 = inlined_call_operand.vmem [shape: f32[128,128], index: 2, kind: output, shape index: {0}]
  %s3 = inlined_call_operand.vmem [shape: s32[128,1], index: 3, kind: output, shape index: {1}]
  %s4 = inlined_call_operand.hbm [shape: f32[1,1], index: 4, kind: output, shape index: {2}]
  %s5 = inlined_call_operand.vmem [shape: f32[1,128], index: 5, kind: output, shape index: {3}]
  %6 = xla_tuple %s2, %s3, %s4, %s5
  %s7 = sld [smem:[#allocation0]]
  $region46: #{vqvae_hierarchical_forward.17} parent=0
    _
  %s9 = ssub.s32 1, %s7
  %s10 = scalar_select 0, %s9, %s7
  $region1: #{vqvae_hierarchical_forward.17} parent=0
    #allocation2 [shape = 'u8[512]{0}', space=vmem, size = 0x400, scoped, tag = 'output window, operand 2, single buffered']
    #allocation3 [shape = 's32[1]{0}', space=sflag, size = 0x4, scoped, tag = 'scoped memory for vqvae_hierarchical_forward.17']
    %11 = vsyncpa [#allocation3], 0
    // Predicated region
    $region2: #{vqvae_hierarchical_forward.17} parent=1 // pred_check
      _
    $region3: #{vqvae_hierarchical_forward.17} parent=1 // pred_check_branch
      %13 = sbr.rel (0) target = $region5
    $region4: #{vqvae_hierarchical_forward.17} parent=1 // pred_region
      _
    $region5: #{vqvae_hierarchical_forward.17} parent=1 // pred_fallthru
      _
    // Predicated region
    $region6: #{vqvae_hierarchical_forward.17} parent=1 // pred_check
      _
    $region7: #{vqvae_hierarchical_forward.17} parent=1 // pred_check_branch
      %15 = sbr.rel (0) target = $region9
    $region8: #{vqvae_hierarchical_forward.17} parent=1 // pred_region
      _
    $region9: #{vqvae_hierarchical_forward.17} parent=1 // pred_fallthru
      _
    %v16 = vld [vmem:[%s0] sm:$0xff]
    %v17 = vld [vmem:[%s0 + $0x8] sm:$0xff]
    %v18 = vld [vmem:[%s0 + $0x10] sm:$0xff]
    %v19 = vld [vmem:[%s0 + $0x18] sm:$0xff]
    %v20 = vld [vmem:[%s0 + $0x20] sm:$0xff]
    %v21 = vld [vmem:[%s0 + $0x28] sm:$0xff]
    %v22 = vld [vmem:[%s0 + $0x30] sm:$0xff]
    %v23 = vld [vmem:[%s0 + $0x38] sm:$0xff]
    %v24 = vld [vmem:[%s0 + $0x40] sm:$0xff]
    %v25 = vld [vmem:[%s0 + $0x48] sm:$0xff]
    %v26 = vld [vmem:[%s0 + $0x50] sm:$0xff]
    %v27 = vld [vmem:[%s0 + $0x58] sm:$0xff]
    %v28 = vld [vmem:[%s0 + $0x60] sm:$0xff]
    %v29 = vld [vmem:[%s0 + $0x68] sm:$0xff]
    %v30 = vld [vmem:[%s0 + $0x70] sm:$0xff]
    %v31 = vld [vmem:[%s0 + $0x78] sm:$0xff]
    %v32 = vld [vmem:[%s1] sm:$0xff]
    %v33 = vld [vmem:[%s1 + $0x8] sm:$0xff]
    %v34 = vld [vmem:[%s1 + $0x10] sm:$0xff]
    %v35 = vld [vmem:[%s1 + $0x18] sm:$0xff]
    %v36 = vld [vmem:[%s1 + $0x20] sm:$0xff]
    %v37 = vld [vmem:[%s1 + $0x28] sm:$0xff]
    %v38 = vld [vmem:[%s1 + $0x30] sm:$0xff]
    %v39 = vld [vmem:[%s1 + $0x38] sm:$0xff]
    %v40 = vld [vmem:[%s1 + $0x40] sm:$0xff]
    %v41 = vld [vmem:[%s1 + $0x48] sm:$0xff]
    %v42 = vld [vmem:[%s1 + $0x50] sm:$0xff]
    %v43 = vld [vmem:[%s1 + $0x58] sm:$0xff]
    %v44 = vld [vmem:[%s1 + $0x60] sm:$0xff]
    %v45 = vld [vmem:[%s1 + $0x68] sm:$0xff]
    %v46 = vld [vmem:[%s1 + $0x70] sm:$0xff]
    %v47 = vld [vmem:[%s1 + $0x78] sm:$0xff]
    %v48 = vmul.f32 %v16, %v16
    %v49 = vmul.f32 %v17, %v17
    %v50 = vmul.f32 %v18, %v18
    %v51 = vmul.f32 %v19, %v19
    %v52 = vmul.f32 %v20, %v20
    %v53 = vmul.f32 %v21, %v21
    %v54 = vmul.f32 %v22, %v22
    %v55 = vmul.f32 %v23, %v23
    %v56 = vmul.f32 %v24, %v24
    %v57 = vmul.f32 %v25, %v25
    %v58 = vmul.f32 %v26, %v26
    %v59 = vmul.f32 %v27, %v27
    %v60 = vmul.f32 %v28, %v28
    %v61 = vmul.f32 %v29, %v29
    %v62 = vmul.f32 %v30, %v30
    %v63 = vmul.f32 %v31, %v31
    %64 = vadd.xlane.f32.xlu0 %v48
    %v65 = vpop.xlane.xlu0 %64
    %66 = vadd.xlane.f32.xlu0 %v49
    %v67 = vpop.xlane.xlu0 %66
    %68 = vadd.xlane.f32.xlu0 %v50
    %v69 = vpop.xlane.xlu0 %68
    %70 = vadd.xlane.f32.xlu0 %v51
    %v71 = vpop.xlane.xlu0 %70
    %72 = vadd.xlane.f32.xlu0 %v52
    %v73 = vpop.xlane.xlu0 %72
    %74 = vadd.xlane.f32.xlu0 %v53
    %v75 = vpop.xlane.xlu0 %74
    %76 = vadd.xlane.f32.xlu0 %v54
    %v77 = vpop.xlane.xlu0 %76
    %78 = vadd.xlane.f32.xlu0 %v55
    %v79 = vpop.xlane.xlu0 %78
    %80 = vadd.xlane.f32.xlu0 %v56
    %v81 = vpop.xlane.xlu0 %80
    %82 = vadd.xlane.f32.xlu0 %v57
    %v83 = vpop.xlane.xlu0 %82
    %84 = vadd.xlane.f32.xlu0 %v58
    %v85 = vpop.xlane.xlu0 %84
    %86 = vadd.xlane.f32.xlu0 %v59
    %v87 = vpop.xlane.xlu0 %86
    %88 = vadd.xlane.f32.xlu0 %v60
    %v89 = vpop.xlane.xlu0 %88
    %90 = vadd.xlane.f32.xlu0 %v61
    %v91 = vpop.xlane.xlu0 %90
    %92 = vadd.xlane.f32.xlu0 %v62
    %v93 = vpop.xlane.xlu0 %92
    %94 = vadd.xlane.f32.xlu0 %v63
    %v95 = vpop.xlane.xlu0 %94
    %v96 = vmul.f32 %v32, %v32
    %v97 = vmul.f32 %v33, %v33
    %v98 = vmul.f32 %v34, %v34
    %v99 = vmul.f32 %v35, %v35
    %v100 = vmul.f32 %v36, %v36
    %v101 = vmul.f32 %v37, %v37
    %v102 = vmul.f32 %v38, %v38
    %v103 = vmul.f32 %v39, %v39
    %v104 = vmul.f32 %v40, %v40
    %v105 = vmul.f32 %v41, %v41
    %v106 = vmul.f32 %v42, %v42
    %v107 = vmul.f32 %v43, %v43
    %v108 = vmul.f32 %v44, %v44
    %v109 = vmul.f32 %v45, %v45
    %v110 = vmul.f32 %v46, %v46
    %v111 = vmul.f32 %v47, %v47
    %112 = vadd.xlane.f32.xlu0 %v96
    %v113 = vpop.xlane.xlu0 %112
    %114 = vadd.xlane.f32.xlu0 %v97
    %v115 = vpop.xlane.xlu0 %114
    %116 = vadd.xlane.f32.xlu0 %v98
    %v117 = vpop.xlane.xlu0 %116
    %118 = vadd.xlane.f32.xlu0 %v99
    %v119 = vpop.xlane.xlu0 %118
    %120 = vadd.xlane.f32.xlu0 %v100
    %v121 = vpop.xlane.xlu0 %120
    %122 = vadd.xlane.f32.xlu0 %v101
    %v123 = vpop.xlane.xlu0 %122
    %124 = vadd.xlane.f32.xlu0 %v102
    %v125 = vpop.xlane.xlu0 %124
    %126 = vadd.xlane.f32.xlu0 %v103
    %v127 = vpop.xlane.xlu0 %126
    %128 = vadd.xlane.f32.xlu0 %v104
    %v129 = vpop.xlane.xlu0 %128
    %130 = vadd.xlane.f32.xlu0 %v105
    %v131 = vpop.xlane.xlu0 %130
    %132 = vadd.xlane.f32.xlu0 %v106
    %v133 = vpop.xlane.xlu0 %132
    %134 = vadd.xlane.f32.xlu0 %v107
    %v135 = vpop.xlane.xlu0 %134
    %136 = vadd.xlane.f32.xlu0 %v108
    %v137 = vpop.xlane.xlu0 %136
    %138 = vadd.xlane.f32.xlu0 %v109
    %v139 = vpop.xlane.xlu0 %138
    %140 = vadd.xlane.f32.xlu0 %v110
    %v141 = vpop.xlane.xlu0 %140
    %142 = vadd.xlane.f32.xlu0 %v111
    %v143 = vpop.xlane.xlu0 %142
    %v144 = vpack.c.bf16 %v17, %v16
    %v145 = vpack.c.bf16 %v19, %v18
    %v146 = vpack.c.bf16 %v21, %v20
    %v147 = vpack.c.bf16 %v23, %v22
    %v148 = vpack.c.bf16 %v25, %v24
    %v149 = vpack.c.bf16 %v27, %v26
    %v150 = vpack.c.bf16 %v29, %v28
    %v151 = vpack.c.bf16 %v31, %v30
    %v152 = vpack.c.bf16 %v33, %v32
    %v153 = vpack.c.bf16 %v35, %v34
    %v154 = vpack.c.bf16 %v37, %v36
    %v155 = vpack.c.bf16 %v39, %v38
    %v156 = vpack.c.bf16 %v41, %v40
    %v157 = vpack.c.bf16 %v43, %v42
    %v158 = vpack.c.bf16 %v45, %v44
    %v159 = vpack.c.bf16 %v47, %v46
    %160 = vmatpush.bf16.xpose.msra.mxu0 %v159
    %161 = vmatpush.bf16.xpose.msra.mxu0 %v158
    %162 = vmatpush.bf16.xpose.msra.mxu0 %v157
    %163 = vmatpush.bf16.xpose.msra.mxu0 %v156
    %164 = vmatpush.bf16.xpose.msra.mxu0 %v155
    %165 = vmatpush.bf16.xpose.msra.mxu0 %v154
    %166 = vmatpush.bf16.xpose.msra.mxu0 %v153
    %167 = vmatpush.bf16.xpose.msra.mxu0 %v152
    %168 = vmatmul.bf16.gmra.mxu0 %v144
    %v169 = vpop.f32.mrf.mxu0
    %v170 = vadd.f32 0.0, %v169
    %v171 = vpop.f32.mrf.mxu0
    %v172 = vadd.f32 0.0, %v171
    %173 = vmatmul.bf16.gmra.mxu0 %v145
    %v174 = vpop.f32.mrf.mxu0
    %v175 = vadd.f32 0.0, %v174
    %v176 = vpop.f32.mrf.mxu0
    %v177 = vadd.f32 0.0, %v176
    %178 = vmatmul.bf16.gmra.mxu0 %v146
    %v179 = vpop.f32.mrf.mxu0
    %v180 = vadd.f32 0.0, %v179
    %v181 = vpop.f32.mrf.mxu0
    %v182 = vadd.f32 0.0, %v181
    %183 = vmatmul.bf16.gmra.mxu0 %v147
    %v184 = vpop.f32.mrf.mxu0
    %v185 = vadd.f32 0.0, %v184
    %v186 = vpop.f32.mrf.mxu0
    %v187 = vadd.f32 0.0, %v186
    %188 = vmatmul.bf16.gmra.mxu0 %v148
    %v189 = vpop.f32.mrf.mxu0
    %v190 = vadd.f32 0.0, %v189
    %v191 = vpop.f32.mrf.mxu0
    %v192 = vadd.f32 0.0, %v191
    %193 = vmatmul.bf16.gmra.mxu0 %v149
    %v194 = vpop.f32.mrf.mxu0
    %v195 = vadd.f32 0.0, %v194
    %v196 = vpop.f32.mrf.mxu0
    %v197 = vadd.f32 0.0, %v196
    %198 = vmatmul.bf16.gmra.mxu0 %v150
    %v199 = vpop.f32.mrf.mxu0
    %v200 = vadd.f32 0.0, %v199
    %v201 = vpop.f32.mrf.mxu0
    %v202 = vadd.f32 0.0, %v201
    %203 = vmatmul.bf16.gmra.mxu0 %v151
    %v204 = vpop.f32.mrf.mxu0
    %v205 = vadd.f32 0.0, %v204
    %v206 = vpop.f32.mrf.mxu0
    %v207 = vadd.f32 0.0, %v206
    %208 = vdwg.mxu0
    %v209 = vmul.f32 %v170, 2.0
    %v210 = vmul.f32 %v172, 2.0
    %v211 = vmul.f32 %v175, 2.0
    %v212 = vmul.f32 %v177, 2.0
    %v213 = vmul.f32 %v180, 2.0
    %v214 = vmul.f32 %v182, 2.0
    %v215 = vmul.f32 %v185, 2.0
    %v216 = vmul.f32 %v187, 2.0
    %v217 = vmul.f32 %v190, 2.0
    %v218 = vmul.f32 %v192, 2.0
    %v219 = vmul.f32 %v195, 2.0
    %v220 = vmul.f32 %v197, 2.0
    %v221 = vmul.f32 %v200, 2.0
    %v222 = vmul.f32 %v202, 2.0
    %v223 = vmul.f32 %v205, 2.0
    %v224 = vmul.f32 %v207, 2.0
    %v225 = vsub.f32 %v65, %v209
    %v226 = vsub.f32 %v67, %v210
    %v227 = vsub.f32 %v69, %v211
    %v228 = vsub.f32 %v71, %v212
    %v229 = vsub.f32 %v73, %v213
    %v230 = vsub.f32 %v75, %v214
    %v231 = vsub.f32 %v77, %v215
    %v232 = vsub.f32 %v79, %v216
    %v233 = vsub.f32 %v81, %v217
    %v234 = vsub.f32 %v83, %v218
    %v235 = vsub.f32 %v85, %v219
    %v236 = vsub.f32 %v87, %v220
    %v237 = vsub.f32 %v89, %v221
    %v238 = vsub.f32 %v91, %v222
    %v239 = vsub.f32 %v93, %v223
    %v240 = vsub.f32 %v95, %v224
    %v257 = vlaneseq
    %v258 = vand.u32 %v257, 127
    %v259 = vperm.slane %v113, %v258
    %v260 = vadd.s32 %v258, 4294967288
    %v261 = vperm.slane %v115, %v260
    %vm262 = vcmask 130112
    %v263 = vsel %vm262, %v261, %v259
    %v264 = vadd.s32 %v258, 4294967280
    %v265 = vperm.slane %v117, %v264
    %vm266 = vcmask 195712
    %v267 = vsel %vm266, %v265, %v263
    %v268 = vadd.s32 %v258, 4294967272
    %v269 = vperm.slane %v119, %v268
    %vm270 = vcmask 261312
    %v271 = vsel %vm270, %v269, %v267
    %v272 = vadd.s32 %v258, 4294967264
    %v273 = vperm.slane %v121, %v272
    %vm274 = vcmask 326912
    %v275 = vsel %vm274, %v273, %v271
    %v276 = vadd.s32 %v258, 4294967256
    %v277 = vperm.slane %v123, %v276
    %vm278 = vcmask 392512
    %v279 = vsel %vm278, %v277, %v275
    %v280 = vadd.s32 %v258, 4294967248
    %v281 = vperm.slane %v125, %v280
    %vm282 = vcmask 458112
    %v283 = vsel %vm282, %v281, %v279
    %v284 = vadd.s32 %v258, 4294967240
    %v285 = vperm.slane %v127, %v284
    %vm286 = vcmask 523712
    %v287 = vsel %vm286, %v285, %v283
    %v288 = vadd.s32 %v258, 4294967232
    %v289 = vperm.slane %v129, %v288
    %vm290 = vcmask 589312
    %v291 = vsel %vm290, %v289, %v287
    %v292 = vadd.s32 %v258, 4294967224
    %v293 = vperm.slane %v131, %v292
    %vm294 = vcmask 654912
    %v295 = vsel %vm294, %v293, %v291
    %v296 = vadd.s32 %v258, 4294967216
    %v297 = vperm.slane %v133, %v296
    %vm298 = vcmask 720512
    %v299 = vsel %vm298, %v297, %v295
    %v300 = vadd.s32 %v258, 4294967208
    %v301 = vperm.slane %v135, %v300
    %vm302 = vcmask 786112
    %v303 = vsel %vm302, %v301, %v299
    %v304 = vadd.s32 %v258, 4294967200
    %v305 = vperm.slane %v137, %v304
    %vm306 = vcmask 851712
    %v307 = vsel %vm306, %v305, %v303
    %v308 = vadd.s32 %v258, 4294967192
    %v309 = vperm.slane %v139, %v308
    %vm310 = vcmask 917312
    %v311 = vsel %vm310, %v309, %v307
    %v312 = vadd.s32 %v258, 4294967184
    %v313 = vperm.slane %v141, %v312
    %vm314 = vcmask 982912
    %v315 = vsel %vm314, %v313, %v311
    %v316 = vadd.s32 %v258, 4294967176
    %v317 = vperm.slane %v143, %v316
    %vm318 = vcmask 1048512
    %v319 = vsel %vm318, %v317, %v315
    %vm320 = vcmask 1042434
    %v321 = vsel %vm320, %v319, %v319
    %vm322 = vcmask 1043459
    %v323 = vsel %vm322, %v319, %v321
    %vm324 = vcmask 1044484
    %v325 = vsel %vm324, %v319, %v323
    %vm326 = vcmask 1045509
    %v327 = vsel %vm326, %v319, %v325
    %vm328 = vcmask 1046534
    %v329 = vsel %vm328, %v319, %v327
    %vm330 = vcmask 1047559
    %v331 = vsel %vm330, %v319, %v329
    %v333 = vadd.f32 %v225, %v331
    %v334 = vadd.f32 %v226, %v331
    %v335 = vadd.f32 %v227, %v331
    %v336 = vadd.f32 %v228, %v331
    %v337 = vadd.f32 %v229, %v331
    %v338 = vadd.f32 %v230, %v331
    %v339 = vadd.f32 %v231, %v331
    %v340 = vadd.f32 %v232, %v331
    %v341 = vadd.f32 %v233, %v331
    %v342 = vadd.f32 %v234, %v331
    %v343 = vadd.f32 %v235, %v331
    %v344 = vadd.f32 %v236, %v331
    %v345 = vadd.f32 %v237, %v331
    %v346 = vadd.f32 %v238, %v331
    %v347 = vadd.f32 %v239, %v331
    %v348 = vadd.f32 %v240, %v331
    %vm349 = vcmp.lt.s32.totalorder %v258, 64
    %v350 = vsel %vm349, %v333, 1e+30
    %v351 = vsel %vm349, %v334, 1e+30
    %v352 = vsel %vm349, %v335, 1e+30
    %v353 = vsel %vm349, %v336, 1e+30
    %v354 = vsel %vm349, %v337, 1e+30
    %v355 = vsel %vm349, %v338, 1e+30
    %v356 = vsel %vm349, %v339, 1e+30
    %v357 = vsel %vm349, %v340, 1e+30
    %v358 = vsel %vm349, %v341, 1e+30
    %v359 = vsel %vm349, %v342, 1e+30
    %v360 = vsel %vm349, %v343, 1e+30
    %v361 = vsel %vm349, %v344, 1e+30
    %v362 = vsel %vm349, %v345, 1e+30
    %v363 = vsel %vm349, %v346, 1e+30
    %v364 = vsel %vm349, %v347, 1e+30
    %v365 = vsel %vm349, %v348, 1e+30
    %366 = vmin.index.xlane.f32.xlu0 %v350
    %v367 = vpop.xlane.xlu0 %366
    %368 = vmin.index.xlane.f32.xlu0 %v351
    %v369 = vpop.xlane.xlu0 %368
    %370 = vmin.index.xlane.f32.xlu0 %v352
    %v371 = vpop.xlane.xlu0 %370
    %372 = vmin.index.xlane.f32.xlu0 %v353
    %v373 = vpop.xlane.xlu0 %372
    %374 = vmin.index.xlane.f32.xlu0 %v354
    %v375 = vpop.xlane.xlu0 %374
    %376 = vmin.index.xlane.f32.xlu0 %v355
    %v377 = vpop.xlane.xlu0 %376
    %378 = vmin.index.xlane.f32.xlu0 %v356
    %v379 = vpop.xlane.xlu0 %378
    %380 = vmin.index.xlane.f32.xlu0 %v357
    %v381 = vpop.xlane.xlu0 %380
    %382 = vmin.index.xlane.f32.xlu0 %v358
    %v383 = vpop.xlane.xlu0 %382
    %384 = vmin.index.xlane.f32.xlu0 %v359
    %v385 = vpop.xlane.xlu0 %384
    %386 = vmin.index.xlane.f32.xlu0 %v360
    %v387 = vpop.xlane.xlu0 %386
    %388 = vmin.index.xlane.f32.xlu0 %v361
    %v389 = vpop.xlane.xlu0 %388
    %390 = vmin.index.xlane.f32.xlu0 %v362
    %v391 = vpop.xlane.xlu0 %390
    %392 = vmin.index.xlane.f32.xlu0 %v363
    %v393 = vpop.xlane.xlu0 %392
    %394 = vmin.index.xlane.f32.xlu0 %v364
    %v395 = vpop.xlane.xlu0 %394
    %396 = vmin.index.xlane.f32.xlu0 %v365
    %v397 = vpop.xlane.xlu0 %396
    %vm398 = vcmp.eq.s32.totalorder %v367, %v258
    %vm399 = vcmp.eq.s32.totalorder %v369, %v258
    %vm400 = vcmp.eq.s32.totalorder %v371, %v258
    %vm401 = vcmp.eq.s32.totalorder %v373, %v258
    %vm402 = vcmp.eq.s32.totalorder %v375, %v258
    %vm403 = vcmp.eq.s32.totalorder %v377, %v258
    %vm404 = vcmp.eq.s32.totalorder %v379, %v258
    %vm405 = vcmp.eq.s32.totalorder %v381, %v258
    %vm406 = vcmp.eq.s32.totalorder %v383, %v258
    %vm407 = vcmp.eq.s32.totalorder %v385, %v258
    %vm408 = vcmp.eq.s32.totalorder %v387, %v258
    %vm409 = vcmp.eq.s32.totalorder %v389, %v258
    %vm410 = vcmp.eq.s32.totalorder %v391, %v258
    %vm411 = vcmp.eq.s32.totalorder %v393, %v258
    %vm412 = vcmp.eq.s32.totalorder %v395, %v258
    %vm413 = vcmp.eq.s32.totalorder %v397, %v258
    %v414 = vsel %vm398, 1, 0
    %v415 = vsel %vm399, 1, 0
    %v416 = vsel %vm400, 1, 0
    %v417 = vsel %vm401, 1, 0
    %v418 = vsel %vm402, 1, 0
    %v419 = vsel %vm403, 1, 0
    %v420 = vsel %vm404, 1, 0
    %v421 = vsel %vm405, 1, 0
    %v422 = vsel %vm406, 1, 0
    %v423 = vsel %vm407, 1, 0
    %v424 = vsel %vm408, 1, 0
    %v425 = vsel %vm409, 1, 0
    %v426 = vsel %vm410, 1, 0
    %v427 = vsel %vm411, 1, 0
    %v428 = vsel %vm412, 1, 0
    %v429 = vsel %vm413, 1, 0
    %v430 = vcvt.s32.f32 %v414
    %v431 = vcvt.s32.f32 %v415
    %v432 = vcvt.s32.f32 %v416
    %v433 = vcvt.s32.f32 %v417
    %v434 = vcvt.s32.f32 %v418
    %v435 = vcvt.s32.f32 %v419
    %v436 = vcvt.s32.f32 %v420
    %v437 = vcvt.s32.f32 %v421
    %v438 = vcvt.s32.f32 %v422
    %v439 = vcvt.s32.f32 %v423
    %v440 = vcvt.s32.f32 %v424
    %v441 = vcvt.s32.f32 %v425
    %v442 = vcvt.s32.f32 %v426
    %v443 = vcvt.s32.f32 %v427
    %v444 = vcvt.s32.f32 %v428
    %v445 = vcvt.s32.f32 %v429
    %446 = vmatpush.msra.mxu0 %v47
    %447 = vmatpush.msra.mxu0 %v46
    %448 = vmatpush.msra.mxu0 %v45
    %449 = vmatpush.msra.mxu0 %v44
    %450 = vmatpush.msra.mxu0 %v43
    %451 = vmatpush.msra.mxu0 %v42
    %452 = vmatpush.msra.mxu0 %v41
    %453 = vmatpush.msra.mxu0 %v40
    %454 = vmatpush.msra.mxu0 %v39
    %455 = vmatpush.msra.mxu0 %v38
    %456 = vmatpush.msra.mxu0 %v37
    %457 = vmatpush.msra.mxu0 %v36
    %458 = vmatpush.msra.mxu0 %v35
    %459 = vmatpush.msra.mxu0 %v34
    %460 = vmatpush.msra.mxu0 %v33
    %461 = vmatpush.msra.mxu0 %v32
    %462 = vmatmul.f32.gmra.mxu0 %v430
    %v463 = vpop.f32.mrf.mxu0
    %v464 = vadd.f32 0.0, %v463
    %465 = vmatmul.f32.gmra.mxu0 %v431
    %v466 = vpop.f32.mrf.mxu0
    %v467 = vadd.f32 0.0, %v466
    %468 = vmatmul.f32.gmra.mxu0 %v432
    %v469 = vpop.f32.mrf.mxu0
    %v470 = vadd.f32 0.0, %v469
    %471 = vmatmul.f32.gmra.mxu0 %v433
    %v472 = vpop.f32.mrf.mxu0
    %v473 = vadd.f32 0.0, %v472
    %474 = vmatmul.f32.gmra.mxu0 %v434
    %v475 = vpop.f32.mrf.mxu0
    %v476 = vadd.f32 0.0, %v475
    %477 = vmatmul.f32.gmra.mxu0 %v435
    %v478 = vpop.f32.mrf.mxu0
    %v479 = vadd.f32 0.0, %v478
    %480 = vmatmul.f32.gmra.mxu0 %v436
    %v481 = vpop.f32.mrf.mxu0
    %v482 = vadd.f32 0.0, %v481
    %483 = vmatmul.f32.gmra.mxu0 %v437
    %v484 = vpop.f32.mrf.mxu0
    %v485 = vadd.f32 0.0, %v484
    %486 = vmatmul.f32.gmra.mxu0 %v438
    %v487 = vpop.f32.mrf.mxu0
    %v488 = vadd.f32 0.0, %v487
    %489 = vmatmul.f32.gmra.mxu0 %v439
    %v490 = vpop.f32.mrf.mxu0
    %v491 = vadd.f32 0.0, %v490
    %492 = vmatmul.f32.gmra.mxu0 %v440
    %v493 = vpop.f32.mrf.mxu0
    %v494 = vadd.f32 0.0, %v493
    %495 = vmatmul.f32.gmra.mxu0 %v441
    %v496 = vpop.f32.mrf.mxu0
    %v497 = vadd.f32 0.0, %v496
    %498 = vmatmul.f32.gmra.mxu0 %v442
    %v499 = vpop.f32.mrf.mxu0
    %v500 = vadd.f32 0.0, %v499
    %501 = vmatmul.f32.gmra.mxu0 %v443
    %v502 = vpop.f32.mrf.mxu0
    %v503 = vadd.f32 0.0, %v502
    %504 = vmatmul.f32.gmra.mxu0 %v444
    %v505 = vpop.f32.mrf.mxu0
    %v506 = vadd.f32 0.0, %v505
    %507 = vmatmul.f32.gmra.mxu0 %v445
    %v508 = vpop.f32.mrf.mxu0
    %v509 = vadd.f32 0.0, %v508
    %510 = vdwg.mxu0
    %511 = vst [vmem:[%s2] sm:$0xff] %v464
    %512 = vst [vmem:[%s2 + $0x8] sm:$0xff] %v467
    %513 = vst [vmem:[%s2 + $0x10] sm:$0xff] %v470
    %514 = vst [vmem:[%s2 + $0x18] sm:$0xff] %v473
    %515 = vst [vmem:[%s2 + $0x20] sm:$0xff] %v476
    %516 = vst [vmem:[%s2 + $0x28] sm:$0xff] %v479
    %517 = vst [vmem:[%s2 + $0x30] sm:$0xff] %v482
    %518 = vst [vmem:[%s2 + $0x38] sm:$0xff] %v485
    %519 = vst [vmem:[%s2 + $0x40] sm:$0xff] %v488
    %520 = vst [vmem:[%s2 + $0x48] sm:$0xff] %v491
    %521 = vst [vmem:[%s2 + $0x50] sm:$0xff] %v494
    %522 = vst [vmem:[%s2 + $0x58] sm:$0xff] %v497
    %523 = vst [vmem:[%s2 + $0x60] sm:$0xff] %v500
    %524 = vst [vmem:[%s2 + $0x68] sm:$0xff] %v503
    %525 = vst [vmem:[%s2 + $0x70] sm:$0xff] %v506
    %526 = vst [vmem:[%s2 + $0x78] sm:$0xff] %v509
    %vm527 = vcmask 7168
    %528 = vst.msk [vmem:[%s3] sm:$0xff] %vm527, %v367
    %529 = vst.msk [vmem:[%s3 + $0x8] sm:$0xff] %vm527, %v369
    %530 = vst.msk [vmem:[%s3 + $0x10] sm:$0xff] %vm527, %v371
    %531 = vst.msk [vmem:[%s3 + $0x18] sm:$0xff] %vm527, %v373
    %532 = vst.msk [vmem:[%s3 + $0x20] sm:$0xff] %vm527, %v375
    %533 = vst.msk [vmem:[%s3 + $0x28] sm:$0xff] %vm527, %v377
    %534 = vst.msk [vmem:[%s3 + $0x30] sm:$0xff] %vm527, %v379
    %535 = vst.msk [vmem:[%s3 + $0x38] sm:$0xff] %vm527, %v381
    %536 = vst.msk [vmem:[%s3 + $0x40] sm:$0xff] %vm527, %v383
    %537 = vst.msk [vmem:[%s3 + $0x48] sm:$0xff] %vm527, %v385
    %538 = vst.msk [vmem:[%s3 + $0x50] sm:$0xff] %vm527, %v387
    %539 = vst.msk [vmem:[%s3 + $0x58] sm:$0xff] %vm527, %v389
    %540 = vst.msk [vmem:[%s3 + $0x60] sm:$0xff] %vm527, %v391
    %541 = vst.msk [vmem:[%s3 + $0x68] sm:$0xff] %vm527, %v393
    %542 = vst.msk [vmem:[%s3 + $0x70] sm:$0xff] %vm527, %v395
    %543 = vst.msk [vmem:[%s3 + $0x78] sm:$0xff] %vm527, %v397
    %s544 = smul.u32 0, 128
    %v545 = vlaneseq
    %v546 = vshrl.u32 %v545, 7
    %v547 = vadd.s32 %v546, 8
    %v548 = vadd.s32 %v546, 16
    %v549 = vadd.s32 %v546, 24
    %v550 = vadd.s32 %v546, 32
    %v551 = vadd.s32 %v546, 40
    %v552 = vadd.s32 %v546, 48
    %v553 = vadd.s32 %v546, 56
    %v554 = vadd.s32 %v546, 64
    %v555 = vadd.s32 %v546, 72
    %v556 = vadd.s32 %v546, 80
    %v557 = vadd.s32 %v546, 88
    %v558 = vadd.s32 %v546, 96
    %v559 = vadd.s32 %v546, 104
    %v560 = vadd.s32 %v546, 112
    %v561 = vadd.s32 %v546, 120
    %v562 = vstv %s544
    %v563 = vadd.s32 %v562, %v546
    %v564 = vadd.s32 %v562, %v547
    %v565 = vadd.s32 %v562, %v548
    %v566 = vadd.s32 %v562, %v549
    %v567 = vadd.s32 %v562, %v550
    %v568 = vadd.s32 %v562, %v551
    %v569 = vadd.s32 %v562, %v552
    %v570 = vadd.s32 %v562, %v553
    %v571 = vadd.s32 %v562, %v554
    %v572 = vadd.s32 %v562, %v555
    %v573 = vadd.s32 %v562, %v556
    %v574 = vadd.s32 %v562, %v557
    %v575 = vadd.s32 %v562, %v558
    %v576 = vadd.s32 %v562, %v559
    %v577 = vadd.s32 %v562, %v560
    %v578 = vadd.s32 %v562, %v561
    %vm579 = vcmp.lt.s32.totalorder %v563, 128
    %vm580 = vcmp.lt.s32.totalorder %v564, 128
    %vm581 = vcmp.lt.s32.totalorder %v565, 128
    %vm582 = vcmp.lt.s32.totalorder %v566, 128
    %vm583 = vcmp.lt.s32.totalorder %v567, 128
    %vm584 = vcmp.lt.s32.totalorder %v568, 128
    %vm585 = vcmp.lt.s32.totalorder %v569, 128
    %vm586 = vcmp.lt.s32.totalorder %v570, 128
    %vm587 = vcmp.lt.s32.totalorder %v571, 128
    %vm588 = vcmp.lt.s32.totalorder %v572, 128
    %vm589 = vcmp.lt.s32.totalorder %v573, 128
    %vm590 = vcmp.lt.s32.totalorder %v574, 128
    %vm591 = vcmp.lt.s32.totalorder %v575, 128
    %vm592 = vcmp.lt.s32.totalorder %v576, 128
    %vm593 = vcmp.lt.s32.totalorder %v577, 128
    %vm594 = vcmp.lt.s32.totalorder %v578, 128
    %v595 = vsel %vm579, 1, 0
    %v596 = vsel %vm580, 1, 0
    %v597 = vsel %vm581, 1, 0
    %v598 = vsel %vm582, 1, 0
    %v599 = vsel %vm583, 1, 0
    %v600 = vsel %vm584, 1, 0
    %v601 = vsel %vm585, 1, 0
    %v602 = vsel %vm586, 1, 0
    %v603 = vsel %vm587, 1, 0
    %v604 = vsel %vm588, 1, 0
    %v605 = vsel %vm589, 1, 0
    %v606 = vsel %vm590, 1, 0
    %v607 = vsel %vm591, 1, 0
    %v608 = vsel %vm592, 1, 0
    %v609 = vsel %vm593, 1, 0
    %v610 = vsel %vm594, 1, 0
    %v611 = vcvt.s32.f32 %v595
    %v612 = vcvt.s32.f32 %v596
    %v613 = vcvt.s32.f32 %v597
    %v614 = vcvt.s32.f32 %v598
    %v615 = vcvt.s32.f32 %v599
    %v616 = vcvt.s32.f32 %v600
    %v617 = vcvt.s32.f32 %v601
    %v618 = vcvt.s32.f32 %v602
    %v619 = vcvt.s32.f32 %v603
    %v620 = vcvt.s32.f32 %v604
    %v621 = vcvt.s32.f32 %v605
    %v622 = vcvt.s32.f32 %v606
    %v623 = vcvt.s32.f32 %v607
    %v624 = vcvt.s32.f32 %v608
    %v625 = vcvt.s32.f32 %v609
    %v626 = vcvt.s32.f32 %v610
    %p627 = scmp.eq.s32.totalorder 0, 0
    // Predicated region
    $region10: #{vqvae_hierarchical_forward.17} parent=1 // pred_check
      %p628 = pneg %p627
    $region11: #{vqvae_hierarchical_forward.17} parent=1 // pred_check_branch
      %630 = sbr.rel (%p628) target = $region13
    $region12: #{vqvae_hierarchical_forward.17} parent=1 // pred_region
      %vm631 = vcmask 0
      %632 = vst.msk [vmem:[#allocation2] sm:$0x1] %vm631, 0.0
      %633 = vst [vmem:[%s5] sm:$0x1] 0.0
    $region13: #{vqvae_hierarchical_forward.17} parent=1 // pred_fallthru
      _
    %v634 = vsub.f32 %v16, %v464
    %v635 = vsub.f32 %v17, %v467
    %v636 = vsub.f32 %v18, %v470
    %v637 = vsub.f32 %v19, %v473
    %v638 = vsub.f32 %v20, %v476
    %v639 = vsub.f32 %v21, %v479
    %v640 = vsub.f32 %v22, %v482
    %v641 = vsub.f32 %v23, %v485
    %v642 = vsub.f32 %v24, %v488
    %v643 = vsub.f32 %v25, %v491
    %v644 = vsub.f32 %v26, %v494
    %v645 = vsub.f32 %v27, %v497
    %v646 = vsub.f32 %v28, %v500
    %v647 = vsub.f32 %v29, %v503
    %v648 = vsub.f32 %v30, %v506
    %v649 = vsub.f32 %v31, %v509
    %v650 = vmul.f32 %v634, %v611
    %v651 = vmul.f32 %v635, %v612
    %v652 = vmul.f32 %v636, %v613
    %v653 = vmul.f32 %v637, %v614
    %v654 = vmul.f32 %v638, %v615
    %v655 = vmul.f32 %v639, %v616
    %v656 = vmul.f32 %v640, %v617
    %v657 = vmul.f32 %v641, %v618
    %v658 = vmul.f32 %v642, %v619
    %v659 = vmul.f32 %v643, %v620
    %v660 = vmul.f32 %v644, %v621
    %v661 = vmul.f32 %v645, %v622
    %v662 = vmul.f32 %v646, %v623
    %v663 = vmul.f32 %v647, %v624
    %v664 = vmul.f32 %v648, %v625
    %v665 = vmul.f32 %v649, %v626
    %v666 = vld [vmem:[#allocation2] sm:$0x1]
    %v667 = vmul.f32 %v650, %v650
    %v668 = vmul.f32 %v651, %v651
    %v669 = vmul.f32 %v652, %v652
    %v670 = vmul.f32 %v653, %v653
    %v671 = vmul.f32 %v654, %v654
    %v672 = vmul.f32 %v655, %v655
    %v673 = vmul.f32 %v656, %v656
    %v674 = vmul.f32 %v657, %v657
    %v675 = vmul.f32 %v658, %v658
    %v676 = vmul.f32 %v659, %v659
    %v677 = vmul.f32 %v660, %v660
    %v678 = vmul.f32 %v661, %v661
    %v679 = vmul.f32 %v662, %v662
    %v680 = vmul.f32 %v663, %v663
    %v681 = vmul.f32 %v664, %v664
    %v682 = vmul.f32 %v665, %v665
    %v683 = vadd.f32 %v667, %v668
    %v684 = vadd.f32 %v683, %v669
    %v685 = vadd.f32 %v684, %v670
    %v686 = vadd.f32 %v685, %v671
    %v687 = vadd.f32 %v686, %v672
    %v688 = vadd.f32 %v687, %v673
    %v689 = vadd.f32 %v688, %v674
    %v690 = vadd.f32 %v689, %v675
    %v691 = vadd.f32 %v690, %v676
    %v692 = vadd.f32 %v691, %v677
    %v693 = vadd.f32 %v692, %v678
    %v694 = vadd.f32 %v693, %v679
    %v695 = vadd.f32 %v694, %v680
    %v696 = vadd.f32 %v695, %v681
    %v697 = vadd.f32 %v696, %v682
    %698 = vadd.xlane.f32.xlu0 %v697
    %v699 = vpop.xlane.xlu0 %698
    %v700 = vrot.slane %v699, 4
    %v701 = vadd.f32 %v699, %v700
    %v702 = vrot.slane %v701, 2
    %v703 = vadd.f32 %v701, %v702
    %v704 = vrot.slane %v703, 1
    %v705 = vadd.f32 %v703, %v704
    %s706 = vtos %v705
    %v707 = vstv %s706
    %v708 = vadd.f32 %v666, %v707
    %vm709 = vcmask 0
    %710 = vst.msk [vmem:[#allocation2] sm:$0x1] %vm709, %v708
    %v711 = vld [vmem:[%s5] sm:$0x1]
    %v712 = vmul.f32 %v430, %v611
    %v713 = vmul.f32 %v431, %v612
    %v714 = vmul.f32 %v432, %v613
    %v715 = vmul.f32 %v433, %v614
    %v716 = vmul.f32 %v434, %v615
    %v717 = vmul.f32 %v435, %v616
    %v718 = vmul.f32 %v436, %v617
    %v719 = vmul.f32 %v437, %v618
    %v720 = vmul.f32 %v438, %v619
    %v721 = vmul.f32 %v439, %v620
    %v722 = vmul.f32 %v440, %v621
    %v723 = vmul.f32 %v441, %v622
    %v724 = vmul.f32 %v442, %v623
    %v725 = vmul.f32 %v443, %v624
    %v726 = vmul.f32 %v444, %v625
    %v727 = vmul.f32 %v445, %v626
    %v728 = vadd.f32 %v712, %v713
    %v729 = vadd.f32 %v728, %v714
    %v730 = vadd.f32 %v729, %v715
    %v731 = vadd.f32 %v730, %v716
    %v732 = vadd.f32 %v731, %v717
    %v733 = vadd.f32 %v732, %v718
    %v734 = vadd.f32 %v733, %v719
    %v735 = vadd.f32 %v734, %v720
    %v736 = vadd.f32 %v735, %v721
    %v737 = vadd.f32 %v736, %v722
    %v738 = vadd.f32 %v737, %v723
    %v739 = vadd.f32 %v738, %v724
    %v740 = vadd.f32 %v739, %v725
    %v741 = vadd.f32 %v740, %v726
    %v742 = vadd.f32 %v741, %v727
    %v743 = vrot.slane %v742, 4
    %v744 = vadd.f32 %v742, %v743
    %v745 = vrot.slane %v744, 2
    %v746 = vadd.f32 %v744, %v745
    %v747 = vrot.slane %v746, 1
    %v748 = vadd.f32 %v746, %v747
    %v749 = vadd.f32 %v711, %v748
    %750 = vst [vmem:[%s5] sm:$0x1] %v749
    // Predicated region
    $region14: #{vqvae_hierarchical_forward.17} parent=1 // pred_check
      _
    $region15: #{vqvae_hierarchical_forward.17} parent=1 // pred_check_branch
      %752 = sbr.rel (0) target = $region17
    $region16: #{vqvae_hierarchical_forward.17} parent=1 // pred_region
      _
    $region17: #{vqvae_hierarchical_forward.17} parent=1 // pred_fallthru
      _
    // Predicated region
    $region18: #{vqvae_hierarchical_forward.17} parent=1 // pred_check
      _
    $region19: #{vqvae_hierarchical_forward.17} parent=1 // pred_check_branch
      %754 = sbr.rel (0) target = $region21
    $region20: #{vqvae_hierarchical_forward.17} parent=1 // pred_region
      _
    $region21: #{vqvae_hierarchical_forward.17} parent=1 // pred_fallthru
      _
    // Predicated region
    $region22: #{vqvae_hierarchical_forward.17} parent=1 // pred_check
      _
    $region23: #{vqvae_hierarchical_forward.17} parent=1 // pred_check_branch
      %756 = sbr.rel (0) target = $region25
    $region24: #{vqvae_hierarchical_forward.17} parent=1 // pred_region
      %758 = vsyncadd [#allocation3], 0
      %s760 = sshll.u32 [#allocation2], 4
      %s761 = int_to_ptr.vmem [resolvable:$true] %s760
      %s762 = sshll.u32 %s4, 4
      %s763 = int_to_ptr.hbm [resolvable:$true] %s762
      %765 = dma.vmem_to_hbm [thread:$0]  %s761, 16, %s763, [#allocation3]
    $region25: #{vqvae_hierarchical_forward.17} parent=1 // pred_fallthru
      _
    // Predicated region
    $region26: #{vqvae_hierarchical_forward.17} parent=1 // pred_check
      _
    $region27: #{vqvae_hierarchical_forward.17} parent=1 // pred_check_branch
      %767 = sbr.rel (0) target = $region29
    $region28: #{vqvae_hierarchical_forward.17} parent=1 // pred_region
      _
    $region29: #{vqvae_hierarchical_forward.17} parent=1 // pred_fallthru
      _
    // Predicated region
    $region30: #{vqvae_hierarchical_forward.17} parent=1 // pred_check
      _
    $region31: #{vqvae_hierarchical_forward.17} parent=1 // pred_check_branch
      %769 = sbr.rel (0) target = $region33
    $region32: #{vqvae_hierarchical_forward.17} parent=1 // pred_region
      _
    $region33: #{vqvae_hierarchical_forward.17} parent=1 // pred_fallthru
      _
    // Predicated region
    $region34: #{vqvae_hierarchical_forward.17} parent=1 // pred_check
      _
    $region35: #{vqvae_hierarchical_forward.17} parent=1 // pred_check_branch
      %771 = sbr.rel (0) target = $region37
    $region36: #{vqvae_hierarchical_forward.17} parent=1 // pred_region
      _
    $region37: #{vqvae_hierarchical_forward.17} parent=1 // pred_fallthru
      _
    // Predicated region
    $region38: #{vqvae_hierarchical_forward.17} parent=1 // pred_check
      _
    $region39: #{vqvae_hierarchical_forward.17} parent=1 // pred_check_branch
      %773 = sbr.rel (0) target = $region41
    $region40: #{vqvae_hierarchical_forward.17} parent=1 // pred_region
      %775 = dma.done [#allocation3], 16
    $region41: #{vqvae_hierarchical_forward.17} parent=1 // pred_fallthru
      _
    // Predicated region
    $region42: #{vqvae_hierarchical_forward.17} parent=1 // pred_check
      _
    $region43: #{vqvae_hierarchical_forward.17} parent=1 // pred_check_branch
      %777 = sbr.rel (0) target = $region45
    $region44: #{vqvae_hierarchical_forward.17} parent=1 // pred_region
      _
    $region45: #{vqvae_hierarchical_forward.17} parent=1 // pred_fallthru
      _
    %778 = vsyncpa [#allocation3], 1

// kernel: vqvae_hierarchical_forward.19
$region0: #{vqvae_hierarchical_forward.19}
  #allocation0 [shape = 'u32[]', space=smem, size = 0x4, offset = 0x4, fixed_abs, tag = 'smem constant byte address 0x4 - core index']
  #allocation1 [shape = 'u32[72,128]{1,0:T(1,128)}', space=vmem, size = 0x9000, scoped, tag = 'internal scratch']
  %s0 = inlined_call_operand.vmem [shape: bf16[512,384], index: 0, kind: input, shape index: {}]
  %s1 = inlined_call_operand.vmem [shape: bf16[384,128], index: 1, kind: input, shape index: {}]
  %s2 = inlined_call_operand.vmem [shape: f32[1,128], index: 2, kind: input, shape index: {}]
  %s3 = inlined_call_operand.vmem [shape: f32[512,128], index: 3, kind: output, shape index: {}]
  %s4 = sld [smem:[#allocation0]]
  $region45: #{vqvae_hierarchical_forward.19} parent=0
    _
  %s6 = ssub.s32 1, %s4
  %s7 = scalar_select 0, %s6, %s4
  loop: start=0, step=1, limit=4
  $region2: #{vqvae_hierarchical_forward.19} parent=0 // loop_pre_header
    _
  $region3: #{vqvae_hierarchical_forward.19} parent=0 // loop_header
    %s9 = sphi 0, %s13
    %p10 = scmp.ge.s32.totalorder %s9, 4
    %s19 = sphi 0, %s21
    %s22 = sphi 0, %s19
    %s23 = sphi 0, %s22
    %s39 = sphi 0, %s23
    %s43 = sphi 0, %s43
    %s45 = sphi 0, %s43
    %s46 = sphi 0, %s45
    %s60 = sphi 0, %s46
    %s64 = sphi 0, %s64
    %s66 = sphi 0, %s64
    %s67 = sphi 0, %s66
    %s81 = sphi 0, %s67
    %s87 = sphi 0, %s89
    %s90 = sphi 0, %s87
    %s91 = sphi 0, %s90
    %s107 = sphi 0, %s91
  $region4: #{vqvae_hierarchical_forward.19} parent=0 // loop_header_branch
    %12 = sbr.rel (%p10) target = $region8
  $region5: #{vqvae_hierarchical_forward.19} parent=0 // loop_body
    %s14 = ssub.s32 %s9, 1
    %s15 = ssub.s32 %s9, 2
    %s16 = sadd.s32 %s9, 1
    %s17 = ssub.s32 %s9, %s16
    %p18 = scmp.eq.s32.totalorder %s17, 0
    %s20 = sadd.s32 %s19, 1
    %s21 = scalar_select %p18, %s19, %s20
    %p24 = pneg %p18
    %p25 = scmp.eq.s32.totalorder %s9, 1
    %p26 = por %p24, %p25
    %p27 = scmp.ne.s32.totalorder %s19, %s22
    %p28 = scmp.eq.s32.totalorder %s9, 0
    %p29 = por %p27, %p28
    %p30 = scmp.ne.s32.totalorder %s19, %s22
    %p31 = scmp.eq.s32.totalorder %s14, 1
    %p32 = por %p30, %p31
    %p33 = scmp.ne.s32.totalorder %s22, %s23
    %p34 = scmp.eq.s32.totalorder %s14, 0
    %p35 = por %p33, %p34
    %p36 = scmp.ne.s32.totalorder %s22, %s23
    %p37 = scmp.eq.s32.totalorder %s15, 1
    %p38 = por %p36, %p37
    %p40 = scmp.ne.s32.totalorder %s23, %s39
    %p41 = scmp.eq.s32.totalorder %s15, 0
    %p42 = por %p40, %p41
    %s44 = sadd.s32 %s43, 1
    %p47 = scmp.eq.s32.totalorder %s9, 1
    %p48 = scmp.ne.s32.totalorder %s43, %s45
    %p49 = scmp.eq.s32.totalorder %s9, 0
    %p50 = por %p48, %p49
    %p51 = scmp.ne.s32.totalorder %s43, %s45
    %p52 = scmp.eq.s32.totalorder %s14, 1
    %p53 = por %p51, %p52
    %p54 = scmp.ne.s32.totalorder %s45, %s46
    %p55 = scmp.eq.s32.totalorder %s14, 0
    %p56 = por %p54, %p55
    %p57 = scmp.ne.s32.totalorder %s45, %s46
    %p58 = scmp.eq.s32.totalorder %s15, 1
    %p59 = por %p57, %p58
    %p61 = scmp.ne.s32.totalorder %s46, %s60
    %p62 = scmp.eq.s32.totalorder %s15, 0
    %p63 = por %p61, %p62
    %s65 = sadd.s32 %s64, 1
    %p68 = scmp.eq.s32.totalorder %s9, 1
    %p69 = scmp.ne.s32.totalorder %s64, %s66
    %p70 = scmp.eq.s32.totalorder %s9, 0
    %p71 = por %p69, %p70
    %p72 = scmp.ne.s32.totalorder %s64, %s66
    %p73 = scmp.eq.s32.totalorder %s14, 1
    %p74 = por %p72, %p73
    %p75 = scmp.ne.s32.totalorder %s66, %s67
    %p76 = scmp.eq.s32.totalorder %s14, 0
    %p77 = por %p75, %p76
    %p78 = scmp.ne.s32.totalorder %s66, %s67
    %p79 = scmp.eq.s32.totalorder %s15, 1
    %p80 = por %p78, %p79
    %p82 = scmp.ne.s32.totalorder %s67, %s81
    %p83 = scmp.eq.s32.totalorder %s15, 0
    %p84 = por %p82, %p83
    %s85 = ssub.s32 %s9, %s16
    %p86 = scmp.eq.s32.totalorder %s85, 0
    %s88 = sadd.s32 %s87, 1
    %s89 = scalar_select %p86, %s87, %s88
    %p92 = pneg %p86
    %p93 = scmp.eq.s32.totalorder %s9, 1
    %p94 = por %p92, %p93
    %p95 = scmp.ne.s32.totalorder %s87, %s90
    %p96 = scmp.eq.s32.totalorder %s9, 0
    %p97 = por %p95, %p96
    %p98 = scmp.ne.s32.totalorder %s87, %s90
    %p99 = scmp.eq.s32.totalorder %s14, 1
    %p100 = por %p98, %p99
    %p101 = scmp.ne.s32.totalorder %s90, %s91
    %p102 = scmp.eq.s32.totalorder %s14, 0
    %p103 = por %p101, %p102
    %p104 = scmp.ne.s32.totalorder %s90, %s91
    %p105 = scmp.eq.s32.totalorder %s15, 1
    %p106 = por %p104, %p105
    %p108 = scmp.ne.s32.totalorder %s91, %s107
    %p109 = scmp.eq.s32.totalorder %s15, 0
    %p110 = por %p108, %p109
    %p111 = scmp.le.s32.totalorder 1, %s9
    %p112 = scmp.lt.s32.totalorder %s9, 3
    %p113 = pnand %p111, %p112
    %p114 = pneg %p113
    // Predicated region
    $region9: #{vqvae_hierarchical_forward.19} parent=5 // pred_check
      _
    $region10: #{vqvae_hierarchical_forward.19} parent=5 // pred_check_branch
      %116 = sbr.rel (%p113) target = $region12
    $region11: #{vqvae_hierarchical_forward.19} parent=5 // pred_region
      %s117 = ssub.s32 %s9, 1
      // Predicated region
      $region13: #{vqvae_hierarchical_forward.19} parent=11 // pred_check
        %p118 = pneg %p56
      $region14: #{vqvae_hierarchical_forward.19} parent=11 // pred_check_branch
        %120 = sbr.rel (%p118) target = $region16
      $region15: #{vqvae_hierarchical_forward.19} parent=11 // pred_region
        _
      $region16: #{vqvae_hierarchical_forward.19} parent=11 // pred_fallthru
        _
      // Predicated region
      $region17: #{vqvae_hierarchical_forward.19} parent=11 // pred_check
        %p121 = pneg %p77
      $region18: #{vqvae_hierarchical_forward.19} parent=11 // pred_check_branch
        %123 = sbr.rel (%p121) target = $region20
      $region19: #{vqvae_hierarchical_forward.19} parent=11 // pred_region
        _
      $region20: #{vqvae_hierarchical_forward.19} parent=11 // pred_fallthru
        _
    $region12: #{vqvae_hierarchical_forward.19} parent=5 // pred_fallthru
      _
    %p124 = scmp.lt.s32.totalorder %s9, 2
    // Predicated region
    $region21: #{vqvae_hierarchical_forward.19} parent=5 // pred_check
      %p125 = pneg %p124
    $region22: #{vqvae_hierarchical_forward.19} parent=5 // pred_check_branch
      %127 = sbr.rel (%p125) target = $region24
    $region23: #{vqvae_hierarchical_forward.19} parent=5 // pred_region
      // Predicated region
      $region25: #{vqvae_hierarchical_forward.19} parent=23 // pred_check
        %p128 = pneg %p29
      $region26: #{vqvae_hierarchical_forward.19} parent=23 // pred_check_branch
        %130 = sbr.rel (%p128) target = $region28
      $region27: #{vqvae_hierarchical_forward.19} parent=23 // pred_region
        %s131 = smul.u32 32, %s9
        %p132 = scmp.lt.s32.totalorder %s131, 63
        %s133 = scalar_select %p132, %s131, 63
        %s134 = smul.addr %s133, 3
        %s135 = smul.addr %s134, 4
        %s136 = scalar_lea.vmem %s0, %s135
        %s137 = smul.u32 32, %s9
      $region28: #{vqvae_hierarchical_forward.19} parent=23 // pred_fallthru
        _
    $region24: #{vqvae_hierarchical_forward.19} parent=5 // pred_fallthru
      _
    %p138 = scmp.le.s32.totalorder 1, %s9
    %p139 = scmp.lt.s32.totalorder %s9, 3
    %p140 = pnand %p138, %p139
    %p141 = pneg %p140
    // Predicated region
    $region29: #{vqvae_hierarchical_forward.19} parent=5 // pred_check
      _
    $region30: #{vqvae_hierarchical_forward.19} parent=5 // pred_check_branch
      %143 = sbr.rel (%p140) target = $region32
    $region31: #{vqvae_hierarchical_forward.19} parent=5 // pred_region
      %s144 = ssub.s32 %s9, 1
      %s145 = smul.u32 32, %s14
      %p146 = scmp.lt.s32.totalorder %s145, 63
      %s147 = scalar_select %p146, %s145, 63
      %s148 = smul.addr %s147, 3
      %s149 = smul.addr %s148, 4
      %s150 = scalar_lea.vmem %s0, %s149
      %p151 = pneg %p35
      %p152 = pneg %p32
      %p153 = pneg %p56
      %p154 = pneg %p53
      %p155 = pneg %p77
      %p156 = pneg %p74
      %p157 = pneg %p103
      %p158 = pneg %p100
      %s159 = smul.u32 32, %s14
      %p160 = scmp.lt.s32.totalorder %s159, 63
      %s161 = scalar_select %p160, %s159, 63
      %s162 = smul.addr %s161, 8
      %s163 = scalar_lea.vmem %s3, %s162
      %s164 = smul.u32 32, %s14
      %p165 = scmp.lt.s32.totalorder %s164, 63
      %s166 = scalar_select %p165, %s164, 63
      %s167 = smul.addr %s166, 3
      %s168 = smul.addr %s167, 4
      %s169 = scalar_lea.vmem %s0, %s168
      %s170 = smul.u32 32, %s14
      %s171 = smul.u32 32, %s14
      %p172 = scmp.lt.s32.totalorder %s171, 63
      %s173 = scalar_select %p172, %s171, 63
      %s174 = smul.addr %s173, 8
      %s175 = scalar_lea.vmem %s3, %s174
      %s176 = smul.u32 32, %s14
      %v177 = vld [vmem:[%s169] sm:$0xff]
      %v178 = vld [vmem:[%s169 + $0x8] sm:$0xf]
      %v179 = vld [vmem:[%s169 + $0xc] sm:$0xff]
      %v180 = vld [vmem:[%s169 + $0x14] sm:$0xf]
      %v181 = vld [vmem:[%s169 + $0x18] sm:$0xff]
      %v182 = vld [vmem:[%s169 + $0x20] sm:$0xf]
      %v183 = vld [vmem:[%s169 + $0x24] sm:$0xff]
      %v184 = vld [vmem:[%s169 + $0x2c] sm:$0xf]
      %v185 = vld [vmem:[%s169 + $0x30] sm:$0xff]
      %v186 = vld [vmem:[%s169 + $0x38] sm:$0xf]
      %v187 = vld [vmem:[%s169 + $0x3c] sm:$0xff]
      %v188 = vld [vmem:[%s169 + $0x44] sm:$0xf]
      %v189 = vld [vmem:[%s169 + $0x48] sm:$0xff]
      %v190 = vld [vmem:[%s169 + $0x50] sm:$0xf]
      %v191 = vld [vmem:[%s169 + $0x54] sm:$0xff]
      %v192 = vld [vmem:[%s169 + $0x5c] sm:$0xf]
      %v193 = vld [vmem:[%s169 + $0x60] sm:$0xff]
      %v194 = vld [vmem:[%s169 + $0x68] sm:$0xf]
      %v195 = vld [vmem:[%s169 + $0x6c] sm:$0xff]
      %v196 = vld [vmem:[%s169 + $0x74] sm:$0xf]
      %v197 = vld [vmem:[%s169 + $0x78] sm:$0xff]
      %v198 = vld [vmem:[%s169 + $0x80] sm:$0xf]
      %v199 = vld [vmem:[%s169 + $0x84] sm:$0xff]
      %v200 = vld [vmem:[%s169 + $0x8c] sm:$0xf]
      %v201 = vld [vmem:[%s169 + $0x90] sm:$0xff]
      %v202 = vld [vmem:[%s169 + $0x98] sm:$0xf]
      %v203 = vld [vmem:[%s169 + $0x9c] sm:$0xff]
      %v204 = vld [vmem:[%s169 + $0xa4] sm:$0xf]
      %v205 = vld [vmem:[%s169 + $0xa8] sm:$0xff]
      %v206 = vld [vmem:[%s169 + $0xb0] sm:$0xf]
      %v207 = vld [vmem:[%s169 + $0xb4] sm:$0xff]
      %v208 = vld [vmem:[%s169 + $0xbc] sm:$0xf]
      %v209 = vld [vmem:[%s169 + $0xc0] sm:$0xff]
      %v210 = vld [vmem:[%s169 + $0xc8] sm:$0xf]
      %v211 = vld [vmem:[%s169 + $0xcc] sm:$0xff]
      %v212 = vld [vmem:[%s169 + $0xd4] sm:$0xf]
      %v213 = vld [vmem:[%s169 + $0xd8] sm:$0xff]
      %v214 = vld [vmem:[%s169 + $0xe0] sm:$0xf]
      %v215 = vld [vmem:[%s169 + $0xe4] sm:$0xff]
      %v216 = vld [vmem:[%s169 + $0xec] sm:$0xf]
      %v217 = vld [vmem:[%s169 + $0xf0] sm:$0xff]
      %v218 = vld [vmem:[%s169 + $0xf8] sm:$0xf]
      %v219 = vld [vmem:[%s169 + $0xfc] sm:$0xff]
      %v220 = vld [vmem:[%s169 + $0x104] sm:$0xf]
      %v221 = vld [vmem:[%s169 + $0x108] sm:$0xff]
      %v222 = vld [vmem:[%s169 + $0x110] sm:$0xf]
      %v223 = vld [vmem:[%s169 + $0x114] sm:$0xff]
      %v224 = vld [vmem:[%s169 + $0x11c] sm:$0xf]
      %v225 = vld [vmem:[%s169 + $0x120] sm:$0xff]
      %v226 = vld [vmem:[%s169 + $0x128] sm:$0xf]
      %v227 = vld [vmem:[%s169 + $0x12c] sm:$0xff]
      %v228 = vld [vmem:[%s169 + $0x134] sm:$0xf]
      %v229 = vld [vmem:[%s169 + $0x138] sm:$0xff]
      %v230 = vld [vmem:[%s169 + $0x140] sm:$0xf]
      %v231 = vld [vmem:[%s169 + $0x144] sm:$0xff]
      %v232 = vld [vmem:[%s169 + $0x14c] sm:$0xf]
      %v233 = vld [vmem:[%s169 + $0x150] sm:$0xff]
      %v234 = vld [vmem:[%s169 + $0x158] sm:$0xf]
      %v235 = vld [vmem:[%s169 + $0x15c] sm:$0xff]
      %v236 = vld [vmem:[%s169 + $0x164] sm:$0xf]
      %v237 = vld [vmem:[%s169 + $0x168] sm:$0xff]
      %v238 = vld [vmem:[%s169 + $0x170] sm:$0xf]
      %v239 = vld [vmem:[%s169 + $0x174] sm:$0xff]
      %v240 = vld [vmem:[%s169 + $0x17c] sm:$0xf]
      %v241 = vld [vmem:[%s1] sm:$0xf]
      %v242 = vld [vmem:[%s1 + $0x4] sm:$0xf]
      %v243 = vld [vmem:[%s1 + $0x8] sm:$0xf]
      %v244 = vld [vmem:[%s1 + $0xc] sm:$0xf]
      %v245 = vld [vmem:[%s1 + $0x10] sm:$0xf]
      %v246 = vld [vmem:[%s1 + $0x14] sm:$0xf]
      %v247 = vld [vmem:[%s1 + $0x18] sm:$0xf]
      %v248 = vld [vmem:[%s1 + $0x1c] sm:$0xf]
      %v249 = vld [vmem:[%s1 + $0x20] sm:$0xf]
      %v250 = vld [vmem:[%s1 + $0x24] sm:$0xf]
      %v251 = vld [vmem:[%s1 + $0x28] sm:$0xf]
      %v252 = vld [vmem:[%s1 + $0x2c] sm:$0xf]
      %v253 = vld [vmem:[%s1 + $0x30] sm:$0xf]
      %v254 = vld [vmem:[%s1 + $0x34] sm:$0xf]
      %v255 = vld [vmem:[%s1 + $0x38] sm:$0xf]
      %v256 = vld [vmem:[%s1 + $0x3c] sm:$0xf]
      %v257 = vld [vmem:[%s1 + $0x40] sm:$0xf]
      %v258 = vld [vmem:[%s1 + $0x44] sm:$0xf]
      %v259 = vld [vmem:[%s1 + $0x48] sm:$0xf]
      %v260 = vld [vmem:[%s1 + $0x4c] sm:$0xf]
      %v261 = vld [vmem:[%s1 + $0x50] sm:$0xf]
      %v262 = vld [vmem:[%s1 + $0x54] sm:$0xf]
      %v263 = vld [vmem:[%s1 + $0x58] sm:$0xf]
      %v264 = vld [vmem:[%s1 + $0x5c] sm:$0xf]
      %v265 = vld [vmem:[%s1 + $0x60] sm:$0xf]
      %v266 = vld [vmem:[%s1 + $0x64] sm:$0xf]
      %v267 = vld [vmem:[%s1 + $0x68] sm:$0xf]
      %v268 = vld [vmem:[%s1 + $0x6c] sm:$0xf]
      %v269 = vld [vmem:[%s1 + $0x70] sm:$0xf]
      %v270 = vld [vmem:[%s1 + $0x74] sm:$0xf]
      %v271 = vld [vmem:[%s1 + $0x78] sm:$0xf]
      %v272 = vld [vmem:[%s1 + $0x7c] sm:$0xf]
      %v273 = vld [vmem:[%s1 + $0x80] sm:$0xf]
      %v274 = vld [vmem:[%s1 + $0x84] sm:$0xf]
      %v275 = vld [vmem:[%s1 + $0x88] sm:$0xf]
      %v276 = vld [vmem:[%s1 + $0x8c] sm:$0xf]
      %v277 = vld [vmem:[%s1 + $0x90] sm:$0xf]
      %v278 = vld [vmem:[%s1 + $0x94] sm:$0xf]
      %v279 = vld [vmem:[%s1 + $0x98] sm:$0xf]
      %v280 = vld [vmem:[%s1 + $0x9c] sm:$0xf]
      %v281 = vld [vmem:[%s1 + $0xa0] sm:$0xf]
      %v282 = vld [vmem:[%s1 + $0xa4] sm:$0xf]
      %v283 = vld [vmem:[%s1 + $0xa8] sm:$0xf]
      %v284 = vld [vmem:[%s1 + $0xac] sm:$0xf]
      %v285 = vld [vmem:[%s1 + $0xb0] sm:$0xf]
      %v286 = vld [vmem:[%s1 + $0xb4] sm:$0xf]
      %v287 = vld [vmem:[%s1 + $0xb8] sm:$0xf]
      %v288 = vld [vmem:[%s1 + $0xbc] sm:$0xf]
      %v289 = vld [vmem:[%s2] sm:$0x1]
      %v291 = vperm.slane %v289, 0
      %v357 = vunpack.c.l.b16 %v177
      %v358 = vunpack.c.h.b16 %v177
      %v359 = vunpack.c.l.b16 %v178
      %v360 = vunpack.c.l.b16 %v179
      %v361 = vunpack.c.h.b16 %v179
      %v362 = vunpack.c.l.b16 %v180
      %v363 = vunpack.c.l.b16 %v181
      %v364 = vunpack.c.h.b16 %v181
      %v365 = vunpack.c.l.b16 %v182
      %v366 = vunpack.c.l.b16 %v183
      %v367 = vunpack.c.h.b16 %v183
      %v368 = vunpack.c.l.b16 %v184
      %v369 = vunpack.c.l.b16 %v185
      %v370 = vunpack.c.h.b16 %v185
      %v371 = vunpack.c.l.b16 %v186
      %v372 = vunpack.c.l.b16 %v187
      %v373 = vunpack.c.h.b16 %v187
      %v374 = vunpack.c.l.b16 %v188
      %v375 = vunpack.c.l.b16 %v189
      %v376 = vunpack.c.h.b16 %v189
      %v377 = vunpack.c.l.b16 %v190
      %v378 = vunpack.c.l.b16 %v191
      %v379 = vunpack.c.h.b16 %v191
      %v380 = vunpack.c.l.b16 %v192
      %v381 = vunpack.c.l.b16 %v193
      %v382 = vunpack.c.h.b16 %v193
      %v383 = vunpack.c.l.b16 %v194
      %v384 = vunpack.c.l.b16 %v195
      %v385 = vunpack.c.h.b16 %v195
      %v386 = vunpack.c.l.b16 %v196
      %v387 = vunpack.c.l.b16 %v197
      %v388 = vunpack.c.h.b16 %v197
      %v389 = vunpack.c.l.b16 %v198
      %v390 = vunpack.c.l.b16 %v199
      %v391 = vunpack.c.h.b16 %v199
      %v392 = vunpack.c.l.b16 %v200
      %v393 = vunpack.c.l.b16 %v201
      %v394 = vunpack.c.h.b16 %v201
      %v395 = vunpack.c.l.b16 %v202
      %v396 = vunpack.c.l.b16 %v203
      %v397 = vunpack.c.h.b16 %v203
      %v398 = vunpack.c.l.b16 %v204
      %v399 = vunpack.c.l.b16 %v205
      %v400 = vunpack.c.h.b16 %v205
      %v401 = vunpack.c.l.b16 %v206
      %v402 = vunpack.c.l.b16 %v207
      %v403 = vunpack.c.h.b16 %v207
      %v404 = vunpack.c.l.b16 %v208
      %v405 = vunpack.c.l.b16 %v209
      %v406 = vunpack.c.h.b16 %v209
      %v407 = vunpack.c.l.b16 %v210
      %v408 = vunpack.c.l.b16 %v211
      %v409 = vunpack.c.h.b16 %v211
      %v410 = vunpack.c.l.b16 %v212
      %v411 = vunpack.c.l.b16 %v213
      %v412 = vunpack.c.h.b16 %v213
      %v413 = vunpack.c.l.b16 %v214
      %v414 = vunpack.c.l.b16 %v215
      %v415 = vunpack.c.h.b16 %v215
      %v416 = vunpack.c.l.b16 %v216
      %v417 = vunpack.c.l.b16 %v217
      %v418 = vunpack.c.h.b16 %v217
      %v419 = vunpack.c.l.b16 %v218
      %v420 = vunpack.c.l.b16 %v219
      %v421 = vunpack.c.h.b16 %v219
      %v422 = vunpack.c.l.b16 %v220
      %v423 = vunpack.c.l.b16 %v221
      %v424 = vunpack.c.h.b16 %v221
      %v425 = vunpack.c.l.b16 %v222
      %v426 = vunpack.c.l.b16 %v223
      %v427 = vunpack.c.h.b16 %v223
      %v428 = vunpack.c.l.b16 %v224
      %v429 = vunpack.c.l.b16 %v225
      %v430 = vunpack.c.h.b16 %v225
      %v431 = vunpack.c.l.b16 %v226
      %v432 = vunpack.c.l.b16 %v227
      %v433 = vunpack.c.h.b16 %v227
      %v434 = vunpack.c.l.b16 %v228
      %v435 = vunpack.c.l.b16 %v229
      %v436 = vunpack.c.h.b16 %v229
      %v437 = vunpack.c.l.b16 %v230
      %v438 = vunpack.c.l.b16 %v231
      %v439 = vunpack.c.h.b16 %v231
      %v440 = vunpack.c.l.b16 %v232
      %v441 = vunpack.c.l.b16 %v233
      %v442 = vunpack.c.h.b16 %v233
      %v443 = vunpack.c.l.b16 %v234
      %v444 = vunpack.c.l.b16 %v235
      %v445 = vunpack.c.h.b16 %v235
      %v446 = vunpack.c.l.b16 %v236
      %v447 = vunpack.c.l.b16 %v237
      %v448 = vunpack.c.h.b16 %v237
      %v449 = vunpack.c.l.b16 %v238
      %v450 = vunpack.c.l.b16 %v239
      %v451 = vunpack.c.h.b16 %v239
      %v452 = vunpack.c.l.b16 %v240
      %v453 = vpack.c.b16 %v360, %v357
      %v454 = vpack.c.b16 %v361, %v358
      %v455 = vpack.c.b16 %v362, %v359
      %v456 = vpack.c.b16 %v366, %v363
      %v457 = vpack.c.b16 %v367, %v364
      %v458 = vpack.c.b16 %v368, %v365
      %v459 = vpack.c.b16 %v372, %v369
      %v460 = vpack.c.b16 %v373, %v370
      %v461 = vpack.c.b16 %v374, %v371
      %v462 = vpack.c.b16 %v378, %v375
      %v463 = vpack.c.b16 %v379, %v376
      %v464 = vpack.c.b16 %v380, %v377
      %v465 = vpack.c.b16 %v384, %v381
      %v466 = vpack.c.b16 %v385, %v382
      %v467 = vpack.c.b16 %v386, %v383
      %v468 = vpack.c.b16 %v390, %v387
      %v469 = vpack.c.b16 %v391, %v388
      %v470 = vpack.c.b16 %v392, %v389
      %v471 = vpack.c.b16 %v396, %v393
      %v472 = vpack.c.b16 %v397, %v394
      %v473 = vpack.c.b16 %v398, %v395
      %v474 = vpack.c.b16 %v402, %v399
      %v475 = vpack.c.b16 %v403, %v400
      %v476 = vpack.c.b16 %v404, %v401
      %v477 = vpack.c.b16 %v408, %v405
      %v478 = vpack.c.b16 %v409, %v406
      %v479 = vpack.c.b16 %v410, %v407
      %v480 = vpack.c.b16 %v414, %v411
      %v481 = vpack.c.b16 %v415, %v412
      %v482 = vpack.c.b16 %v416, %v413
      %v483 = vpack.c.b16 %v420, %v417
      %v484 = vpack.c.b16 %v421, %v418
      %v485 = vpack.c.b16 %v422, %v419
      %v486 = vpack.c.b16 %v426, %v423
      %v487 = vpack.c.b16 %v427, %v424
      %v488 = vpack.c.b16 %v428, %v425
      %v489 = vpack.c.b16 %v432, %v429
      %v490 = vpack.c.b16 %v433, %v430
      %v491 = vpack.c.b16 %v434, %v431
      %v492 = vpack.c.b16 %v438, %v435
      %v493 = vpack.c.b16 %v439, %v436
      %v494 = vpack.c.b16 %v440, %v437
      %v495 = vpack.c.b16 %v444, %v441
      %v496 = vpack.c.b16 %v445, %v442
      %v497 = vpack.c.b16 %v446, %v443
      %v498 = vpack.c.b16 %v450, %v447
      %v499 = vpack.c.b16 %v451, %v448
      %v500 = vpack.c.b16 %v452, %v449
      %v597 = vunpack.c.l.b16 %v241
      %v598 = vunpack.c.l.b16 %v242
      %v599 = vunpack.c.l.b16 %v243
      %v600 = vunpack.c.l.b16 %v244
      %v601 = vunpack.c.l.b16 %v245
      %v602 = vunpack.c.l.b16 %v246
      %v603 = vunpack.c.l.b16 %v247
      %v604 = vunpack.c.l.b16 %v248
      %v605 = vunpack.c.l.b16 %v249
      %v606 = vunpack.c.l.b16 %v250
      %v607 = vunpack.c.l.b16 %v251
      %v608 = vunpack.c.l.b16 %v252
      %v609 = vunpack.c.l.b16 %v253
      %v610 = vunpack.c.l.b16 %v254
      %v611 = vunpack.c.l.b16 %v255
      %v612 = vunpack.c.l.b16 %v256
      %v613 = vunpack.c.l.b16 %v257
      %v614 = vunpack.c.l.b16 %v258
      %v615 = vunpack.c.l.b16 %v259
      %v616 = vunpack.c.l.b16 %v260
      %v617 = vunpack.c.l.b16 %v261
      %v618 = vunpack.c.l.b16 %v262
      %v619 = vunpack.c.l.b16 %v263
      %v620 = vunpack.c.l.b16 %v264
      %v621 = vunpack.c.l.b16 %v265
      %v622 = vunpack.c.l.b16 %v266
      %v623 = vunpack.c.l.b16 %v267
      %v624 = vunpack.c.l.b16 %v268
      %v625 = vunpack.c.l.b16 %v269
      %v626 = vunpack.c.l.b16 %v270
      %v627 = vunpack.c.l.b16 %v271
      %v628 = vunpack.c.l.b16 %v272
      %v629 = vunpack.c.l.b16 %v273
      %v630 = vunpack.c.l.b16 %v274
      %v631 = vunpack.c.l.b16 %v275
      %v632 = vunpack.c.l.b16 %v276
      %v633 = vunpack.c.l.b16 %v277
      %v634 = vunpack.c.l.b16 %v278
      %v635 = vunpack.c.l.b16 %v279
      %v636 = vunpack.c.l.b16 %v280
      %v637 = vunpack.c.l.b16 %v281
      %v638 = vunpack.c.l.b16 %v282
      %v639 = vunpack.c.l.b16 %v283
      %v640 = vunpack.c.l.b16 %v284
      %v641 = vunpack.c.l.b16 %v285
      %v642 = vunpack.c.l.b16 %v286
      %v643 = vunpack.c.l.b16 %v287
      %v644 = vunpack.c.l.b16 %v288
      %v645 = vpack.c.b16 %v598, %v597
      %v646 = vpack.c.b16 %v600, %v599
      %v647 = vpack.c.b16 %v602, %v601
      %v648 = vpack.c.b16 %v604, %v603
      %v649 = vpack.c.b16 %v606, %v605
      %v650 = vpack.c.b16 %v608, %v607
      %v651 = vpack.c.b16 %v610, %v609
      %v652 = vpack.c.b16 %v612, %v611
      %v653 = vpack.c.b16 %v614, %v613
      %v654 = vpack.c.b16 %v616, %v615
      %v655 = vpack.c.b16 %v618, %v617
      %v656 = vpack.c.b16 %v620, %v619
      %v657 = vpack.c.b16 %v622, %v621
      %v658 = vpack.c.b16 %v624, %v623
      %v659 = vpack.c.b16 %v626, %v625
      %v660 = vpack.c.b16 %v628, %v627
      %v661 = vpack.c.b16 %v630, %v629
      %v662 = vpack.c.b16 %v632, %v631
      %v663 = vpack.c.b16 %v634, %v633
      %v664 = vpack.c.b16 %v636, %v635
      %v665 = vpack.c.b16 %v638, %v637
      %v666 = vpack.c.b16 %v640, %v639
      %v667 = vpack.c.b16 %v642, %v641
      %v668 = vpack.c.b16 %v644, %v643
      %693 = vmatpush.bf16.msra.mxu0 %v652
      %694 = vmatpush.bf16.msra.mxu0 %v651
      %695 = vmatpush.bf16.msra.mxu0 %v650
      %696 = vmatpush.bf16.msra.mxu0 %v649
      %697 = vmatpush.bf16.msra.mxu0 %v648
      %698 = vmatpush.bf16.msra.mxu0 %v647
      %699 = vmatpush.bf16.msra.mxu0 %v646
      %700 = vmatpush.bf16.msra.mxu0 %v645
      %701 = vmatmul.bf16.gmra.mxu0 %v453
      %v702 = vpop.f32.mrf.mxu0
      %v703 = vadd.f32 %v291, %v702
      %v704 = vpop.f32.mrf.mxu0
      %v705 = vadd.f32 %v291, %v704
      %706 = vmatmul.bf16.gmra.mxu0 %v456
      %v707 = vpop.f32.mrf.mxu0
      %v708 = vadd.f32 %v291, %v707
      %v709 = vpop.f32.mrf.mxu0
      %v710 = vadd.f32 %v291, %v709
      %711 = vmatmul.bf16.gmra.mxu0 %v459
      %v712 = vpop.f32.mrf.mxu0
      %v713 = vadd.f32 %v291, %v712
      %v714 = vpop.f32.mrf.mxu0
      %v715 = vadd.f32 %v291, %v714
      %716 = vmatmul.bf16.gmra.mxu0 %v462
      %v717 = vpop.f32.mrf.mxu0
      %v718 = vadd.f32 %v291, %v717
      %v719 = vpop.f32.mrf.mxu0
      %v720 = vadd.f32 %v291, %v719
      %721 = vmatmul.bf16.gmra.mxu0 %v465
      %v722 = vpop.f32.mrf.mxu0
      %v723 = vadd.f32 %v291, %v722
      %v724 = vpop.f32.mrf.mxu0
      %v725 = vadd.f32 %v291, %v724
      %726 = vmatmul.bf16.gmra.mxu0 %v468
      %v727 = vpop.f32.mrf.mxu0
      %v728 = vadd.f32 %v291, %v727
      %v729 = vpop.f32.mrf.mxu0
      %v730 = vadd.f32 %v291, %v729
      %731 = vmatmul.bf16.gmra.mxu0 %v471
      %v732 = vpop.f32.mrf.mxu0
      %v733 = vadd.f32 %v291, %v732
      %v734 = vpop.f32.mrf.mxu0
      %v735 = vadd.f32 %v291, %v734
      %736 = vmatmul.bf16.gmra.mxu0 %v474
      %v737 = vpop.f32.mrf.mxu0
      %v738 = vadd.f32 %v291, %v737
      %v739 = vpop.f32.mrf.mxu0
      %v740 = vadd.f32 %v291, %v739
      %741 = vmatmul.bf16.gmra.mxu0 %v477
      %v742 = vpop.f32.mrf.mxu0
      %v743 = vadd.f32 %v291, %v742
      %v744 = vpop.f32.mrf.mxu0
      %v745 = vadd.f32 %v291, %v744
      %746 = vmatmul.bf16.gmra.mxu0 %v480
      %v747 = vpop.f32.mrf.mxu0
      %v748 = vadd.f32 %v291, %v747
      %v749 = vpop.f32.mrf.mxu0
      %v750 = vadd.f32 %v291, %v749
      %751 = vmatmul.bf16.gmra.mxu0 %v483
      %v752 = vpop.f32.mrf.mxu0
      %v753 = vadd.f32 %v291, %v752
      %v754 = vpop.f32.mrf.mxu0
      %v755 = vadd.f32 %v291, %v754
      %756 = vmatmul.bf16.gmra.mxu0 %v486
      %v757 = vpop.f32.mrf.mxu0
      %v758 = vadd.f32 %v291, %v757
      %v759 = vpop.f32.mrf.mxu0
      %v760 = vadd.f32 %v291, %v759
      %761 = vmatmul.bf16.gmra.mxu0 %v489
      %v762 = vpop.f32.mrf.mxu0
      %v763 = vadd.f32 %v291, %v762
      %v764 = vpop.f32.mrf.mxu0
      %v765 = vadd.f32 %v291, %v764
      %766 = vmatmul.bf16.gmra.mxu0 %v492
      %v767 = vpop.f32.mrf.mxu0
      %v768 = vadd.f32 %v291, %v767
      %v769 = vpop.f32.mrf.mxu0
      %v770 = vadd.f32 %v291, %v769
      %771 = vmatmul.bf16.gmra.mxu0 %v495
      %v772 = vpop.f32.mrf.mxu0
      %v773 = vadd.f32 %v291, %v772
      %v774 = vpop.f32.mrf.mxu0
      %v775 = vadd.f32 %v291, %v774
      %776 = vmatmul.bf16.gmra.mxu0 %v498
      %v777 = vpop.f32.mrf.mxu0
      %v778 = vadd.f32 %v291, %v777
      %v779 = vpop.f32.mrf.mxu0
      %v780 = vadd.f32 %v291, %v779
      %781 = vdwg.mxu0
      %782 = vmatpush.bf16.msra.mxu0 %v660
      %783 = vmatpush.bf16.msra.mxu0 %v659
      %784 = vmatpush.bf16.msra.mxu0 %v658
      %785 = vmatpush.bf16.msra.mxu0 %v657
      %786 = vmatpush.bf16.msra.mxu0 %v656
      %787 = vmatpush.bf16.msra.mxu0 %v655
      %788 = vmatpush.bf16.msra.mxu0 %v654
      %789 = vmatpush.bf16.msra.mxu0 %v653
      %790 = vmatmul.bf16.gmra.mxu0 %v454
      %v791 = vpop.f32.mrf.mxu0
      %v792 = vadd.f32 %v703, %v791
      %v793 = vpop.f32.mrf.mxu0
      %v794 = vadd.f32 %v705, %v793
      %795 = vmatmul.bf16.gmra.mxu0 %v457
      %v796 = vpop.f32.mrf.mxu0
      %v797 = vadd.f32 %v708, %v796
      %v798 = vpop.f32.mrf.mxu0
      %v799 = vadd.f32 %v710, %v798
      %800 = vmatmul.bf16.gmra.mxu0 %v460
      %v801 = vpop.f32.mrf.mxu0
      %v802 = vadd.f32 %v713, %v801
      %v803 = vpop.f32.mrf.mxu0
      %v804 = vadd.f32 %v715, %v803
      %805 = vmatmul.bf16.gmra.mxu0 %v463
      %v806 = vpop.f32.mrf.mxu0
      %v807 = vadd.f32 %v718, %v806
      %v808 = vpop.f32.mrf.mxu0
      %v809 = vadd.f32 %v720, %v808
      %810 = vmatmul.bf16.gmra.mxu0 %v466
      %v811 = vpop.f32.mrf.mxu0
      %v812 = vadd.f32 %v723, %v811
      %v813 = vpop.f32.mrf.mxu0
      %v814 = vadd.f32 %v725, %v813
      %815 = vmatmul.bf16.gmra.mxu0 %v469
      %v816 = vpop.f32.mrf.mxu0
      %v817 = vadd.f32 %v728, %v816
      %v818 = vpop.f32.mrf.mxu0
      %v819 = vadd.f32 %v730, %v818
      %820 = vmatmul.bf16.gmra.mxu0 %v472
      %v821 = vpop.f32.mrf.mxu0
      %v822 = vadd.f32 %v733, %v821
      %v823 = vpop.f32.mrf.mxu0
      %v824 = vadd.f32 %v735, %v823
      %825 = vmatmul.bf16.gmra.mxu0 %v475
      %v826 = vpop.f32.mrf.mxu0
      %v827 = vadd.f32 %v738, %v826
      %v828 = vpop.f32.mrf.mxu0
      %v829 = vadd.f32 %v740, %v828
      %830 = vmatmul.bf16.gmra.mxu0 %v478
      %v831 = vpop.f32.mrf.mxu0
      %v832 = vadd.f32 %v743, %v831
      %v833 = vpop.f32.mrf.mxu0
      %v834 = vadd.f32 %v745, %v833
      %835 = vmatmul.bf16.gmra.mxu0 %v481
      %v836 = vpop.f32.mrf.mxu0
      %v837 = vadd.f32 %v748, %v836
      %v838 = vpop.f32.mrf.mxu0
      %v839 = vadd.f32 %v750, %v838
      %840 = vmatmul.bf16.gmra.mxu0 %v484
      %v841 = vpop.f32.mrf.mxu0
      %v842 = vadd.f32 %v753, %v841
      %v843 = vpop.f32.mrf.mxu0
      %v844 = vadd.f32 %v755, %v843
      %845 = vmatmul.bf16.gmra.mxu0 %v487
      %v846 = vpop.f32.mrf.mxu0
      %v847 = vadd.f32 %v758, %v846
      %v848 = vpop.f32.mrf.mxu0
      %v849 = vadd.f32 %v760, %v848
      %850 = vmatmul.bf16.gmra.mxu0 %v490
      %v851 = vpop.f32.mrf.mxu0
      %v852 = vadd.f32 %v763, %v851
      %v853 = vpop.f32.mrf.mxu0
      %v854 = vadd.f32 %v765, %v853
      %855 = vmatmul.bf16.gmra.mxu0 %v493
      %v856 = vpop.f32.mrf.mxu0
      %v857 = vadd.f32 %v768, %v856
      %v858 = vpop.f32.mrf.mxu0
      %v859 = vadd.f32 %v770, %v858
      %860 = vmatmul.bf16.gmra.mxu0 %v496
      %v861 = vpop.f32.mrf.mxu0
      %v862 = vadd.f32 %v773, %v861
      %v863 = vpop.f32.mrf.mxu0
      %v864 = vadd.f32 %v775, %v863
      %865 = vmatmul.bf16.gmra.mxu0 %v499
      %v866 = vpop.f32.mrf.mxu0
      %v867 = vadd.f32 %v778, %v866
      %v868 = vpop.f32.mrf.mxu0
      %v869 = vadd.f32 %v780, %v868
      %870 = vdwg.mxu0
      %871 = vmatpush.bf16.msra.mxu0 %v668
      %872 = vmatpush.bf16.msra.mxu0 %v667
      %873 = vmatpush.bf16.msra.mxu0 %v666
      %874 = vmatpush.bf16.msra.mxu0 %v665
      %875 = vmatpush.bf16.msra.mxu0 %v664
      %876 = vmatpush.bf16.msra.mxu0 %v663
      %877 = vmatpush.bf16.msra.mxu0 %v662
      %878 = vmatpush.bf16.msra.mxu0 %v661
      %879 = vmatmul.bf16.gmra.mxu0 %v455
      %v880 = vpop.f32.mrf.mxu0
      %v881 = vadd.f32 %v792, %v880
      %v882 = vpop.f32.mrf.mxu0
      %v883 = vadd.f32 %v794, %v882
      %884 = vmatmul.bf16.gmra.mxu0 %v458
      %v885 = vpop.f32.mrf.mxu0
      %v886 = vadd.f32 %v797, %v885
      %v887 = vpop.f32.mrf.mxu0
      %v888 = vadd.f32 %v799, %v887
      %889 = vmatmul.bf16.gmra.mxu0 %v461
      %v890 = vpop.f32.mrf.mxu0
      %v891 = vadd.f32 %v802, %v890
      %v892 = vpop.f32.mrf.mxu0
      %v893 = vadd.f32 %v804, %v892
      %894 = vmatmul.bf16.gmra.mxu0 %v464
      %v895 = vpop.f32.mrf.mxu0
      %v896 = vadd.f32 %v807, %v895
      %v897 = vpop.f32.mrf.mxu0
      %v898 = vadd.f32 %v809, %v897
      %899 = vmatmul.bf16.gmra.mxu0 %v467
      %v900 = vpop.f32.mrf.mxu0
      %v901 = vadd.f32 %v812, %v900
      %v902 = vpop.f32.mrf.mxu0
      %v903 = vadd.f32 %v814, %v902
      %904 = vmatmul.bf16.gmra.mxu0 %v470
      %v905 = vpop.f32.mrf.mxu0
      %v906 = vadd.f32 %v817, %v905
      %v907 = vpop.f32.mrf.mxu0
      %v908 = vadd.f32 %v819, %v907
      %909 = vmatmul.bf16.gmra.mxu0 %v473
      %v910 = vpop.f32.mrf.mxu0
      %v911 = vadd.f32 %v822, %v910
      %v912 = vpop.f32.mrf.mxu0
      %v913 = vadd.f32 %v824, %v912
      %914 = vmatmul.bf16.gmra.mxu0 %v476
      %v915 = vpop.f32.mrf.mxu0
      %v916 = vadd.f32 %v827, %v915
      %v917 = vpop.f32.mrf.mxu0
      %v918 = vadd.f32 %v829, %v917
      %919 = vmatmul.bf16.gmra.mxu0 %v479
      %v920 = vpop.f32.mrf.mxu0
      %v921 = vadd.f32 %v832, %v920
      %v922 = vpop.f32.mrf.mxu0
      %v923 = vadd.f32 %v834, %v922
      %924 = vmatmul.bf16.gmra.mxu0 %v482
      %v925 = vpop.f32.mrf.mxu0
      %v926 = vadd.f32 %v837, %v925
      %v927 = vpop.f32.mrf.mxu0
      %v928 = vadd.f32 %v839, %v927
      %929 = vmatmul.bf16.gmra.mxu0 %v485
      %v930 = vpop.f32.mrf.mxu0
      %v931 = vadd.f32 %v842, %v930
      %v932 = vpop.f32.mrf.mxu0
      %v933 = vadd.f32 %v844, %v932
      %934 = vmatmul.bf16.gmra.mxu0 %v488
      %v935 = vpop.f32.mrf.mxu0
      %v936 = vadd.f32 %v847, %v935
      %v937 = vpop.f32.mrf.mxu0
      %v938 = vadd.f32 %v849, %v937
      %939 = vmatmul.bf16.gmra.mxu0 %v491
      %v940 = vpop.f32.mrf.mxu0
      %v941 = vadd.f32 %v852, %v940
      %v942 = vpop.f32.mrf.mxu0
      %v943 = vadd.f32 %v854, %v942
      %944 = vmatmul.bf16.gmra.mxu0 %v494
      %v945 = vpop.f32.mrf.mxu0
      %v946 = vadd.f32 %v857, %v945
      %v947 = vpop.f32.mrf.mxu0
      %v948 = vadd.f32 %v859, %v947
      %949 = vmatmul.bf16.gmra.mxu0 %v497
      %v950 = vpop.f32.mrf.mxu0
      %v951 = vadd.f32 %v862, %v950
      %v952 = vpop.f32.mrf.mxu0
      %v953 = vadd.f32 %v864, %v952
      %954 = vmatmul.bf16.gmra.mxu0 %v500
      %v955 = vpop.f32.mrf.mxu0
      %v956 = vadd.f32 %v867, %v955
      %v957 = vpop.f32.mrf.mxu0
      %v958 = vadd.f32 %v869, %v957
      %959 = vdwg.mxu0
      %960 = vst [vmem:[%s175] sm:$0xff] %v881
      %961 = vst [vmem:[%s175 + $0x8] sm:$0xff] %v883
      %962 = vst [vmem:[%s175 + $0x10] sm:$0xff] %v886
      %963 = vst [vmem:[%s175 + $0x18] sm:$0xff] %v888
      %964 = vst [vmem:[%s175 + $0x20] sm:$0xff] %v891
      %965 = vst [vmem:[%s175 + $0x28] sm:$0xff] %v893
      %966 = vst [vmem:[%s175 + $0x30] sm:$0xff] %v896
      %967 = vst [vmem:[%s175 + $0x38] sm:$0xff] %v898
      %968 = vst [vmem:[%s175 + $0x40] sm:$0xff] %v901
      %969 = vst [vmem:[%s175 + $0x48] sm:$0xff] %v903
      %970 = vst [vmem:[%s175 + $0x50] sm:$0xff] %v906
      %971 = vst [vmem:[%s175 + $0x58] sm:$0xff] %v908
      %972 = vst [vmem:[%s175 + $0x60] sm:$0xff] %v911
      %973 = vst [vmem:[%s175 + $0x68] sm:$0xff] %v913
      %974 = vst [vmem:[%s175 + $0x70] sm:$0xff] %v916
      %975 = vst [vmem:[%s175 + $0x78] sm:$0xff] %v918
      %976 = vst [vmem:[%s175 + $0x80] sm:$0xff] %v921
      %977 = vst [vmem:[%s175 + $0x88] sm:$0xff] %v923
      %978 = vst [vmem:[%s175 + $0x90] sm:$0xff] %v926
      %979 = vst [vmem:[%s175 + $0x98] sm:$0xff] %v928
      %980 = vst [vmem:[%s175 + $0xa0] sm:$0xff] %v931
      %981 = vst [vmem:[%s175 + $0xa8] sm:$0xff] %v933
      %982 = vst [vmem:[%s175 + $0xb0] sm:$0xff] %v936
      %983 = vst [vmem:[%s175 + $0xb8] sm:$0xff] %v938
      %984 = vst [vmem:[%s175 + $0xc0] sm:$0xff] %v941
      %985 = vst [vmem:[%s175 + $0xc8] sm:$0xff] %v943
      %986 = vst [vmem:[%s175 + $0xd0] sm:$0xff] %v946
      %987 = vst [vmem:[%s175 + $0xd8] sm:$0xff] %v948
      %988 = vst [vmem:[%s175 + $0xe0] sm:$0xff] %v951
      %989 = vst [vmem:[%s175 + $0xe8] sm:$0xff] %v953
      %990 = vst [vmem:[%s175 + $0xf0] sm:$0xff] %v956
      %991 = vst [vmem:[%s175 + $0xf8] sm:$0xff] %v958
      %s992 = smul.u32 32, %s14
      %p993 = scmp.lt.s32.totalorder %s992, 63
      %s994 = scalar_select %p993, %s992, 63
      %s995 = smul.addr %s994, 8
      %s996 = scalar_lea.vmem %s3, %s995
      // Predicated region
      $region33: #{vqvae_hierarchical_forward.19} parent=31 // pred_check
        %p997 = pneg %p100
      $region34: #{vqvae_hierarchical_forward.19} parent=31 // pred_check_branch
        %999 = sbr.rel (%p997) target = $region36
      $region35: #{vqvae_hierarchical_forward.19} parent=31 // pred_region
        %s1000 = smul.u32 32, %s14
      $region36: #{vqvae_hierarchical_forward.19} parent=31 // pred_fallthru
        _
    $region32: #{vqvae_hierarchical_forward.19} parent=5 // pred_fallthru
      _
    %p1001 = scmp.le.s32.totalorder 2, %s9
    // Predicated region
    $region37: #{vqvae_hierarchical_forward.19} parent=5 // pred_check
      %p1002 = pneg %p1001
    $region38: #{vqvae_hierarchical_forward.19} parent=5 // pred_check_branch
      %1004 = sbr.rel (%p1002) target = $region40
    $region39: #{vqvae_hierarchical_forward.19} parent=5 // pred_region
      %s1005 = ssub.s32 %s9, 2
      // Predicated region
      $region41: #{vqvae_hierarchical_forward.19} parent=39 // pred_check
        %p1006 = pneg %p106
      $region42: #{vqvae_hierarchical_forward.19} parent=39 // pred_check_branch
        %1008 = sbr.rel (%p1006) target = $region44
      $region43: #{vqvae_hierarchical_forward.19} parent=39 // pred_region
        %s1009 = smul.u32 32, %s15
        %p1010 = scmp.lt.s32.totalorder %s1009, 63
        %s1011 = scalar_select %p1010, %s1009, 63
        %s1012 = smul.addr %s1011, 8
        %s1013 = scalar_lea.vmem %s3, %s1012
      $region44: #{vqvae_hierarchical_forward.19} parent=39 // pred_fallthru
        _
    $region40: #{vqvae_hierarchical_forward.19} parent=5 // pred_fallthru
      _
  $region6: #{vqvae_hierarchical_forward.19} parent=0 // loop_footer
    %s13 = sadd.s32 1, %s9
  $region7: #{vqvae_hierarchical_forward.19} parent=0 // loop_footer_branch
    %8 = sbr.rel target = $region3
  $region8: #{vqvae_hierarchical_forward.19} parent=0 // loop_exit
    _

</llo_original>
